<compile_context>
chip_gen: v5e
topology: v5e:2x2
jax: 0.10.0
libtpu: 0.0.40
codegen_flags: <defaults>
</compile_context>

<pallas_src>
import numpy as np

import jax
import jax.numpy as jnp
from jax.experimental import pallas as pl
from jax.experimental.pallas import tpu as pltpu

_LANE = 128
_SUBLANE = 8


def _round_up(x, m):
    return (x + m - 1) // m * m


# ---------------------------------------------------------------------------
# Kernel
# ---------------------------------------------------------------------------
def _conv3x3_bn_relu_kernel(x_hbm, w_ref, bn_ref, o_ref, xbuf, sem):
    """One grid step = R output rows of one batch element.

    x_hbm : (B, Hp+2, W+2, Cp)  HBM ref (memory_space=pl.ANY), compute dtype
    w_ref : (3, 3*Cp, Op)       VMEM, compute dtype; kx folded into K
    bn_ref: (2, Op)             VMEM f32; row 0 = BN scale, row 1 = BN shift
    o_ref : (1, R, W, Op)       output block (lane-dense: Op % 128 == 0)
    xbuf  : (2, R+2, W+2, Cp)   VMEM scratch (manual double buffer)
    sem   : (2,)                DMA semaphores
    """
    b = pl.program_id(0)
    t = pl.program_id(1)
    num_t = pl.num_programs(1)

    R, W, Op = o_ref.shape[1], o_ref.shape[2], o_ref.shape[3]
    Cp = xbuf.shape[3]

    def row_tile_copy(tile_idx, slot):
        # Overlapping window (2-row halo) straight out of the padded HBM array.
        return pltpu.make_async_copy(
            x_hbm.at[b, pl.ds(tile_idx * R, R + 2)],
            xbuf.at[slot],
            sem.at[slot],
        )

    slot = t % 2

    # Prime the double buffer on the first row tile of each batch element.
    @pl.when(t == 0)
    def _():
        row_tile_copy(0, 0).start()

    # Wait for the current tile, then immediately prefetch the next one so its
    # HBM->VMEM DMA overlaps with this step's matmuls.  The row-tile grid axis
    # is "arbitrary" (sequential per core), so this ordering is guaranteed.
    row_tile_copy(t, slot).wait()

    @pl.when(t + 1 < num_t)
    def _():
        row_tile_copy(t + 1, 1 - slot).start()

    xv = xbuf.at[slot]                      # Ref view of the current tile

    # im2col along kx only (3 sublane-shifted slices concatenated on the lane
    # axis, kept in the compute dtype): xc[r, w, kx*Cp + c] = xv[r, w + kx, c].
    xc = jnp.concatenate([xv[:, kx:kx + W, :] for kx in range(3)], axis=-1)

    # 3 large MXU matmuls per step (one per ky): (R*W, 3*Cp) x (3*Cp, Op),
    # f32 accumulation.  N = Op is never split below the MXU width.
    acc = jnp.zeros((R * W, Op), dtype=jnp.float32)
    for ky in range(3):
        lhs = xc[ky:ky + R].reshape(R * W, 3 * Cp)   # layout-preserving (W % 8 == 0)
        acc = acc + jnp.dot(lhs, w_ref[ky], preferred_element_type=jnp.float32)

    # f32 epilogue (v5e-safe, no bf16 VPU needed): BN affine + ReLU.
    y = jnp.maximum(acc * bn_ref[0:1, :] + bn_ref[1:2, :], 0.0)
    o_ref[...] = y.reshape(1, R, W, Op).astype(o_ref.dtype)


# ---------------------------------------------------------------------------
# Tiling / VMEM budgeting helpers
# ---------------------------------------------------------------------------
def _vmem_budget_bytes():
    """~70% of per-core VMEM (v5e/v6e: 128 MiB, v7x: 64 MiB), clamped."""
    cap = None
    try:
        cap = int(pltpu.get_tpu_info().vmem_capacity_bytes)
    except Exception:
        cap = None
    if not cap or cap <= 0:
        cap = 64 * 1024 * 1024          # conservative fallback = v7x per-core VMEM
    return max(32 * 1024 * 1024, min(int(cap * 0.7), 96 * 1024 * 1024))


def _per_step_vmem_bytes(R, W, Cp, Op, act_bytes, out_bytes):
    """Conservative per-grid-step VMEM footprint estimate."""
    in_tile = 2 * (R + 2) * (W + 2) * Cp * act_bytes    # manual double buffer
    out_tile = 2 * R * W * Op * out_bytes               # pipelined output
    weights = 3 * (3 * Cp) * Op * act_bytes             # single-buffered
    bn = 2 * Op * 4
    im2col = 3 * (R + 2) * W * Cp * act_bytes           # xc temporary
    lhs = R * W * 3 * Cp * act_bytes                    # relaid-out matmul lhs
    acc = R * W * Op * 4
    return int(1.25 * (in_tile + out_tile + weights + bn + im2col + lhs + acc))


def _choose_row_tile(H, W, Cp, Op, act_bytes, out_bytes, budget):
    """Largest multiple-of-8 row tile with R*W >= ~2048 that fits the budget."""
    target = _round_up(max(1, -(-2048 // W)), _SUBLANE)
    R = max(_SUBLANE, min(_round_up(H, _SUBLANE), target))
    while R > _SUBLANE and _per_step_vmem_bytes(R, W, Cp, Op, act_bytes, out_bytes) > budget:
        R -= _SUBLANE
    return R


# ---------------------------------------------------------------------------
# NHWC entry point (preferred: channels-last, no transposes)
# ---------------------------------------------------------------------------
def conv3x3_bn_relu_nhwc(x_nhwc, weight_oihw, gamma, beta, running_mean,
                         running_var, eps=1e-5, *,
                         compute_dtype=jnp.bfloat16, out_dtype=None,
                         row_tile=None):
    """Fused 3x3 conv (stride=1, pad=1, bias=False) + eval-BN + ReLU, NHWC."""
    B, H, W, Cin = x_nhwc.shape
    Cout = weight_oihw.shape[0]
    assert W % _SUBLANE == 0, "W must be a multiple of 8 (layout-preserving reshape)"
    out_dtype = compute_dtype if out_dtype is None else out_dtype

    # Lane-dense channel padding: Cp feeds the matmul K, Op the matmul N and
    # the unmasked (vst, not vst.msk) output stores.
    Cp = _round_up(Cin, _LANE)
    Op = _round_up(Cout, _LANE)

    act_bytes = np.dtype(compute_dtype).itemsize
    out_bytes = np.dtype(out_dtype).itemsize
    budget = _vmem_budget_bytes()
    R = row_tile if row_tile is not None else _choose_row_tile(
        H, W, Cp, Op, act_bytes, out_bytes, budget)
    T = -(-H // R)
    Hp = T * R                                   # H padded up to a multiple of R

    # ---- one-time parameter prep (f32; BN affine stays f32 for the epilogue) --
    scale = (gamma / jnp.sqrt(running_var + eps)).astype(jnp.float32)
    shift = (beta - running_mean * scale).astype(jnp.float32)
    bn = jnp.stack([jnp.pad(scale, (0, Op - Cout)),
                    jnp.pad(shift, (0, Op - Cout))])            # (2, Op) f32

    # (O, I, 3, 3) -> (ky, kx, ci, co), pad channels, fold kx into K.
    w = jnp.transpose(weight_oihw, (2, 3, 1, 0)).astype(jnp.float32)
    w = jnp.pad(w, ((0, 0), (0, 0), (0, Cp - Cin), (0, Op - Cout)))
    w = w.reshape(3, 3 * Cp, Op).astype(compute_dtype)

    # Zero-pad spatial (padding=1, plus bottom rows up to Hp) and channels and
    # cast.  No halo duplication: the kernel DMAs overlapping row windows
    # directly from this single array.
    x = jnp.pad(x_nhwc, ((0, 0), (1, 1 + Hp - H), (1, 1), (0, Cp - Cin)))
    x = x.astype(compute_dtype)

    def call(single_buffer_invariants):
        inv_kwargs = ({"pipeline_mode": pl.Buffered(1)}
                      if single_buffer_invariants else {})
        grid_spec = pltpu.PrefetchScalarGridSpec(
            num_scalar_prefetch=0,
            grid=(B, T),
            in_specs=[
                pl.BlockSpec(memory_space=pl.ANY),              # x stays in HBM
                pl.BlockSpec((3, 3 * Cp, Op), lambda b, t: (0, 0, 0), **inv_kwargs),
                pl.BlockSpec((2, Op), lambda b, t: (0, 0), **inv_kwargs),
            ],
            out_specs=pl.BlockSpec((1, R, W, Op), lambda b, t: (b, t, 0, 0)),
            scratch_shapes=[
                pltpu.VMEM((2, R + 2, W + 2, Cp), compute_dtype),
                pltpu.SemaphoreType.DMA((2,)),
            ],
        )
        return pl.pallas_call(
            _conv3x3_bn_relu_kernel,
            out_shape=jax.ShapeDtypeStruct((B, Hp, W, Op), out_dtype),
            grid_spec=grid_spec,
            compiler_params=pltpu.CompilerParams(
                # batch feeds both TensorCores; the row-tile axis must stay
                # sequential per core for the manual prefetch scheme.
                dimension_semantics=("parallel", "arbitrary"),
                vmem_limit_bytes=budget,
            ),
        )(x, w, bn)

    try:
        out = call(True)
    except Exception:
        # Older jax without BlockSpec.pipeline_mode: accept double-buffered
        # invariants (only costs a little extra VMEM).
        out = call(False)

    return out[:, :H, :, :Cout]


# ---------------------------------------------------------------------------
# PyTorch-parity entry point (Conv3x3.forward): NCHW in, NCHW out
# ---------------------------------------------------------------------------
def conv3x3_module(x_nchw, weight_oihw, gamma, beta, running_mean, running_var,
                   eps=1e-5, *, compute_dtype=jnp.bfloat16, out_dtype=None,
                   row_tile=None):
    """Equivalent of Conv3x3.forward (stride=1, groups=1, eval-mode BN).

    The NCHW<->NHWC transposes and the Cout slice are layout plumbing for
    parity with the PyTorch module; channels-last models should call
    conv3x3_bn_relu_nhwc directly so these extra HBM round trips disappear.
    """
    x_nhwc = jnp.transpose(x_nchw, (0, 2, 3, 1))
    y = conv3x3_bn_relu_nhwc(x_nhwc, weight_oihw, gamma, beta, running_mean,
                             running_var, eps, compute_dtype=compute_dtype,
                             out_dtype=out_dtype, row_tile=row_tile)
    return jnp.transpose(y, (0, 3, 1, 2))


# ---------------------------------------------------------------------------
# Reference + demo
# ---------------------------------------------------------------------------
def _reference(x_nchw, weight_oihw, gamma, beta, running_mean, running_var, eps=1e-5):
    y = jax.lax.conv_general_dilated(
        x_nchw, weight_oihw, window_strides=(1, 1), padding=((1, 1), (1, 1)),
        dimension_numbers=("NCHW", "OIHW", "NCHW"))
    scale = gamma / jnp.sqrt(running_var + eps)
    shift = beta - running_mean * scale
    return jnp.maximum(y * scale[None, :, None, None] + shift[None, :, None, None], 0.0)


if __name__ == "__main__":
    B, Cin, Cout, H, W = 2, 4, 8, 16, 16
    key = jax.random.PRNGKey(0)
    kx_, kw_, kg_, kb_, km_, kv_ = jax.random.split(key, 6)

    x = jax.random.normal(kx_, (B, Cin, H, W), dtype=jnp.float32)
    # Deterministic synthetic parameters (no checkpoint load).
    weight = jax.random.normal(kw_, (Cout, Cin, 3, 3), dtype=jnp.float32) * 0.1
    gamma = 1.0 + 0.1 * jax.random.normal(kg_, (Cout,), dtype=jnp.float32)
    beta = 0.1 * jax.random.normal(kb_, (Cout,), dtype=jnp.float32)
    running_mean = 0.1 * jax.random.normal(km_, (Cout,), dtype=jnp.float32)
    running_var = 1.0 + 0.1 * jax.random.uniform(kv_, (Cout,), dtype=jnp.float32)

    ref = _reference(x, weight, gamma, beta, running_mean, running_var)

    # Strict check: f32 activations/weights/output.
    out_f32 = conv3x3_module(x, weight, gamma, beta, running_mean, running_var,
                             compute_dtype=jnp.float32, out_dtype=jnp.float32)
    out_f32 = jax.block_until_ready(out_f32)
    assert out_f32.shape == (B, Cout, H, W)
    assert jnp.allclose(out_f32, ref, atol=1e-3, rtol=1e-3), "f32 mismatch vs reference"

    # Default fast path: bf16 activations/weights/output, f32 accumulation.
    out_bf16 = conv3x3_module(x, weight, gamma, beta, running_mean, running_var)
    out_bf16 = jax.block_until_ready(out_bf16)
    assert out_bf16.shape == (B, Cout, H, W)
    assert out_bf16.dtype == jnp.bfloat16
    assert jnp.allclose(out_bf16.astype(jnp.float32), ref, atol=5e-2, rtol=5e-2), \
        "bf16 mismatch vs reference"

    print("KERNEL_OK")
</pallas_src>

<mosaic_0001>
module attributes {stable_mosaic.version = 11 : i64} {
  func.func @_conv3x3_bn_relu_kernel(%arg0: i32, %arg1: i32, %arg2: memref<2x18x18x128xf32, #tpu.memory_space<any>>, %arg3: memref<3x384x128xf32, #tpu.memory_space<vmem>>, %arg4: memref<2x128xf32, #tpu.memory_space<vmem>>, %arg5: memref<1x16x16x128xf32, #tpu.memory_space<vmem>>, %arg6: memref<2x18x18x128xf32, #tpu.memory_space<vmem>>, %arg7: memref<2x!tpu.dma_semaphore, #tpu.memory_space<semaphore_mem>>) attributes {dimension_semantics = [#tpu.dimension_semantics<parallel>, #tpu.dimension_semantics<arbitrary>], iteration_bounds = array<i64: 2, 1>, scalar_prefetch = 0 : i64, scratch_operands = 2 : i64, tpu.core_type = #tpu.core_type<tc>, window_params = [{}, {pipeline_mode = #tpu.pipeline_mode<synchronous>, transform_indices = @transform_1, window_bounds = array<i64: 3, 384, 128>}, {pipeline_mode = #tpu.pipeline_mode<synchronous>, transform_indices = @transform_2, window_bounds = array<i64: 2, 128>}, {transform_indices = @transform_3, window_bounds = array<i64: 1, 16, 16, 128>}]} {
    %c2_i32 = arith.constant 2 : i32
    %c0_i32 = arith.constant 0 : i32
    %0 = arith.cmpi eq, %c2_i32, %c0_i32 : i32
    %c1_i32 = arith.constant 1 : i32
    %1 = arith.select %0, %c1_i32, %c2_i32 : i32
    %2 = arith.remsi %arg1, %1 : i32
    %c0_i32_0 = arith.constant 0 : i32
    %3 = arith.cmpi ne, %2, %c0_i32_0 : i32
    %c0_i32_1 = arith.constant 0 : i32
    %4 = arith.cmpi slt, %2, %c0_i32_1 : i32
    %c0_i32_2 = arith.constant 0 : i32
    %5 = arith.cmpi slt, %1, %c0_i32_2 : i32
    %6 = arith.xori %4, %5 : i1
    %7 = arith.andi %6, %3 : i1
    %8 = arith.addi %2, %1 : i32
    %9 = arith.select %7, %8, %2 : i32
    %c0_i32_3 = arith.constant 0 : i32
    %10 = arith.cmpi eq, %arg1, %c0_i32_3 : i32
    %11 = arith.extui %10 : i1 to i32
    %c0_i32_4 = arith.constant 0 : i32
    %12 = arith.cmpi ne, %11, %c0_i32_4 : i32
    scf.if %12 {
      %c0_i32_49 = arith.constant 0 : i32
      %c0_i32_50 = arith.constant 0 : i32
      %c0_i32_51 = arith.constant 0 : i32
      %c0_i32_52 = arith.constant 0 : i32
      %c0_i32_53 = arith.constant 0 : i32
      %63 = tpu.memref_slice %arg2[%arg0, %c0_i32_51, %c0_i32_52, %c0_i32_53] : memref<2x18x18x128xf32, #tpu.memory_space<any>> -> memref<1x18x18x128xf32, #tpu.memory_space<any>>
      %64 = tpu.memref_squeeze %63 : memref<1x18x18x128xf32, #tpu.memory_space<any>> -> memref<18x18x128xf32, #tpu.memory_space<any>>
      %c0_i32_54 = arith.constant 0 : i32
      %c0_i32_55 = arith.constant 0 : i32
      %c0_i32_56 = arith.constant 0 : i32
      %65 = tpu.memref_slice %arg6[%c0_i32_49, %c0_i32_54, %c0_i32_55, %c0_i32_56] : memref<2x18x18x128xf32, #tpu.memory_space<vmem>> -> memref<1x18x18x128xf32, #tpu.memory_space<vmem>>
      %66 = tpu.memref_squeeze %65 : memref<1x18x18x128xf32, #tpu.memory_space<vmem>> -> memref<18x18x128xf32, #tpu.memory_space<vmem>>
      %67 = tpu.memref_slice %arg7[%c0_i32_50] : memref<2x!tpu.dma_semaphore, #tpu.memory_space<semaphore_mem>> -> memref<1x!tpu.dma_semaphore, #tpu.memory_space<semaphore_mem>>
      %68 = tpu.memref_squeeze %67 : memref<1x!tpu.dma_semaphore, #tpu.memory_space<semaphore_mem>> -> memref<!tpu.dma_semaphore, #tpu.memory_space<semaphore_mem>>
      tpu.enqueue_dma source(%64 : memref<18x18x128xf32, #tpu.memory_space<any>>) target(%66 : memref<18x18x128xf32, #tpu.memory_space<vmem>>) target_semaphore(%68 : memref<!tpu.dma_semaphore, #tpu.memory_space<semaphore_mem>>)
    } else {
    }
    %c16_i32 = arith.constant 16 : i32
    %13 = arith.muli %arg1, %c16_i32 : i32
    %c0_i32_5 = arith.constant 0 : i32
    %c0_i32_6 = arith.constant 0 : i32
    %14 = tpu.memref_slice %arg2[%arg0, %13, %c0_i32_5, %c0_i32_6] : memref<2x18x18x128xf32, #tpu.memory_space<any>> -> memref<1x18x18x128xf32, #tpu.memory_space<any>>
    %15 = tpu.memref_squeeze %14 : memref<1x18x18x128xf32, #tpu.memory_space<any>> -> memref<18x18x128xf32, #tpu.memory_space<any>>
    %c0_i32_7 = arith.constant 0 : i32
    %c0_i32_8 = arith.constant 0 : i32
    %c0_i32_9 = arith.constant 0 : i32
    %16 = tpu.memref_slice %arg6[%9, %c0_i32_7, %c0_i32_8, %c0_i32_9] : memref<2x18x18x128xf32, #tpu.memory_space<vmem>> -> memref<1x18x18x128xf32, #tpu.memory_space<vmem>>
    %17 = tpu.memref_squeeze %16 : memref<1x18x18x128xf32, #tpu.memory_space<vmem>> -> memref<18x18x128xf32, #tpu.memory_space<vmem>>
    %18 = tpu.memref_slice %arg7[%9] : memref<2x!tpu.dma_semaphore, #tpu.memory_space<semaphore_mem>> -> memref<1x!tpu.dma_semaphore, #tpu.memory_space<semaphore_mem>>
    %19 = tpu.memref_squeeze %18 : memref<1x!tpu.dma_semaphore, #tpu.memory_space<semaphore_mem>> -> memref<!tpu.dma_semaphore, #tpu.memory_space<semaphore_mem>>
    tpu.wait_dma2 semaphore(%19 : memref<!tpu.dma_semaphore, #tpu.memory_space<semaphore_mem>>) src(%15 : memref<18x18x128xf32, #tpu.memory_space<any>>) dst(%17 : memref<18x18x128xf32, #tpu.memory_space<vmem>>)
    %c1_i32_10 = arith.constant 1 : i32
    %20 = arith.addi %arg1, %c1_i32_10 : i32
    %c1_i32_11 = arith.constant 1 : i32
    %21 = arith.cmpi slt, %20, %c1_i32_11 : i32
    %22 = arith.extui %21 : i1 to i32
    %c0_i32_12 = arith.constant 0 : i32
    %23 = arith.cmpi ne, %22, %c0_i32_12 : i32
    scf.if %23 {
      %c1_i32_49 = arith.constant 1 : i32
      %63 = arith.addi %arg1, %c1_i32_49 : i32
      %c1_i32_50 = arith.constant 1 : i32
      %64 = arith.subi %c1_i32_50, %9 : i32
      %c16_i32_51 = arith.constant 16 : i32
      %65 = arith.muli %63, %c16_i32_51 : i32
      %c0_i32_52 = arith.constant 0 : i32
      %c0_i32_53 = arith.constant 0 : i32
      %66 = tpu.memref_slice %arg2[%arg0, %65, %c0_i32_52, %c0_i32_53] : memref<2x18x18x128xf32, #tpu.memory_space<any>> -> memref<1x18x18x128xf32, #tpu.memory_space<any>>
      %67 = tpu.memref_squeeze %66 : memref<1x18x18x128xf32, #tpu.memory_space<any>> -> memref<18x18x128xf32, #tpu.memory_space<any>>
      %c0_i32_54 = arith.constant 0 : i32
      %c0_i32_55 = arith.constant 0 : i32
      %c0_i32_56 = arith.constant 0 : i32
      %68 = tpu.memref_slice %arg6[%64, %c0_i32_54, %c0_i32_55, %c0_i32_56] : memref<2x18x18x128xf32, #tpu.memory_space<vmem>> -> memref<1x18x18x128xf32, #tpu.memory_space<vmem>>
      %69 = tpu.memref_squeeze %68 : memref<1x18x18x128xf32, #tpu.memory_space<vmem>> -> memref<18x18x128xf32, #tpu.memory_space<vmem>>
      %70 = tpu.memref_slice %arg7[%64] : memref<2x!tpu.dma_semaphore, #tpu.memory_space<semaphore_mem>> -> memref<1x!tpu.dma_semaphore, #tpu.memory_space<semaphore_mem>>
      %71 = tpu.memref_squeeze %70 : memref<1x!tpu.dma_semaphore, #tpu.memory_space<semaphore_mem>> -> memref<!tpu.dma_semaphore, #tpu.memory_space<semaphore_mem>>
      tpu.enqueue_dma source(%67 : memref<18x18x128xf32, #tpu.memory_space<any>>) target(%69 : memref<18x18x128xf32, #tpu.memory_space<vmem>>) target_semaphore(%71 : memref<!tpu.dma_semaphore, #tpu.memory_space<semaphore_mem>>)
    } else {
    }
    %c0_i32_13 = arith.constant 0 : i32
    %c0_i32_14 = arith.constant 0 : i32
    %c0_i32_15 = arith.constant 0 : i32
    %24 = tpu.memref_slice %arg6[%9, %c0_i32_13, %c0_i32_14, %c0_i32_15] : memref<2x18x18x128xf32, #tpu.memory_space<vmem>> -> memref<1x18x18x128xf32, #tpu.memory_space<vmem>>
    %25 = tpu.memref_squeeze %24 : memref<1x18x18x128xf32, #tpu.memory_space<vmem>> -> memref<18x18x128xf32, #tpu.memory_space<vmem>>
    %c0 = arith.constant 0 : index
    %c0_16 = arith.constant 0 : index
    %c0_17 = arith.constant 0 : index
    %26 = vector.load %25[%c0, %c0_16, %c0_17] : memref<18x18x128xf32, #tpu.memory_space<vmem>>, vector<18x16x128xf32>
    %c0_i32_18 = arith.constant 0 : i32
    %c0_i32_19 = arith.constant 0 : i32
    %c0_i32_20 = arith.constant 0 : i32
    %27 = tpu.memref_slice %arg6[%9, %c0_i32_18, %c0_i32_19, %c0_i32_20] : memref<2x18x18x128xf32, #tpu.memory_space<vmem>> -> memref<1x18x18x128xf32, #tpu.memory_space<vmem>>
    %28 = tpu.memref_squeeze %27 : memref<1x18x18x128xf32, #tpu.memory_space<vmem>> -> memref<18x18x128xf32, #tpu.memory_space<vmem>>
    %c0_21 = arith.constant 0 : index
    %c1 = arith.constant 1 : index
    %c0_22 = arith.constant 0 : index
    %29 = vector.load %28[%c0_21, %c1, %c0_22] : memref<18x18x128xf32, #tpu.memory_space<vmem>>, vector<18x16x128xf32>
    %c0_i32_23 = arith.constant 0 : i32
    %c0_i32_24 = arith.constant 0 : i32
    %c0_i32_25 = arith.constant 0 : i32
    %30 = tpu.memref_slice %arg6[%9, %c0_i32_23, %c0_i32_24, %c0_i32_25] : memref<2x18x18x128xf32, #tpu.memory_space<vmem>> -> memref<1x18x18x128xf32, #tpu.memory_space<vmem>>
    %31 = tpu.memref_squeeze %30 : memref<1x18x18x128xf32, #tpu.memory_space<vmem>> -> memref<18x18x128xf32, #tpu.memory_space<vmem>>
    %c0_26 = arith.constant 0 : index
    %c2 = arith.constant 2 : index
    %c0_27 = arith.constant 0 : index
    %32 = vector.load %31[%c0_26, %c2, %c0_27] : memref<18x18x128xf32, #tpu.memory_space<vmem>>, vector<18x16x128xf32>
    %33 = tpu.concatenate %26, %29, %32 in 2 : vector<18x16x128xf32>, vector<18x16x128xf32>, vector<18x16x128xf32> -> vector<18x16x384xf32>
    %cst = arith.constant 0.000000e+00 : f32
    %34 = vector.broadcast %cst : f32 to vector<256x128xf32>
    %35 = vector.extract_strided_slice %33 {offsets = [0, 0, 0], sizes = [16, 16, 384], strides = [1, 1, 1]} : vector<18x16x384xf32> to vector<16x16x384xf32>
    %36 = vector.shape_cast %35 : vector<16x16x384xf32> to vector<256x384xf32>
    %c0_28 = arith.constant 0 : index
    %c0_29 = arith.constant 0 : index
    %c0_30 = arith.constant 0 : index
    %37 = vector.load %arg3[%c0_28, %c0_29, %c0_30] : memref<3x384x128xf32, #tpu.memory_space<vmem>>, vector<1x384x128xf32>
    %38 = vector.shape_cast %37 : vector<1x384x128xf32> to vector<384x128xf32>
    %cst_31 = arith.constant dense<0.000000e+00> : vector<256x128xf32>
    %39 = tpu.matmul %36, %38, %cst_31 {dimension_numbers = #tpu.dot_dimension_numbers<[1], [0], [0], [1], [0, 0, 1, 1], [], []>} : vector<256x384xf32>, vector<384x128xf32>, vector<256x128xf32> -> vector<256x128xf32>
    %40 = arith.addf %34, %39 : vector<256x128xf32>
    %41 = vector.extract_strided_slice %33 {offsets = [1, 0, 0], sizes = [16, 16, 384], strides = [1, 1, 1]} : vector<18x16x384xf32> to vector<16x16x384xf32>
    %42 = vector.shape_cast %41 : vector<16x16x384xf32> to vector<256x384xf32>
    %c1_32 = arith.constant 1 : index
    %c0_33 = arith.constant 0 : index
    %c0_34 = arith.constant 0 : index
    %43 = vector.load %arg3[%c1_32, %c0_33, %c0_34] : memref<3x384x128xf32, #tpu.memory_space<vmem>>, vector<1x384x128xf32>
    %44 = vector.shape_cast %43 : vector<1x384x128xf32> to vector<384x128xf32>
    %cst_35 = arith.constant dense<0.000000e+00> : vector<256x128xf32>
    %45 = tpu.matmul %42, %44, %cst_35 {dimension_numbers = #tpu.dot_dimension_numbers<[1], [0], [0], [1], [0, 0, 1, 1], [], []>} : vector<256x384xf32>, vector<384x128xf32>, vector<256x128xf32> -> vector<256x128xf32>
    %46 = arith.addf %40, %45 : vector<256x128xf32>
    %47 = vector.extract_strided_slice %33 {offsets = [2, 0, 0], sizes = [16, 16, 384], strides = [1, 1, 1]} : vector<18x16x384xf32> to vector<16x16x384xf32>
    %48 = vector.shape_cast %47 : vector<16x16x384xf32> to vector<256x384xf32>
    %c2_36 = arith.constant 2 : index
    %c0_37 = arith.constant 0 : index
    %c0_38 = arith.constant 0 : index
    %49 = vector.load %arg3[%c2_36, %c0_37, %c0_38] : memref<3x384x128xf32, #tpu.memory_space<vmem>>, vector<1x384x128xf32>
    %50 = vector.shape_cast %49 : vector<1x384x128xf32> to vector<384x128xf32>
    %cst_39 = arith.constant dense<0.000000e+00> : vector<256x128xf32>
    %51 = tpu.matmul %48, %50, %cst_39 {dimension_numbers = #tpu.dot_dimension_numbers<[1], [0], [0], [1], [0, 0, 1, 1], [], []>} : vector<256x384xf32>, vector<384x128xf32>, vector<256x128xf32> -> vector<256x128xf32>
    %52 = arith.addf %46, %51 : vector<256x128xf32>
    %c0_40 = arith.constant 0 : index
    %c0_41 = arith.constant 0 : index
    %53 = vector.load %arg4[%c0_40, %c0_41] : memref<2x128xf32, #tpu.memory_space<vmem>>, vector<1x128xf32>
    %54 = vector.broadcast %53 : vector<1x128xf32> to vector<256x128xf32>
    %55 = arith.mulf %52, %54 : vector<256x128xf32>
    %c1_42 = arith.constant 1 : index
    %c0_43 = arith.constant 0 : index
    %56 = vector.load %arg4[%c1_42, %c0_43] : memref<2x128xf32, #tpu.memory_space<vmem>>, vector<1x128xf32>
    %57 = vector.broadcast %56 : vector<1x128xf32> to vector<256x128xf32>
    %58 = arith.addf %55, %57 : vector<256x128xf32>
    %cst_44 = arith.constant 0.000000e+00 : f32
    %59 = vector.broadcast %cst_44 : f32 to vector<256x128xf32>
    %60 = arith.maximumf %58, %59 : vector<256x128xf32>
    %61 = vector.shape_cast %60 : vector<256x128xf32> to vector<1x16x16x128xf32>
    %c0_45 = arith.constant 0 : index
    %c0_46 = arith.constant 0 : index
    %c0_47 = arith.constant 0 : index
    %c0_48 = arith.constant 0 : index
    %62 = vector.load %arg5[%c0_45, %c0_46, %c0_47, %c0_48] : memref<1x16x16x128xf32, #tpu.memory_space<vmem>>, vector<1x16x16x128xf32>
    tpu.vector_store %arg5[%c0_45, %c0_46, %c0_47, %c0_48], %61 {strides = array<i32>} : memref<1x16x16x128xf32, #tpu.memory_space<vmem>>, vector<1x16x16x128xf32>,
    return
  }
  func.func @transform_1(%arg0: i32, %arg1: i32) -> (i32, i32, i32) {
    %c0_i32 = arith.constant 0 : i32
    %c0_i32_0 = arith.constant 0 : i32
    %c0_i32_1 = arith.constant 0 : i32
    %c0_i32_2 = arith.constant 0 : i32
    return %c0_i32, %c0_i32_0, %c0_i32_1 : i32, i32, i32
  }
  func.func @transform_2(%arg0: i32, %arg1: i32) -> (i32, i32) {
    %c0_i32 = arith.constant 0 : i32
    %c0_i32_0 = arith.constant 0 : i32
    %c0_i32_1 = arith.constant 0 : i32
    return %c0_i32, %c0_i32_0 : i32, i32
  }
  func.func @transform_3(%arg0: i32, %arg1: i32) -> (i32, i32, i32, i32) {
    %c0_i32 = arith.constant 0 : i32
    %c0_i32_0 = arith.constant 0 : i32
    %c0_i32_1 = arith.constant 0 : i32
    return %arg0, %arg1, %c0_i32, %c0_i32_0 : i32, i32, i32, i32
  }
}

module attributes {stable_mosaic.version = 11 : i64} {
  func.func @_conv3x3_bn_relu_kernel(%arg0: i32, %arg1: i32, %arg2: memref<2x18x18x128xf32, #tpu.memory_space<any>>, %arg3: memref<3x384x128xf32, #tpu.memory_space<vmem>>, %arg4: memref<2x128xf32, #tpu.memory_space<vmem>>, %arg5: memref<1x16x16x128xf32, #tpu.memory_space<vmem>>, %arg6: memref<2x18x18x128xf32, #tpu.memory_space<vmem>>, %arg7: memref<2x!tpu.dma_semaphore, #tpu.memory_space<semaphore_mem>>) attributes {dimension_semantics = [#tpu.dimension_semantics<parallel>, #tpu.dimension_semantics<arbitrary>], iteration_bounds = array<i64: 2, 1>, scalar_prefetch = 0 : i64, scratch_operands = 2 : i64, tpu.core_type = #tpu.core_type<tc>, window_params = [{}, {pipeline_mode = #tpu.pipeline_mode<synchronous>, transform_indices = @transform_1, window_bounds = array<i64: 3, 384, 128>}, {pipeline_mode = #tpu.pipeline_mode<synchronous>, transform_indices = @transform_2, window_bounds = array<i64: 2, 128>}, {transform_indices = @transform_3, window_bounds = array<i64: 1, 16, 16, 128>}]} {
    %c2_i32 = arith.constant 2 : i32
    %c0_i32 = arith.constant 0 : i32
    %0 = arith.cmpi eq, %c2_i32, %c0_i32 : i32
    %c1_i32 = arith.constant 1 : i32
    %1 = arith.select %0, %c1_i32, %c2_i32 : i32
    %2 = arith.remsi %arg1, %1 : i32
    %c0_i32_0 = arith.constant 0 : i32
    %3 = arith.cmpi ne, %2, %c0_i32_0 : i32
    %c0_i32_1 = arith.constant 0 : i32
    %4 = arith.cmpi slt, %2, %c0_i32_1 : i32
    %c0_i32_2 = arith.constant 0 : i32
    %5 = arith.cmpi slt, %1, %c0_i32_2 : i32
    %6 = arith.xori %4, %5 : i1
    %7 = arith.andi %6, %3 : i1
    %8 = arith.addi %2, %1 : i32
    %9 = arith.select %7, %8, %2 : i32
    %c0_i32_3 = arith.constant 0 : i32
    %10 = arith.cmpi eq, %arg1, %c0_i32_3 : i32
    %11 = arith.extui %10 : i1 to i32
    %c0_i32_4 = arith.constant 0 : i32
    %12 = arith.cmpi ne, %11, %c0_i32_4 : i32
    scf.if %12 {
      %c0_i32_49 = arith.constant 0 : i32
      %c0_i32_50 = arith.constant 0 : i32
      %c0_i32_51 = arith.constant 0 : i32
      %c0_i32_52 = arith.constant 0 : i32
      %c0_i32_53 = arith.constant 0 : i32
      %63 = tpu.memref_slice %arg2[%arg0, %c0_i32_51, %c0_i32_52, %c0_i32_53] : memref<2x18x18x128xf32, #tpu.memory_space<any>> -> memref<1x18x18x128xf32, #tpu.memory_space<any>>
      %64 = tpu.memref_squeeze %63 : memref<1x18x18x128xf32, #tpu.memory_space<any>> -> memref<18x18x128xf32, #tpu.memory_space<any>>
      %c0_i32_54 = arith.constant 0 : i32
      %c0_i32_55 = arith.constant 0 : i32
      %c0_i32_56 = arith.constant 0 : i32
      %65 = tpu.memref_slice %arg6[%c0_i32_49, %c0_i32_54, %c0_i32_55, %c0_i32_56] : memref<2x18x18x128xf32, #tpu.memory_space<vmem>> -> memref<1x18x18x128xf32, #tpu.memory_space<vmem>>
      %66 = tpu.memref_squeeze %65 : memref<1x18x18x128xf32, #tpu.memory_space<vmem>> -> memref<18x18x128xf32, #tpu.memory_space<vmem>>
      %67 = tpu.memref_slice %arg7[%c0_i32_50] : memref<2x!tpu.dma_semaphore, #tpu.memory_space<semaphore_mem>> -> memref<1x!tpu.dma_semaphore, #tpu.memory_space<semaphore_mem>>
      %68 = tpu.memref_squeeze %67 : memref<1x!tpu.dma_semaphore, #tpu.memory_space<semaphore_mem>> -> memref<!tpu.dma_semaphore, #tpu.memory_space<semaphore_mem>>
      tpu.enqueue_dma source(%64 : memref<18x18x128xf32, #tpu.memory_space<any>>) target(%66 : memref<18x18x128xf32, #tpu.memory_space<vmem>>) target_semaphore(%68 : memref<!tpu.dma_semaphore, #tpu.memory_space<semaphore_mem>>)
    } else {
    }
    %c16_i32 = arith.constant 16 : i32
    %13 = arith.muli %arg1, %c16_i32 : i32
    %c0_i32_5 = arith.constant 0 : i32
    %c0_i32_6 = arith.constant 0 : i32
    %14 = tpu.memref_slice %arg2[%arg0, %13, %c0_i32_5, %c0_i32_6] : memref<2x18x18x128xf32, #tpu.memory_space<any>> -> memref<1x18x18x128xf32, #tpu.memory_space<any>>
    %15 = tpu.memref_squeeze %14 : memref<1x18x18x128xf32, #tpu.memory_space<any>> -> memref<18x18x128xf32, #tpu.memory_space<any>>
    %c0_i32_7 = arith.constant 0 : i32
    %c0_i32_8 = arith.constant 0 : i32
    %c0_i32_9 = arith.constant 0 : i32
    %16 = tpu.memref_slice %arg6[%9, %c0_i32_7, %c0_i32_8, %c0_i32_9] : memref<2x18x18x128xf32, #tpu.memory_space<vmem>> -> memref<1x18x18x128xf32, #tpu.memory_space<vmem>>
    %17 = tpu.memref_squeeze %16 : memref<1x18x18x128xf32, #tpu.memory_space<vmem>> -> memref<18x18x128xf32, #tpu.memory_space<vmem>>
    %18 = tpu.memref_slice %arg7[%9] : memref<2x!tpu.dma_semaphore, #tpu.memory_space<semaphore_mem>> -> memref<1x!tpu.dma_semaphore, #tpu.memory_space<semaphore_mem>>
    %19 = tpu.memref_squeeze %18 : memref<1x!tpu.dma_semaphore, #tpu.memory_space<semaphore_mem>> -> memref<!tpu.dma_semaphore, #tpu.memory_space<semaphore_mem>>
    tpu.wait_dma2 semaphore(%19 : memref<!tpu.dma_semaphore, #tpu.memory_space<semaphore_mem>>) src(%15 : memref<18x18x128xf32, #tpu.memory_space<any>>) dst(%17 : memref<18x18x128xf32, #tpu.memory_space<vmem>>)
    %c1_i32_10 = arith.constant 1 : i32
    %20 = arith.addi %arg1, %c1_i32_10 : i32
    %c1_i32_11 = arith.constant 1 : i32
    %21 = arith.cmpi slt, %20, %c1_i32_11 : i32
    %22 = arith.extui %21 : i1 to i32
    %c0_i32_12 = arith.constant 0 : i32
    %23 = arith.cmpi ne, %22, %c0_i32_12 : i32
    scf.if %23 {
      %c1_i32_49 = arith.constant 1 : i32
      %63 = arith.addi %arg1, %c1_i32_49 : i32
      %c1_i32_50 = arith.constant 1 : i32
      %64 = arith.subi %c1_i32_50, %9 : i32
      %c16_i32_51 = arith.constant 16 : i32
      %65 = arith.muli %63, %c16_i32_51 : i32
      %c0_i32_52 = arith.constant 0 : i32
      %c0_i32_53 = arith.constant 0 : i32
      %66 = tpu.memref_slice %arg2[%arg0, %65, %c0_i32_52, %c0_i32_53] : memref<2x18x18x128xf32, #tpu.memory_space<any>> -> memref<1x18x18x128xf32, #tpu.memory_space<any>>
      %67 = tpu.memref_squeeze %66 : memref<1x18x18x128xf32, #tpu.memory_space<any>> -> memref<18x18x128xf32, #tpu.memory_space<any>>
      %c0_i32_54 = arith.constant 0 : i32
      %c0_i32_55 = arith.constant 0 : i32
      %c0_i32_56 = arith.constant 0 : i32
      %68 = tpu.memref_slice %arg6[%64, %c0_i32_54, %c0_i32_55, %c0_i32_56] : memref<2x18x18x128xf32, #tpu.memory_space<vmem>> -> memref<1x18x18x128xf32, #tpu.memory_space<vmem>>
      %69 = tpu.memref_squeeze %68 : memref<1x18x18x128xf32, #tpu.memory_space<vmem>> -> memref<18x18x128xf32, #tpu.memory_space<vmem>>
      %70 = tpu.memref_slice %arg7[%64] : memref<2x!tpu.dma_semaphore, #tpu.memory_space<semaphore_mem>> -> memref<1x!tpu.dma_semaphore, #tpu.memory_space<semaphore_mem>>
      %71 = tpu.memref_squeeze %70 : memref<1x!tpu.dma_semaphore, #tpu.memory_space<semaphore_mem>> -> memref<!tpu.dma_semaphore, #tpu.memory_space<semaphore_mem>>
      tpu.enqueue_dma source(%67 : memref<18x18x128xf32, #tpu.memory_space<any>>) target(%69 : memref<18x18x128xf32, #tpu.memory_space<vmem>>) target_semaphore(%71 : memref<!tpu.dma_semaphore, #tpu.memory_space<semaphore_mem>>)
    } else {
    }
    %c0_i32_13 = arith.constant 0 : i32
    %c0_i32_14 = arith.constant 0 : i32
    %c0_i32_15 = arith.constant 0 : i32
    %24 = tpu.memref_slice %arg6[%9, %c0_i32_13, %c0_i32_14, %c0_i32_15] : memref<2x18x18x128xf32, #tpu.memory_space<vmem>> -> memref<1x18x18x128xf32, #tpu.memory_space<vmem>>
    %25 = tpu.memref_squeeze %24 : memref<1x18x18x128xf32, #tpu.memory_space<vmem>> -> memref<18x18x128xf32, #tpu.memory_space<vmem>>
    %c0 = arith.constant 0 : index
    %c0_16 = arith.constant 0 : index
    %c0_17 = arith.constant 0 : index
    %26 = vector.load %25[%c0, %c0_16, %c0_17] : memref<18x18x128xf32, #tpu.memory_space<vmem>>, vector<18x16x128xf32>
    %c0_i32_18 = arith.constant 0 : i32
    %c0_i32_19 = arith.constant 0 : i32
    %c0_i32_20 = arith.constant 0 : i32
    %27 = tpu.memref_slice %arg6[%9, %c0_i32_18, %c0_i32_19, %c0_i32_20] : memref<2x18x18x128xf32, #tpu.memory_space<vmem>> -> memref<1x18x18x128xf32, #tpu.memory_space<vmem>>
    %28 = tpu.memref_squeeze %27 : memref<1x18x18x128xf32, #tpu.memory_space<vmem>> -> memref<18x18x128xf32, #tpu.memory_space<vmem>>
    %c0_21 = arith.constant 0 : index
    %c1 = arith.constant 1 : index
    %c0_22 = arith.constant 0 : index
    %29 = vector.load %28[%c0_21, %c1, %c0_22] : memref<18x18x128xf32, #tpu.memory_space<vmem>>, vector<18x16x128xf32>
    %c0_i32_23 = arith.constant 0 : i32
    %c0_i32_24 = arith.constant 0 : i32
    %c0_i32_25 = arith.constant 0 : i32
    %30 = tpu.memref_slice %arg6[%9, %c0_i32_23, %c0_i32_24, %c0_i32_25] : memref<2x18x18x128xf32, #tpu.memory_space<vmem>> -> memref<1x18x18x128xf32, #tpu.memory_space<vmem>>
    %31 = tpu.memref_squeeze %30 : memref<1x18x18x128xf32, #tpu.memory_space<vmem>> -> memref<18x18x128xf32, #tpu.memory_space<vmem>>
    %c0_26 = arith.constant 0 : index
    %c2 = arith.constant 2 : index
    %c0_27 = arith.constant 0 : index
    %32 = vector.load %31[%c0_26, %c2, %c0_27] : memref<18x18x128xf32, #tpu.memory_space<vmem>>, vector<18x16x128xf32>
    %33 = tpu.concatenate %26, %29, %32 in 2 : vector<18x16x128xf32>, vector<18x16x128xf32>, vector<18x16x128xf32> -> vector<18x16x384xf32>
    %cst = arith.constant 0.000000e+00 : f32
    %34 = vector.broadcast %cst : f32 to vector<256x128xf32>
    %35 = vector.extract_strided_slice %33 {offsets = [0, 0, 0], sizes = [16, 16, 384], strides = [1, 1, 1]} : vector<18x16x384xf32> to vector<16x16x384xf32>
    %36 = vector.shape_cast %35 : vector<16x16x384xf32> to vector<256x384xf32>
    %c0_28 = arith.constant 0 : index
    %c0_29 = arith.constant 0 : index
    %c0_30 = arith.constant 0 : index
    %37 = vector.load %arg3[%c0_28, %c0_29, %c0_30] : memref<3x384x128xf32, #tpu.memory_space<vmem>>, vector<1x384x128xf32>
    %38 = vector.shape_cast %37 : vector<1x384x128xf32> to vector<384x128xf32>
    %cst_31 = arith.constant dense<0.000000e+00> : vector<256x128xf32>
    %39 = tpu.matmul %36, %38, %cst_31 {dimension_numbers = #tpu.dot_dimension_numbers<[1], [0], [0], [1], [0, 0, 1, 1], [], []>} : vector<256x384xf32>, vector<384x128xf32>, vector<256x128xf32> -> vector<256x128xf32>
    %40 = arith.addf %34, %39 : vector<256x128xf32>
    %41 = vector.extract_strided_slice %33 {offsets = [1, 0, 0], sizes = [16, 16, 384], strides = [1, 1, 1]} : vector<18x16x384xf32> to vector<16x16x384xf32>
    %42 = vector.shape_cast %41 : vector<16x16x384xf32> to vector<256x384xf32>
    %c1_32 = arith.constant 1 : index
    %c0_33 = arith.constant 0 : index
    %c0_34 = arith.constant 0 : index
    %43 = vector.load %arg3[%c1_32, %c0_33, %c0_34] : memref<3x384x128xf32, #tpu.memory_space<vmem>>, vector<1x384x128xf32>
    %44 = vector.shape_cast %43 : vector<1x384x128xf32> to vector<384x128xf32>
    %cst_35 = arith.constant dense<0.000000e+00> : vector<256x128xf32>
    %45 = tpu.matmul %42, %44, %cst_35 {dimension_numbers = #tpu.dot_dimension_numbers<[1], [0], [0], [1], [0, 0, 1, 1], [], []>} : vector<256x384xf32>, vector<384x128xf32>, vector<256x128xf32> -> vector<256x128xf32>
    %46 = arith.addf %40, %45 : vector<256x128xf32>
    %47 = vector.extract_strided_slice %33 {offsets = [2, 0, 0], sizes = [16, 16, 384], strides = [1, 1, 1]} : vector<18x16x384xf32> to vector<16x16x384xf32>
    %48 = vector.shape_cast %47 : vector<16x16x384xf32> to vector<256x384xf32>
    %c2_36 = arith.constant 2 : index
    %c0_37 = arith.constant 0 : index
    %c0_38 = arith.constant 0 : index
    %49 = vector.load %arg3[%c2_36, %c0_37, %c0_38] : memref<3x384x128xf32, #tpu.memory_space<vmem>>, vector<1x384x128xf32>
    %50 = vector.shape_cast %49 : vector<1x384x128xf32> to vector<384x128xf32>
    %cst_39 = arith.constant dense<0.000000e+00> : vector<256x128xf32>
    %51 = tpu.matmul %48, %50, %cst_39 {dimension_numbers = #tpu.dot_dimension_numbers<[1], [0], [0], [1], [0, 0, 1, 1], [], []>} : vector<256x384xf32>, vector<384x128xf32>, vector<256x128xf32> -> vector<256x128xf32>
    %52 = arith.addf %46, %51 : vector<256x128xf32>
    %c0_40 = arith.constant 0 : index
    %c0_41 = arith.constant 0 : index
    %53 = vector.load %arg4[%c0_40, %c0_41] : memref<2x128xf32, #tpu.memory_space<vmem>>, vector<1x128xf32>
    %54 = vector.broadcast %53 : vector<1x128xf32> to vector<256x128xf32>
    %55 = arith.mulf %52, %54 : vector<256x128xf32>
    %c1_42 = arith.constant 1 : index
    %c0_43 = arith.constant 0 : index
    %56 = vector.load %arg4[%c1_42, %c0_43] : memref<2x128xf32, #tpu.memory_space<vmem>>, vector<1x128xf32>
    %57 = vector.broadcast %56 : vector<1x128xf32> to vector<256x128xf32>
    %58 = arith.addf %55, %57 : vector<256x128xf32>
    %cst_44 = arith.constant 0.000000e+00 : f32
    %59 = vector.broadcast %cst_44 : f32 to vector<256x128xf32>
    %60 = arith.maximumf %58, %59 : vector<256x128xf32>
    %61 = vector.shape_cast %60 : vector<256x128xf32> to vector<1x16x16x128xf32>
    %c0_45 = arith.constant 0 : index
    %c0_46 = arith.constant 0 : index
    %c0_47 = arith.constant 0 : index
    %c0_48 = arith.constant 0 : index
    %62 = vector.load %arg5[%c0_45, %c0_46, %c0_47, %c0_48] : memref<1x16x16x128xf32, #tpu.memory_space<vmem>>, vector<1x16x16x128xf32>
    tpu.vector_store %arg5[%c0_45, %c0_46, %c0_47, %c0_48], %61 {strides = array<i32>} : memref<1x16x16x128xf32, #tpu.memory_space<vmem>>, vector<1x16x16x128xf32>,
    return
  }
  func.func @transform_1(%arg0: i32, %arg1: i32) -> (i32, i32, i32) {
    %c0_i32 = arith.constant 0 : i32
    %c0_i32_0 = arith.constant 0 : i32
    %c0_i32_1 = arith.constant 0 : i32
    %c0_i32_2 = arith.constant 0 : i32
    return %c0_i32, %c0_i32_0, %c0_i32_1 : i32, i32, i32
  }
  func.func @transform_2(%arg0: i32, %arg1: i32) -> (i32, i32) {
    %c0_i32 = arith.constant 0 : i32
    %c0_i32_0 = arith.constant 0 : i32
    %c0_i32_1 = arith.constant 0 : i32
    return %c0_i32, %c0_i32_0 : i32, i32
  }
  func.func @transform_3(%arg0: i32, %arg1: i32) -> (i32, i32, i32, i32) {
    %c0_i32 = arith.constant 0 : i32
    %c0_i32_0 = arith.constant 0 : i32
    %c0_i32_1 = arith.constant 0 : i32
    return %arg0, %arg1, %c0_i32, %c0_i32_0 : i32, i32, i32, i32
  }
}

</mosaic_0001>

<llo_original>
// kernel: tpu_custom_call.1
$region0: #{tpu_custom_call.1}
  #allocation0 [shape = 'u32[]', space=smem, size = 0x4, offset = 0x4, fixed_abs, tag = 'smem constant byte address 0x4 - core index']
  #allocation1 [shape = 'u32[72,128]{1,0:T(1,128)}', space=vmem, size = 0x9000, scoped, tag = 'internal scratch']
  #allocation2 [shape = 'f32[2,18,18,128]{3,2,1,0:T(8,128)}', space=vmem, size = 0x6c000, scoped, tag = 'scratch operand']
  #allocation3 [shape = 's32[2]{0}', space=sflag, size = 0x8, scoped, tag = 'scratch operand']
  #allocation6 [shape = 's32[]', space=sflag, size = 0x4, offset = 0, fixed_abs, tag = 'sflag constant byte address 0x0 - dummy sync flag']
  #allocation7 [shape = 's32[]', space=sflag, size = 0x4, offset = 0, fixed_abs, tag = 'sflag constant byte address 0x0 - dummy sync flag']
  %s0 = inlined_call_operand.vmem [shape: f32[2,18,18,128], index: 0, kind: input, shape index: {}]
  %s1 = inlined_call_operand.vmem [shape: f32[3,384,128], index: 1, kind: input, shape index: {}]
  %s2 = inlined_call_operand.vmem [shape: f32[2,128], index: 2, kind: input, shape index: {}]
  %s3 = inlined_call_operand.hbm [shape: f32[2,16,16,128], index: 3, kind: output, shape index: {}]
  %s4 = sld [smem:[#allocation0]]
  $region93: #{tpu_custom_call.1} parent=0
    _
  %s6 = ssub.s32 1, %s4
  %s7 = scalar_select 0, %s6, %s4
  $region1: #{tpu_custom_call.1} parent=0
    #allocation4 [shape = 'u8[262144]{0}', space=vmem, size = 0x40000, scoped, tag = 'output window, operand 0']
    #allocation5 [shape = 's32[2]{0}', space=sflag, size = 0x8, scoped, tag = 'scoped memory for tpu_custom_call.1']
    %8 = vsyncpa [#allocation5], 0
    %s9 = scalar_lea.sflag [#allocation5], 1
    %10 = vsyncpa %s9, 0
    loop: start=0, step=1, limit=4
    $region2: #{tpu_custom_call.1} parent=1 // loop_pre_header
      _
    $region3: #{tpu_custom_call.1} parent=1 // loop_header
      %s12 = sphi 0, %s16
      %p13 = scmp.ge.s32.totalorder %s12, 4
      %s19 = sphi 0, %s31
      %s20 = sphi 0, %s27
      %s21 = sphi 0, %s19
      %s22 = sphi 0, %s20
      %s23 = sphi 0, %s21
      %s24 = sphi 0, %s22
      %s32 = sphi 0, %s32
      %s34 = sphi 0, %s32
      %s35 = sphi 0, %s34
      %s49 = sphi 0, %s35
      %s53 = sphi 0, %s53
      %s55 = sphi 0, %s53
      %s56 = sphi 0, %s55
      %s70 = sphi 0, %s56
      %s78 = sphi 0, %s80
      %s81 = sphi 0, %s78
      %s82 = sphi 0, %s81
      %s98 = sphi 0, %s82
    $region4: #{tpu_custom_call.1} parent=1 // loop_header_branch
      %15 = sbr.rel (%p13) target = $region8
    $region5: #{tpu_custom_call.1} parent=1 // loop_body
      %s17 = ssub.s32 %s12, 1
      %s18 = ssub.s32 %s12, 2
      %s25 = sadd.s32 1, %s20
      %p26 = scmp.ge.s32.totalorder %s25, 1
      %s27 = scalar_select %p26, 0, %s25
      %s28 = sadd.s32 1, %s19
      %s29 = scalar_select %p26, %s28, %s19
      %p30 = scmp.ge.s32.totalorder %s29, 2
      %s31 = scalar_select %p30, 0, %s29
      %s33 = sadd.s32 %s32, 1
      %p36 = scmp.eq.s32.totalorder %s12, 1
      %p37 = scmp.ne.s32.totalorder %s32, %s34
      %p38 = scmp.eq.s32.totalorder %s12, 0
      %p39 = por %p37, %p38
      %p40 = scmp.ne.s32.totalorder %s32, %s34
      %p41 = scmp.eq.s32.totalorder %s17, 1
      %p42 = por %p40, %p41
      %p43 = scmp.ne.s32.totalorder %s34, %s35
      %p44 = scmp.eq.s32.totalorder %s17, 0
      %p45 = por %p43, %p44
      %p46 = scmp.ne.s32.totalorder %s34, %s35
      %p47 = scmp.eq.s32.totalorder %s18, 1
      %p48 = por %p46, %p47
      %p50 = scmp.ne.s32.totalorder %s35, %s49
      %p51 = scmp.eq.s32.totalorder %s18, 0
      %p52 = por %p50, %p51
      %s54 = sadd.s32 %s53, 1
      %p57 = scmp.eq.s32.totalorder %s12, 1
      %p58 = scmp.ne.s32.totalorder %s53, %s55
      %p59 = scmp.eq.s32.totalorder %s12, 0
      %p60 = por %p58, %p59
      %p61 = scmp.ne.s32.totalorder %s53, %s55
      %p62 = scmp.eq.s32.totalorder %s17, 1
      %p63 = por %p61, %p62
      %p64 = scmp.ne.s32.totalorder %s55, %s56
      %p65 = scmp.eq.s32.totalorder %s17, 0
      %p66 = por %p64, %p65
      %p67 = scmp.ne.s32.totalorder %s55, %s56
      %p68 = scmp.eq.s32.totalorder %s18, 1
      %p69 = por %p67, %p68
      %p71 = scmp.ne.s32.totalorder %s56, %s70
      %p72 = scmp.eq.s32.totalorder %s18, 0
      %p73 = por %p71, %p72
      %s74 = ssub.s32 %s19, %s31
      %s75 = ssub.s32 %s20, %s27
      %s76 = sor.u32 %s74, %s75
      %p77 = scmp.eq.s32.totalorder %s76, 0
      %s79 = sadd.s32 %s78, 1
      %s80 = scalar_select %p77, %s78, %s79
      %p83 = pneg %p77
      %p84 = scmp.eq.s32.totalorder %s12, 1
      %p85 = por %p83, %p84
      %p86 = scmp.ne.s32.totalorder %s78, %s81
      %p87 = scmp.eq.s32.totalorder %s12, 0
      %p88 = por %p86, %p87
      %p89 = scmp.ne.s32.totalorder %s78, %s81
      %p90 = scmp.eq.s32.totalorder %s17, 1
      %p91 = por %p89, %p90
      %p92 = scmp.ne.s32.totalorder %s81, %s82
      %p93 = scmp.eq.s32.totalorder %s17, 0
      %p94 = por %p92, %p93
      %p95 = scmp.ne.s32.totalorder %s81, %s82
      %p96 = scmp.eq.s32.totalorder %s18, 1
      %p97 = por %p95, %p96
      %p99 = scmp.ne.s32.totalorder %s82, %s98
      %p100 = scmp.eq.s32.totalorder %s18, 0
      %p101 = por %p99, %p100
      %p102 = scmp.le.s32.totalorder 1, %s12
      %p103 = scmp.lt.s32.totalorder %s12, 3
      %p104 = pnand %p102, %p103
      %p105 = pneg %p104
      // Predicated region
      $region9: #{tpu_custom_call.1} parent=5 // pred_check
        _
      $region10: #{tpu_custom_call.1} parent=5 // pred_check_branch
        %107 = sbr.rel (%p104) target = $region12
      $region11: #{tpu_custom_call.1} parent=5 // pred_region
        %s108 = ssub.s32 %s12, 1
        // Predicated region
        $region13: #{tpu_custom_call.1} parent=11 // pred_check
          %p109 = pneg %p45
        $region14: #{tpu_custom_call.1} parent=11 // pred_check_branch
          %111 = sbr.rel (%p109) target = $region16
        $region15: #{tpu_custom_call.1} parent=11 // pred_region
          _
        $region16: #{tpu_custom_call.1} parent=11 // pred_fallthru
          _
        // Predicated region
        $region17: #{tpu_custom_call.1} parent=11 // pred_check
          %p112 = pneg %p66
        $region18: #{tpu_custom_call.1} parent=11 // pred_check_branch
          %114 = sbr.rel (%p112) target = $region20
        $region19: #{tpu_custom_call.1} parent=11 // pred_region
          _
        $region20: #{tpu_custom_call.1} parent=11 // pred_fallthru
          _
      $region12: #{tpu_custom_call.1} parent=5 // pred_fallthru
        _
      %p115 = scmp.lt.s32.totalorder %s12, 2
      // Predicated region
      $region21: #{tpu_custom_call.1} parent=5 // pred_check
        %p116 = pneg %p115
      $region22: #{tpu_custom_call.1} parent=5 // pred_check_branch
        %118 = sbr.rel (%p116) target = $region24
      $region23: #{tpu_custom_call.1} parent=5 // pred_region
        _
      $region24: #{tpu_custom_call.1} parent=5 // pred_fallthru
        _
      %p119 = scmp.le.s32.totalorder 1, %s12
      %p120 = scmp.lt.s32.totalorder %s12, 3
      %p121 = pnand %p119, %p120
      %p122 = pneg %p121
      // Predicated region
      $region25: #{tpu_custom_call.1} parent=5 // pred_check
        _
      $region26: #{tpu_custom_call.1} parent=5 // pred_check_branch
        %124 = sbr.rel (%p121) target = $region28
      $region27: #{tpu_custom_call.1} parent=5 // pred_region
        %s125 = ssub.s32 %s12, 1
        %p126 = pneg %p45
        %p127 = pneg %p42
        %p128 = pneg %p66
        %p129 = pneg %p63
        %p130 = pneg %p94
        %p131 = pneg %p91
        %s132 = sand.u32 %s81, 1
        %s133 = scalar_lea.sflag [#allocation5], %s132
        %s134 = sand.u32 %s81, 1
        %s135 = smul.addr %s134, 256
        %s136 = scalar_lea.vmem [#allocation4], %s135
        %s137 = smul.u32 16, %s22
        %p138 = scmp.lt.s32.totalorder %s22, 0
        %s139 = ssub.s32 0, %s22
        %s140 = scalar_select %p138, %s139, %s22
        %s141 = sand.u32 %s140, 1
        %s142 = ssub.s32 0, %s141
        %s143 = scalar_select %p138, %s142, %s141
        %p144 = scmp.ne.s32.totalorder %s143, 0
        %p145 = scmp.lt.s32.totalorder %s143, 0
        %p146 = pnand %p145, %p144
        %p147 = pneg %p146
        %s148 = sadd.s32 %s143, 2
        %s149 = scalar_select %p147, %s148, %s143
        %p150 = scmp.eq.s32.totalorder %s22, 0
        // Predicated region
        $region29: #{tpu_custom_call.1} parent=27 // pred_check
          %p151 = pneg %p150
        $region30: #{tpu_custom_call.1} parent=27 // pred_check_branch
          %153 = sbr.rel (%p151) target = $region32
        $region31: #{tpu_custom_call.1} parent=27 // pred_region
          %s154 = smul.u32 %s21, 432
          %s155 = scalar_lea.vmem %s0, %s154
          // Predicated region
          $region33: #{tpu_custom_call.1} parent=31 // pred_check
            _
          $region34: #{tpu_custom_call.1} parent=31 // pred_check_branch
            %157 = sbr.rel (0) target = $region36
          $region35: #{tpu_custom_call.1} parent=31 // pred_region
            %s158 = scalar_lea.vmem %s155, 16
            %s159 = scalar_lea.vmem [#allocation2], 16
            loop: start=0, step=1, limit=1
            $region37: #{tpu_custom_call.1} parent=35 // loop_pre_header
              _
            $region38: #{tpu_custom_call.1} parent=35 // loop_header
              %s161 = sphi 0, %s165
              %p162 = scmp.ge.s32.totalorder %s161, 1
              %s166 = sphi %s155, %s155
              %s167 = sphi [#allocation2], [#allocation2]
            $region39: #{tpu_custom_call.1} parent=35 // loop_header_branch
              %164 = sbr.rel (%p162) target = $region43
            $region40: #{tpu_custom_call.1} parent=35 // loop_body
              %v168 = vld [vmem:[%s166] sm:$0xff]
              %169 = vst [vmem:[%s167] sm:$0xff] %v168
              %v170 = vld [vmem:[%s166 + $0x8] sm:$0xff]
              %171 = vst [vmem:[%s167 + $0x8] sm:$0xff] %v170
              %v172 = vld [vmem:[%s166 + $0x18] sm:$0xff]
              %173 = vst [vmem:[%s167 + $0x18] sm:$0xff] %v172
              %v174 = vld [vmem:[%s166 + $0x20] sm:$0xff]
              %175 = vst [vmem:[%s167 + $0x20] sm:$0xff] %v174
              %v176 = vld [vmem:[%s166 + $0x30] sm:$0xff]
              %177 = vst [vmem:[%s167 + $0x30] sm:$0xff] %v176
              %v178 = vld [vmem:[%s166 + $0x38] sm:$0xff]
              %179 = vst [vmem:[%s167 + $0x38] sm:$0xff] %v178
              %v180 = vld [vmem:[%s166 + $0x48] sm:$0xff]
              %181 = vst [vmem:[%s167 + $0x48] sm:$0xff] %v180
              %v182 = vld [vmem:[%s166 + $0x50] sm:$0xff]
              %183 = vst [vmem:[%s167 + $0x50] sm:$0xff] %v182
              %v184 = vld [vmem:[%s166 + $0x60] sm:$0xff]
              %185 = vst [vmem:[%s167 + $0x60] sm:$0xff] %v184
              %v186 = vld [vmem:[%s166 + $0x68] sm:$0xff]
              %187 = vst [vmem:[%s167 + $0x68] sm:$0xff] %v186
              %v188 = vld [vmem:[%s166 + $0x78] sm:$0xff]
              %189 = vst [vmem:[%s167 + $0x78] sm:$0xff] %v188
              %v190 = vld [vmem:[%s166 + $0x80] sm:$0xff]
              %191 = vst [vmem:[%s167 + $0x80] sm:$0xff] %v190
              %v192 = vld [vmem:[%s166 + $0x90] sm:$0xff]
              %193 = vst [vmem:[%s167 + $0x90] sm:$0xff] %v192
              %v194 = vld [vmem:[%s166 + $0x98] sm:$0xff]
              %195 = vst [vmem:[%s167 + $0x98] sm:$0xff] %v194
              %v196 = vld [vmem:[%s166 + $0xa8] sm:$0xff]
              %197 = vst [vmem:[%s167 + $0xa8] sm:$0xff] %v196
              %v198 = vld [vmem:[%s166 + $0xb0] sm:$0xff]
              %199 = vst [vmem:[%s167 + $0xb0] sm:$0xff] %v198
              %v200 = vld [vmem:[%s166 + $0xc0] sm:$0xff]
              %201 = vst [vmem:[%s167 + $0xc0] sm:$0xff] %v200
              %v202 = vld [vmem:[%s166 + $0xc8] sm:$0xff]
              %203 = vst [vmem:[%s167 + $0xc8] sm:$0xff] %v202
              %v204 = vld [vmem:[%s166 + $0xd8] sm:$0xff]
              %205 = vst [vmem:[%s167 + $0xd8] sm:$0xff] %v204
              %v206 = vld [vmem:[%s166 + $0xe0] sm:$0xff]
              %207 = vst [vmem:[%s167 + $0xe0] sm:$0xff] %v206
              %v208 = vld [vmem:[%s166 + $0xf0] sm:$0xff]
              %209 = vst [vmem:[%s167 + $0xf0] sm:$0xff] %v208
              %v210 = vld [vmem:[%s166 + $0xf8] sm:$0xff]
              %211 = vst [vmem:[%s167 + $0xf8] sm:$0xff] %v210
              %v212 = vld [vmem:[%s166 + $0x108] sm:$0xff]
              %213 = vst [vmem:[%s167 + $0x108] sm:$0xff] %v212
              %v214 = vld [vmem:[%s166 + $0x110] sm:$0xff]
              %215 = vst [vmem:[%s167 + $0x110] sm:$0xff] %v214
              %v216 = vld [vmem:[%s166 + $0x120] sm:$0xff]
              %217 = vst [vmem:[%s167 + $0x120] sm:$0xff] %v216
              %v218 = vld [vmem:[%s166 + $0x128] sm:$0xff]
              %219 = vst [vmem:[%s167 + $0x128] sm:$0xff] %v218
              %v220 = vld [vmem:[%s166 + $0x138] sm:$0xff]
              %221 = vst [vmem:[%s167 + $0x138] sm:$0xff] %v220
              %v222 = vld [vmem:[%s166 + $0x140] sm:$0xff]
              %223 = vst [vmem:[%s167 + $0x140] sm:$0xff] %v222
              %v224 = vld [vmem:[%s166 + $0x150] sm:$0xff]
              %225 = vst [vmem:[%s167 + $0x150] sm:$0xff] %v224
              %v226 = vld [vmem:[%s166 + $0x158] sm:$0xff]
              %227 = vst [vmem:[%s167 + $0x158] sm:$0xff] %v226
              %v228 = vld [vmem:[%s166 + $0x168] sm:$0xff]
              %229 = vst [vmem:[%s167 + $0x168] sm:$0xff] %v228
              %v230 = vld [vmem:[%s166 + $0x170] sm:$0xff]
              %231 = vst [vmem:[%s167 + $0x170] sm:$0xff] %v230
              %v232 = vld [vmem:[%s166 + $0x180] sm:$0xff]
              %233 = vst [vmem:[%s167 + $0x180] sm:$0xff] %v232
              %v234 = vld [vmem:[%s166 + $0x188] sm:$0xff]
              %235 = vst [vmem:[%s167 + $0x188] sm:$0xff] %v234
              %v236 = vld [vmem:[%s166 + $0x198] sm:$0xff]
              %237 = vst [vmem:[%s167 + $0x198] sm:$0xff] %v236
              %v238 = vld [vmem:[%s166 + $0x1a0] sm:$0xff]
              %239 = vst [vmem:[%s167 + $0x1a0] sm:$0xff] %v238
            $region41: #{tpu_custom_call.1} parent=35 // loop_footer
              %s165 = sadd.s32 1, %s161
            $region42: #{tpu_custom_call.1} parent=35 // loop_footer_branch
              %160 = sbr.rel target = $region38
            $region43: #{tpu_custom_call.1} parent=35 // loop_exit
              _
            %s241 = ssub.s32 4, 1
            loop: start=0, step=1, limit=1
            $region44: #{tpu_custom_call.1} parent=35 // loop_pre_header
              _
            $region45: #{tpu_custom_call.1} parent=35 // loop_header
              %s243 = sphi 0, %s247
              %p244 = scmp.ge.s32.totalorder %s243, 1
              %s248 = sphi %s158, %s158
              %s249 = sphi %s159, %s159
            $region46: #{tpu_custom_call.1} parent=35 // loop_header_branch
              %246 = sbr.rel (%p244) target = $region50
            $region47: #{tpu_custom_call.1} parent=35 // loop_body
              %v250 = vld [vmem:[%s248] sm:%s241]
              %251 = vst [vmem:[%s249] sm:%s241] %v250
              %v252 = vld [vmem:[%s248 + $0x18] sm:%s241]
              %253 = vst [vmem:[%s249 + $0x18] sm:%s241] %v252
              %v254 = vld [vmem:[%s248 + $0x30] sm:%s241]
              %255 = vst [vmem:[%s249 + $0x30] sm:%s241] %v254
              %v256 = vld [vmem:[%s248 + $0x48] sm:%s241]
              %257 = vst [vmem:[%s249 + $0x48] sm:%s241] %v256
              %v258 = vld [vmem:[%s248 + $0x60] sm:%s241]
              %259 = vst [vmem:[%s249 + $0x60] sm:%s241] %v258
              %v260 = vld [vmem:[%s248 + $0x78] sm:%s241]
              %261 = vst [vmem:[%s249 + $0x78] sm:%s241] %v260
              %v262 = vld [vmem:[%s248 + $0x90] sm:%s241]
              %263 = vst [vmem:[%s249 + $0x90] sm:%s241] %v262
              %v264 = vld [vmem:[%s248 + $0xa8] sm:%s241]
              %265 = vst [vmem:[%s249 + $0xa8] sm:%s241] %v264
              %v266 = vld [vmem:[%s248 + $0xc0] sm:%s241]
              %267 = vst [vmem:[%s249 + $0xc0] sm:%s241] %v266
              %v268 = vld [vmem:[%s248 + $0xd8] sm:%s241]
              %269 = vst [vmem:[%s249 + $0xd8] sm:%s241] %v268
              %v270 = vld [vmem:[%s248 + $0xf0] sm:%s241]
              %271 = vst [vmem:[%s249 + $0xf0] sm:%s241] %v270
              %v272 = vld [vmem:[%s248 + $0x108] sm:%s241]
              %273 = vst [vmem:[%s249 + $0x108] sm:%s241] %v272
              %v274 = vld [vmem:[%s248 + $0x120] sm:%s241]
              %275 = vst [vmem:[%s249 + $0x120] sm:%s241] %v274
              %v276 = vld [vmem:[%s248 + $0x138] sm:%s241]
              %277 = vst [vmem:[%s249 + $0x138] sm:%s241] %v276
              %v278 = vld [vmem:[%s248 + $0x150] sm:%s241]
              %279 = vst [vmem:[%s249 + $0x150] sm:%s241] %v278
              %v280 = vld [vmem:[%s248 + $0x168] sm:%s241]
              %281 = vst [vmem:[%s249 + $0x168] sm:%s241] %v280
              %v282 = vld [vmem:[%s248 + $0x180] sm:%s241]
              %283 = vst [vmem:[%s249 + $0x180] sm:%s241] %v282
              %v284 = vld [vmem:[%s248 + $0x198] sm:%s241]
              %285 = vst [vmem:[%s249 + $0x198] sm:%s241] %v284
            $region48: #{tpu_custom_call.1} parent=35 // loop_footer
              %s247 = sadd.s32 1, %s243
            $region49: #{tpu_custom_call.1} parent=35 // loop_footer_branch
              %242 = sbr.rel target = $region45
            $region50: #{tpu_custom_call.1} parent=35 // loop_exit
              _
          $region36: #{tpu_custom_call.1} parent=31 // pred_fallthru
            _
          // Predicated region
          $region51: #{tpu_custom_call.1} parent=31 // pred_check
            _
          $region52: #{tpu_custom_call.1} parent=31 // pred_check_branch
            %288 = sbr.rel (0) target = $region54
          $region53: #{tpu_custom_call.1} parent=31 // pred_region
            %289 = vsyncadd [#allocation3], 5184
          $region54: #{tpu_custom_call.1} parent=31 // pred_fallthru
            _
        $region32: #{tpu_custom_call.1} parent=27 // pred_fallthru
          _
        %s290 = smul.u32 %s149, 432
        %s291 = scalar_lea.vmem [#allocation2], %s290
        %s292 = scalar_lea.sflag [#allocation3], %s149
        %s293 = smul.u32 18, 18
        %s294 = smul.u32 %s293, 1
        %s295 = sshll.u32 %s294, 4
        %296 = dma.done %s292, %s295
        %s297 = sadd.s32 %s22, 1
        %p298 = scmp.lt.s32.totalorder %s297, 1
        // Predicated region
        $region55: #{tpu_custom_call.1} parent=27 // pred_check
          %p299 = pneg %p298
        $region56: #{tpu_custom_call.1} parent=27 // pred_check_branch
          %301 = sbr.rel (%p299) target = $region58
        $region57: #{tpu_custom_call.1} parent=27 // pred_region
          %s302 = ssub.s32 1, %s149
          %s303 = smul.u32 %s297, 16
          %s304 = smul.u32 %s303, 24
          %s305 = smul.u32 %s21, 432
          %s306 = sadd.s32 %s304, %s305
          %s307 = scalar_lea.vmem %s0, %s306
          %s308 = smul.u32 %s302, 432
          %s309 = scalar_lea.vmem [#allocation2], %s308
          %s310 = scalar_lea.sflag [#allocation3], %s302
          // Predicated region
          $region59: #{tpu_custom_call.1} parent=57 // pred_check
            _
          $region60: #{tpu_custom_call.1} parent=57 // pred_check_branch
            %312 = sbr.rel (0) target = $region62
          $region61: #{tpu_custom_call.1} parent=57 // pred_region
            %s313 = scalar_lea.vmem %s307, 16
            %s314 = scalar_lea.vmem %s309, 16 [#allocation2]
            loop: start=0, step=1, limit=1
            $region63: #{tpu_custom_call.1} parent=61 // loop_pre_header
              _
            $region64: #{tpu_custom_call.1} parent=61 // loop_header
              %s316 = sphi 0, %s320
              %p317 = scmp.ge.s32.totalorder %s316, 1
              %s321 = sphi %s307, %s307
              %s322 = sphi %s309, %s309
            $region65: #{tpu_custom_call.1} parent=61 // loop_header_branch
              %319 = sbr.rel (%p317) target = $region69
            $region66: #{tpu_custom_call.1} parent=61 // loop_body
              %v323 = vld [vmem:[%s321] sm:$0xff]
              %324 = vst [vmem:[%s322] sm:$0xff] %v323
              %v325 = vld [vmem:[%s321 + $0x8] sm:$0xff]
              %326 = vst [vmem:[%s322 + $0x8] sm:$0xff] %v325
              %v327 = vld [vmem:[%s321 + $0x18] sm:$0xff]
              %328 = vst [vmem:[%s322 + $0x18] sm:$0xff] %v327
              %v329 = vld [vmem:[%s321 + $0x20] sm:$0xff]
              %330 = vst [vmem:[%s322 + $0x20] sm:$0xff] %v329
              %v331 = vld [vmem:[%s321 + $0x30] sm:$0xff]
              %332 = vst [vmem:[%s322 + $0x30] sm:$0xff] %v331
              %v333 = vld [vmem:[%s321 + $0x38] sm:$0xff]
              %334 = vst [vmem:[%s322 + $0x38] sm:$0xff] %v333
              %v335 = vld [vmem:[%s321 + $0x48] sm:$0xff]
              %336 = vst [vmem:[%s322 + $0x48] sm:$0xff] %v335
              %v337 = vld [vmem:[%s321 + $0x50] sm:$0xff]
              %338 = vst [vmem:[%s322 + $0x50] sm:$0xff] %v337
              %v339 = vld [vmem:[%s321 + $0x60] sm:$0xff]
              %340 = vst [vmem:[%s322 + $0x60] sm:$0xff] %v339
              %v341 = vld [vmem:[%s321 + $0x68] sm:$0xff]
              %342 = vst [vmem:[%s322 + $0x68] sm:$0xff] %v341
              %v343 = vld [vmem:[%s321 + $0x78] sm:$0xff]
              %344 = vst [vmem:[%s322 + $0x78] sm:$0xff] %v343
              %v345 = vld [vmem:[%s321 + $0x80] sm:$0xff]
              %346 = vst [vmem:[%s322 + $0x80] sm:$0xff] %v345
              %v347 = vld [vmem:[%s321 + $0x90] sm:$0xff]
              %348 = vst [vmem:[%s322 + $0x90] sm:$0xff] %v347
              %v349 = vld [vmem:[%s321 + $0x98] sm:$0xff]
              %350 = vst [vmem:[%s322 + $0x98] sm:$0xff] %v349
              %v351 = vld [vmem:[%s321 + $0xa8] sm:$0xff]
              %352 = vst [vmem:[%s322 + $0xa8] sm:$0xff] %v351
              %v353 = vld [vmem:[%s321 + $0xb0] sm:$0xff]
              %354 = vst [vmem:[%s322 + $0xb0] sm:$0xff] %v353
              %v355 = vld [vmem:[%s321 + $0xc0] sm:$0xff]
              %356 = vst [vmem:[%s322 + $0xc0] sm:$0xff] %v355
              %v357 = vld [vmem:[%s321 + $0xc8] sm:$0xff]
              %358 = vst [vmem:[%s322 + $0xc8] sm:$0xff] %v357
              %v359 = vld [vmem:[%s321 + $0xd8] sm:$0xff]
              %360 = vst [vmem:[%s322 + $0xd8] sm:$0xff] %v359
              %v361 = vld [vmem:[%s321 + $0xe0] sm:$0xff]
              %362 = vst [vmem:[%s322 + $0xe0] sm:$0xff] %v361
              %v363 = vld [vmem:[%s321 + $0xf0] sm:$0xff]
              %364 = vst [vmem:[%s322 + $0xf0] sm:$0xff] %v363
              %v365 = vld [vmem:[%s321 + $0xf8] sm:$0xff]
              %366 = vst [vmem:[%s322 + $0xf8] sm:$0xff] %v365
              %v367 = vld [vmem:[%s321 + $0x108] sm:$0xff]
              %368 = vst [vmem:[%s322 + $0x108] sm:$0xff] %v367
              %v369 = vld [vmem:[%s321 + $0x110] sm:$0xff]
              %370 = vst [vmem:[%s322 + $0x110] sm:$0xff] %v369
              %v371 = vld [vmem:[%s321 + $0x120] sm:$0xff]
              %372 = vst [vmem:[%s322 + $0x120] sm:$0xff] %v371
              %v373 = vld [vmem:[%s321 + $0x128] sm:$0xff]
              %374 = vst [vmem:[%s322 + $0x128] sm:$0xff] %v373
              %v375 = vld [vmem:[%s321 + $0x138] sm:$0xff]
              %376 = vst [vmem:[%s322 + $0x138] sm:$0xff] %v375
              %v377 = vld [vmem:[%s321 + $0x140] sm:$0xff]
              %378 = vst [vmem:[%s322 + $0x140] sm:$0xff] %v377
              %v379 = vld [vmem:[%s321 + $0x150] sm:$0xff]
              %380 = vst [vmem:[%s322 + $0x150] sm:$0xff] %v379
              %v381 = vld [vmem:[%s321 + $0x158] sm:$0xff]
              %382 = vst [vmem:[%s322 + $0x158] sm:$0xff] %v381
              %v383 = vld [vmem:[%s321 + $0x168] sm:$0xff]
              %384 = vst [vmem:[%s322 + $0x168] sm:$0xff] %v383
              %v385 = vld [vmem:[%s321 + $0x170] sm:$0xff]
              %386 = vst [vmem:[%s322 + $0x170] sm:$0xff] %v385
              %v387 = vld [vmem:[%s321 + $0x180] sm:$0xff]
              %388 = vst [vmem:[%s322 + $0x180] sm:$0xff] %v387
              %v389 = vld [vmem:[%s321 + $0x188] sm:$0xff]
              %390 = vst [vmem:[%s322 + $0x188] sm:$0xff] %v389
              %v391 = vld [vmem:[%s321 + $0x198] sm:$0xff]
              %392 = vst [vmem:[%s322 + $0x198] sm:$0xff] %v391
              %v393 = vld [vmem:[%s321 + $0x1a0] sm:$0xff]
              %394 = vst [vmem:[%s322 + $0x1a0] sm:$0xff] %v393
            $region67: #{tpu_custom_call.1} parent=61 // loop_footer
              %s320 = sadd.s32 1, %s316
            $region68: #{tpu_custom_call.1} parent=61 // loop_footer_branch
              %315 = sbr.rel target = $region64
            $region69: #{tpu_custom_call.1} parent=61 // loop_exit
              _
            %s396 = ssub.s32 4, 1
            loop: start=0, step=1, limit=1
            $region70: #{tpu_custom_call.1} parent=61 // loop_pre_header
              _
            $region71: #{tpu_custom_call.1} parent=61 // loop_header
              %s398 = sphi 0, %s402
              %p399 = scmp.ge.s32.totalorder %s398, 1
              %s403 = sphi %s313, %s313
              %s404 = sphi %s314, %s314
            $region72: #{tpu_custom_call.1} parent=61 // loop_header_branch
              %401 = sbr.rel (%p399) target = $region76
            $region73: #{tpu_custom_call.1} parent=61 // loop_body
              %v405 = vld [vmem:[%s403] sm:%s396]
              %406 = vst [vmem:[%s404] sm:%s396] %v405
              %v407 = vld [vmem:[%s403 + $0x18] sm:%s396]
              %408 = vst [vmem:[%s404 + $0x18] sm:%s396] %v407
              %v409 = vld [vmem:[%s403 + $0x30] sm:%s396]
              %410 = vst [vmem:[%s404 + $0x30] sm:%s396] %v409
              %v411 = vld [vmem:[%s403 + $0x48] sm:%s396]
              %412 = vst [vmem:[%s404 + $0x48] sm:%s396] %v411
              %v413 = vld [vmem:[%s403 + $0x60] sm:%s396]
              %414 = vst [vmem:[%s404 + $0x60] sm:%s396] %v413
              %v415 = vld [vmem:[%s403 + $0x78] sm:%s396]
              %416 = vst [vmem:[%s404 + $0x78] sm:%s396] %v415
              %v417 = vld [vmem:[%s403 + $0x90] sm:%s396]
              %418 = vst [vmem:[%s404 + $0x90] sm:%s396] %v417
              %v419 = vld [vmem:[%s403 + $0xa8] sm:%s396]
              %420 = vst [vmem:[%s404 + $0xa8] sm:%s396] %v419
              %v421 = vld [vmem:[%s403 + $0xc0] sm:%s396]
              %422 = vst [vmem:[%s404 + $0xc0] sm:%s396] %v421
              %v423 = vld [vmem:[%s403 + $0xd8] sm:%s396]
              %424 = vst [vmem:[%s404 + $0xd8] sm:%s396] %v423
              %v425 = vld [vmem:[%s403 + $0xf0] sm:%s396]
              %426 = vst [vmem:[%s404 + $0xf0] sm:%s396] %v425
              %v427 = vld [vmem:[%s403 + $0x108] sm:%s396]
              %428 = vst [vmem:[%s404 + $0x108] sm:%s396] %v427
              %v429 = vld [vmem:[%s403 + $0x120] sm:%s396]
              %430 = vst [vmem:[%s404 + $0x120] sm:%s396] %v429
              %v431 = vld [vmem:[%s403 + $0x138] sm:%s396]
              %432 = vst [vmem:[%s404 + $0x138] sm:%s396] %v431
              %v433 = vld [vmem:[%s403 + $0x150] sm:%s396]
              %434 = vst [vmem:[%s404 + $0x150] sm:%s396] %v433
              %v435 = vld [vmem:[%s403 + $0x168] sm:%s396]
              %436 = vst [vmem:[%s404 + $0x168] sm:%s396] %v435
              %v437 = vld [vmem:[%s403 + $0x180] sm:%s396]
              %438 = vst [vmem:[%s404 + $0x180] sm:%s396] %v437
              %v439 = vld [vmem:[%s403 + $0x198] sm:%s396]
              %440 = vst [vmem:[%s404 + $0x198] sm:%s396] %v439
            $region74: #{tpu_custom_call.1} parent=61 // loop_footer
              %s402 = sadd.s32 1, %s398
            $region75: #{tpu_custom_call.1} parent=61 // loop_footer_branch
              %397 = sbr.rel target = $region71
            $region76: #{tpu_custom_call.1} parent=61 // loop_exit
              _
          $region62: #{tpu_custom_call.1} parent=57 // pred_fallthru
            _
          // Predicated region
          $region77: #{tpu_custom_call.1} parent=57 // pred_check
            _
          $region78: #{tpu_custom_call.1} parent=57 // pred_check_branch
            %443 = sbr.rel (0) target = $region80
          $region79: #{tpu_custom_call.1} parent=57 // pred_region
            %444 = vsyncadd %s310, 5184
          $region80: #{tpu_custom_call.1} parent=57 // pred_fallthru
            _
        $region58: #{tpu_custom_call.1} parent=27 // pred_fallthru
          _
        %v445 = vld [vmem:[%s291] sm:$0xff]
        %v446 = vld [vmem:[%s291 + $0x8] sm:$0xff]
        %v447 = vld [vmem:[%s291 + $0x18] sm:$0xff]
        %v448 = vld [vmem:[%s291 + $0x20] sm:$0xff]
        %v449 = vld [vmem:[%s291 + $0x30] sm:$0xff]
        %v450 = vld [vmem:[%s291 + $0x38] sm:$0xff]
        %v451 = vld [vmem:[%s291 + $0x48] sm:$0xff]
        %v452 = vld [vmem:[%s291 + $0x50] sm:$0xff]
        %v453 = vld [vmem:[%s291 + $0x60] sm:$0xff]
        %v454 = vld [vmem:[%s291 + $0x68] sm:$0xff]
        %v455 = vld [vmem:[%s291 + $0x78] sm:$0xff]
        %v456 = vld [vmem:[%s291 + $0x80] sm:$0xff]
        %v457 = vld [vmem:[%s291 + $0x90] sm:$0xff]
        %v458 = vld [vmem:[%s291 + $0x98] sm:$0xff]
        %v459 = vld [vmem:[%s291 + $0xa8] sm:$0xff]
        %v460 = vld [vmem:[%s291 + $0xb0] sm:$0xff]
        %v461 = vld [vmem:[%s291 + $0xc0] sm:$0xff]
        %v462 = vld [vmem:[%s291 + $0xc8] sm:$0xff]
        %v463 = vld [vmem:[%s291 + $0xd8] sm:$0xff]
        %v464 = vld [vmem:[%s291 + $0xe0] sm:$0xff]
        %v465 = vld [vmem:[%s291 + $0xf0] sm:$0xff]
        %v466 = vld [vmem:[%s291 + $0xf8] sm:$0xff]
        %v467 = vld [vmem:[%s291 + $0x108] sm:$0xff]
        %v468 = vld [vmem:[%s291 + $0x110] sm:$0xff]
        %v469 = vld [vmem:[%s291 + $0x120] sm:$0xff]
        %v470 = vld [vmem:[%s291 + $0x128] sm:$0xff]
        %v471 = vld [vmem:[%s291 + $0x138] sm:$0xff]
        %v472 = vld [vmem:[%s291 + $0x140] sm:$0xff]
        %v473 = vld [vmem:[%s291 + $0x150] sm:$0xff]
        %v474 = vld [vmem:[%s291 + $0x158] sm:$0xff]
        %v475 = vld [vmem:[%s291 + $0x168] sm:$0xff]
        %v476 = vld [vmem:[%s291 + $0x170] sm:$0xff]
        %v477 = vld [vmem:[%s291 + $0x180] sm:$0xff]
        %v478 = vld [vmem:[%s291 + $0x188] sm:$0xff]
        %v479 = vld [vmem:[%s291 + $0x198] sm:$0xff]
        %v480 = vld [vmem:[%s291 + $0x1a0] sm:$0xff]
        %v481 = vld [vmem:[%s291 + $0x1] sm:$0xff]
        %v482 = vld [vmem:[%s291 + $0x9] sm:$0xff]
        %v483 = vld [vmem:[%s291 + $0x19] sm:$0xff]
        %v484 = vld [vmem:[%s291 + $0x21] sm:$0xff]
        %v485 = vld [vmem:[%s291 + $0x31] sm:$0xff]
        %v486 = vld [vmem:[%s291 + $0x39] sm:$0xff]
        %v487 = vld [vmem:[%s291 + $0x49] sm:$0xff]
        %v488 = vld [vmem:[%s291 + $0x51] sm:$0xff]
        %v489 = vld [vmem:[%s291 + $0x61] sm:$0xff]
        %v490 = vld [vmem:[%s291 + $0x69] sm:$0xff]
        %v491 = vld [vmem:[%s291 + $0x79] sm:$0xff]
        %v492 = vld [vmem:[%s291 + $0x81] sm:$0xff]
        %v493 = vld [vmem:[%s291 + $0x91] sm:$0xff]
        %v494 = vld [vmem:[%s291 + $0x99] sm:$0xff]
        %v495 = vld [vmem:[%s291 + $0xa9] sm:$0xff]
        %v496 = vld [vmem:[%s291 + $0xb1] sm:$0xff]
        %v497 = vld [vmem:[%s291 + $0xc1] sm:$0xff]
        %v498 = vld [vmem:[%s291 + $0xc9] sm:$0xff]
        %v499 = vld [vmem:[%s291 + $0xd9] sm:$0xff]
        %v500 = vld [vmem:[%s291 + $0xe1] sm:$0xff]
        %v501 = vld [vmem:[%s291 + $0xf1] sm:$0xff]
        %v502 = vld [vmem:[%s291 + $0xf9] sm:$0xff]
        %v503 = vld [vmem:[%s291 + $0x109] sm:$0xff]
        %v504 = vld [vmem:[%s291 + $0x111] sm:$0xff]
        %v505 = vld [vmem:[%s291 + $0x121] sm:$0xff]
        %v506 = vld [vmem:[%s291 + $0x129] sm:$0xff]
        %v507 = vld [vmem:[%s291 + $0x139] sm:$0xff]
        %v508 = vld [vmem:[%s291 + $0x141] sm:$0xff]
        %v509 = vld [vmem:[%s291 + $0x151] sm:$0xff]
        %v510 = vld [vmem:[%s291 + $0x159] sm:$0xff]
        %v511 = vld [vmem:[%s291 + $0x169] sm:$0xff]
        %v512 = vld [vmem:[%s291 + $0x171] sm:$0xff]
        %v513 = vld [vmem:[%s291 + $0x181] sm:$0xff]
        %v514 = vld [vmem:[%s291 + $0x189] sm:$0xff]
        %v515 = vld [vmem:[%s291 + $0x199] sm:$0xff]
        %v516 = vld [vmem:[%s291 + $0x1a1] sm:$0xff]
        %v517 = vld [vmem:[%s291 + $0x2] sm:$0xff]
        %v518 = vld [vmem:[%s291 + $0xa] sm:$0xff]
        %v519 = vld [vmem:[%s291 + $0x1a] sm:$0xff]
        %v520 = vld [vmem:[%s291 + $0x22] sm:$0xff]
        %v521 = vld [vmem:[%s291 + $0x32] sm:$0xff]
        %v522 = vld [vmem:[%s291 + $0x3a] sm:$0xff]
        %v523 = vld [vmem:[%s291 + $0x4a] sm:$0xff]
        %v524 = vld [vmem:[%s291 + $0x52] sm:$0xff]
        %v525 = vld [vmem:[%s291 + $0x62] sm:$0xff]
        %v526 = vld [vmem:[%s291 + $0x6a] sm:$0xff]
        %v527 = vld [vmem:[%s291 + $0x7a] sm:$0xff]
        %v528 = vld [vmem:[%s291 + $0x82] sm:$0xff]
        %v529 = vld [vmem:[%s291 + $0x92] sm:$0xff]
        %v530 = vld [vmem:[%s291 + $0x9a] sm:$0xff]
        %v531 = vld [vmem:[%s291 + $0xaa] sm:$0xff]
        %v532 = vld [vmem:[%s291 + $0xb2] sm:$0xff]
        %v533 = vld [vmem:[%s291 + $0xc2] sm:$0xff]
        %v534 = vld [vmem:[%s291 + $0xca] sm:$0xff]
        %v535 = vld [vmem:[%s291 + $0xda] sm:$0xff]
        %v536 = vld [vmem:[%s291 + $0xe2] sm:$0xff]
        %v537 = vld [vmem:[%s291 + $0xf2] sm:$0xff]
        %v538 = vld [vmem:[%s291 + $0xfa] sm:$0xff]
        %v539 = vld [vmem:[%s291 + $0x10a] sm:$0xff]
        %v540 = vld [vmem:[%s291 + $0x112] sm:$0xff]
        %v541 = vld [vmem:[%s291 + $0x122] sm:$0xff]
        %v542 = vld [vmem:[%s291 + $0x12a] sm:$0xff]
        %v543 = vld [vmem:[%s291 + $0x13a] sm:$0xff]
        %v544 = vld [vmem:[%s291 + $0x142] sm:$0xff]
        %v545 = vld [vmem:[%s291 + $0x152] sm:$0xff]
        %v546 = vld [vmem:[%s291 + $0x15a] sm:$0xff]
        %v547 = vld [vmem:[%s291 + $0x16a] sm:$0xff]
        %v548 = vld [vmem:[%s291 + $0x172] sm:$0xff]
        %v549 = vld [vmem:[%s291 + $0x182] sm:$0xff]
        %v550 = vld [vmem:[%s291 + $0x18a] sm:$0xff]
        %v551 = vld [vmem:[%s291 + $0x19a] sm:$0xff]
        %v552 = vld [vmem:[%s291 + $0x1a2] sm:$0xff]
        %v553 = vld [vmem:[%s1] sm:$0xff]
        %v554 = vld [vmem:[%s1 + $0x8] sm:$0xff]
        %v555 = vld [vmem:[%s1 + $0x10] sm:$0xff]
        %v556 = vld [vmem:[%s1 + $0x18] sm:$0xff]
        %v557 = vld [vmem:[%s1 + $0x20] sm:$0xff]
        %v558 = vld [vmem:[%s1 + $0x28] sm:$0xff]
        %v559 = vld [vmem:[%s1 + $0x30] sm:$0xff]
        %v560 = vld [vmem:[%s1 + $0x38] sm:$0xff]
        %v561 = vld [vmem:[%s1 + $0x40] sm:$0xff]
        %v562 = vld [vmem:[%s1 + $0x48] sm:$0xff]
        %v563 = vld [vmem:[%s1 + $0x50] sm:$0xff]
        %v564 = vld [vmem:[%s1 + $0x58] sm:$0xff]
        %v565 = vld [vmem:[%s1 + $0x60] sm:$0xff]
        %v566 = vld [vmem:[%s1 + $0x68] sm:$0xff]
        %v567 = vld [vmem:[%s1 + $0x70] sm:$0xff]
        %v568 = vld [vmem:[%s1 + $0x78] sm:$0xff]
        %v569 = vld [vmem:[%s1 + $0x80] sm:$0xff]
        %v570 = vld [vmem:[%s1 + $0x88] sm:$0xff]
        %v571 = vld [vmem:[%s1 + $0x90] sm:$0xff]
        %v572 = vld [vmem:[%s1 + $0x98] sm:$0xff]
        %v573 = vld [vmem:[%s1 + $0xa0] sm:$0xff]
        %v574 = vld [vmem:[%s1 + $0xa8] sm:$0xff]
        %v575 = vld [vmem:[%s1 + $0xb0] sm:$0xff]
        %v576 = vld [vmem:[%s1 + $0xb8] sm:$0xff]
        %v577 = vld [vmem:[%s1 + $0xc0] sm:$0xff]
        %v578 = vld [vmem:[%s1 + $0xc8] sm:$0xff]
        %v579 = vld [vmem:[%s1 + $0xd0] sm:$0xff]
        %v580 = vld [vmem:[%s1 + $0xd8] sm:$0xff]
        %v581 = vld [vmem:[%s1 + $0xe0] sm:$0xff]
        %v582 = vld [vmem:[%s1 + $0xe8] sm:$0xff]
        %v583 = vld [vmem:[%s1 + $0xf0] sm:$0xff]
        %v584 = vld [vmem:[%s1 + $0xf8] sm:$0xff]
        %v585 = vld [vmem:[%s1 + $0x100] sm:$0xff]
        %v586 = vld [vmem:[%s1 + $0x108] sm:$0xff]
        %v587 = vld [vmem:[%s1 + $0x110] sm:$0xff]
        %v588 = vld [vmem:[%s1 + $0x118] sm:$0xff]
        %v589 = vld [vmem:[%s1 + $0x120] sm:$0xff]
        %v590 = vld [vmem:[%s1 + $0x128] sm:$0xff]
        %v591 = vld [vmem:[%s1 + $0x130] sm:$0xff]
        %v592 = vld [vmem:[%s1 + $0x138] sm:$0xff]
        %v593 = vld [vmem:[%s1 + $0x140] sm:$0xff]
        %v594 = vld [vmem:[%s1 + $0x148] sm:$0xff]
        %v595 = vld [vmem:[%s1 + $0x150] sm:$0xff]
        %v596 = vld [vmem:[%s1 + $0x158] sm:$0xff]
        %v597 = vld [vmem:[%s1 + $0x160] sm:$0xff]
        %v598 = vld [vmem:[%s1 + $0x168] sm:$0xff]
        %v599 = vld [vmem:[%s1 + $0x170] sm:$0xff]
        %v600 = vld [vmem:[%s1 + $0x178] sm:$0xff]
        %s601 = scalar_lea.vmem %s1, 384
        %v602 = vld [vmem:[%s601] sm:$0xff]
        %v603 = vld [vmem:[%s601 + $0x8] sm:$0xff]
        %v604 = vld [vmem:[%s601 + $0x10] sm:$0xff]
        %v605 = vld [vmem:[%s601 + $0x18] sm:$0xff]
        %v606 = vld [vmem:[%s601 + $0x20] sm:$0xff]
        %v607 = vld [vmem:[%s601 + $0x28] sm:$0xff]
        %v608 = vld [vmem:[%s601 + $0x30] sm:$0xff]
        %v609 = vld [vmem:[%s601 + $0x38] sm:$0xff]
        %v610 = vld [vmem:[%s601 + $0x40] sm:$0xff]
        %v611 = vld [vmem:[%s601 + $0x48] sm:$0xff]
        %v612 = vld [vmem:[%s601 + $0x50] sm:$0xff]
        %v613 = vld [vmem:[%s601 + $0x58] sm:$0xff]
        %v614 = vld [vmem:[%s601 + $0x60] sm:$0xff]
        %v615 = vld [vmem:[%s601 + $0x68] sm:$0xff]
        %v616 = vld [vmem:[%s601 + $0x70] sm:$0xff]
        %v617 = vld [vmem:[%s601 + $0x78] sm:$0xff]
        %v618 = vld [vmem:[%s601 + $0x80] sm:$0xff]
        %v619 = vld [vmem:[%s601 + $0x88] sm:$0xff]
        %v620 = vld [vmem:[%s601 + $0x90] sm:$0xff]
        %v621 = vld [vmem:[%s601 + $0x98] sm:$0xff]
        %v622 = vld [vmem:[%s601 + $0xa0] sm:$0xff]
        %v623 = vld [vmem:[%s601 + $0xa8] sm:$0xff]
        %v624 = vld [vmem:[%s601 + $0xb0] sm:$0xff]
        %v625 = vld [vmem:[%s601 + $0xb8] sm:$0xff]
        %v626 = vld [vmem:[%s601 + $0xc0] sm:$0xff]
        %v627 = vld [vmem:[%s601 + $0xc8] sm:$0xff]
        %v628 = vld [vmem:[%s601 + $0xd0] sm:$0xff]
        %v629 = vld [vmem:[%s601 + $0xd8] sm:$0xff]
        %v630 = vld [vmem:[%s601 + $0xe0] sm:$0xff]
        %v631 = vld [vmem:[%s601 + $0xe8] sm:$0xff]
        %v632 = vld [vmem:[%s601 + $0xf0] sm:$0xff]
        %v633 = vld [vmem:[%s601 + $0xf8] sm:$0xff]
        %v634 = vld [vmem:[%s601 + $0x100] sm:$0xff]
        %v635 = vld [vmem:[%s601 + $0x108] sm:$0xff]
        %v636 = vld [vmem:[%s601 + $0x110] sm:$0xff]
        %v637 = vld [vmem:[%s601 + $0x118] sm:$0xff]
        %v638 = vld [vmem:[%s601 + $0x120] sm:$0xff]
        %v639 = vld [vmem:[%s601 + $0x128] sm:$0xff]
        %v640 = vld [vmem:[%s601 + $0x130] sm:$0xff]
        %v641 = vld [vmem:[%s601 + $0x138] sm:$0xff]
        %v642 = vld [vmem:[%s601 + $0x140] sm:$0xff]
        %v643 = vld [vmem:[%s601 + $0x148] sm:$0xff]
        %v644 = vld [vmem:[%s601 + $0x150] sm:$0xff]
        %v645 = vld [vmem:[%s601 + $0x158] sm:$0xff]
        %v646 = vld [vmem:[%s601 + $0x160] sm:$0xff]
        %v647 = vld [vmem:[%s601 + $0x168] sm:$0xff]
        %v648 = vld [vmem:[%s601 + $0x170] sm:$0xff]
        %v649 = vld [vmem:[%s601 + $0x178] sm:$0xff]
        %650 = vmatpush.msra.mxu0 %v617
        %651 = vmatpush.msra.mxu0 %v616
        %652 = vmatpush.msra.mxu0 %v615
        %653 = vmatpush.msra.mxu0 %v614
        %654 = vmatpush.msra.mxu0 %v613
        %655 = vmatpush.msra.mxu0 %v612
        %656 = vmatpush.msra.mxu0 %v611
        %657 = vmatpush.msra.mxu0 %v610
        %658 = vmatpush.msra.mxu0 %v609
        %659 = vmatpush.msra.mxu0 %v608
        %660 = vmatpush.msra.mxu0 %v607
        %661 = vmatpush.msra.mxu0 %v606
        %662 = vmatpush.msra.mxu0 %v605
        %663 = vmatpush.msra.mxu0 %v604
        %664 = vmatpush.msra.mxu0 %v603
        %665 = vmatpush.msra.mxu0 %v602
        %666 = vmatmul.f32.gmra.mxu0 %v447
        %v667 = vpop.f32.mrf.mxu0
        %v668 = vadd.f32 0.0, %v667
        %669 = vmatmul.f32.gmra.mxu0 %v448
        %v670 = vpop.f32.mrf.mxu0
        %v671 = vadd.f32 0.0, %v670
        %672 = vmatmul.f32.gmra.mxu0 %v449
        %v673 = vpop.f32.mrf.mxu0
        %v674 = vadd.f32 0.0, %v673
        %675 = vmatmul.f32.gmra.mxu0 %v450
        %v676 = vpop.f32.mrf.mxu0
        %v677 = vadd.f32 0.0, %v676
        %678 = vmatmul.f32.gmra.mxu0 %v451
        %v679 = vpop.f32.mrf.mxu0
        %v680 = vadd.f32 0.0, %v679
        %681 = vmatmul.f32.gmra.mxu0 %v452
        %v682 = vpop.f32.mrf.mxu0
        %v683 = vadd.f32 0.0, %v682
        %684 = vmatmul.f32.gmra.mxu0 %v453
        %v685 = vpop.f32.mrf.mxu0
        %v686 = vadd.f32 0.0, %v685
        %687 = vmatmul.f32.gmra.mxu0 %v454
        %v688 = vpop.f32.mrf.mxu0
        %v689 = vadd.f32 0.0, %v688
        %690 = vmatmul.f32.gmra.mxu0 %v455
        %v691 = vpop.f32.mrf.mxu0
        %v692 = vadd.f32 0.0, %v691
        %693 = vmatmul.f32.gmra.mxu0 %v456
        %v694 = vpop.f32.mrf.mxu0
        %v695 = vadd.f32 0.0, %v694
        %696 = vmatmul.f32.gmra.mxu0 %v457
        %v697 = vpop.f32.mrf.mxu0
        %v698 = vadd.f32 0.0, %v697
        %699 = vmatmul.f32.gmra.mxu0 %v458
        %v700 = vpop.f32.mrf.mxu0
        %v701 = vadd.f32 0.0, %v700
        %702 = vmatmul.f32.gmra.mxu0 %v459
        %v703 = vpop.f32.mrf.mxu0
        %v704 = vadd.f32 0.0, %v703
        %705 = vmatmul.f32.gmra.mxu0 %v460
        %v706 = vpop.f32.mrf.mxu0
        %v707 = vadd.f32 0.0, %v706
        %708 = vmatmul.f32.gmra.mxu0 %v461
        %v709 = vpop.f32.mrf.mxu0
        %v710 = vadd.f32 0.0, %v709
        %711 = vmatmul.f32.gmra.mxu0 %v462
        %v712 = vpop.f32.mrf.mxu0
        %v713 = vadd.f32 0.0, %v712
        %714 = vmatmul.f32.gmra.mxu0 %v463
        %v715 = vpop.f32.mrf.mxu0
        %v716 = vadd.f32 0.0, %v715
        %717 = vmatmul.f32.gmra.mxu0 %v464
        %v718 = vpop.f32.mrf.mxu0
        %v719 = vadd.f32 0.0, %v718
        %720 = vmatmul.f32.gmra.mxu0 %v465
        %v721 = vpop.f32.mrf.mxu0
        %v722 = vadd.f32 0.0, %v721
        %723 = vmatmul.f32.gmra.mxu0 %v466
        %v724 = vpop.f32.mrf.mxu0
        %v725 = vadd.f32 0.0, %v724
        %726 = vmatmul.f32.gmra.mxu0 %v467
        %v727 = vpop.f32.mrf.mxu0
        %v728 = vadd.f32 0.0, %v727
        %729 = vmatmul.f32.gmra.mxu0 %v468
        %v730 = vpop.f32.mrf.mxu0
        %v731 = vadd.f32 0.0, %v730
        %732 = vmatmul.f32.gmra.mxu0 %v469
        %v733 = vpop.f32.mrf.mxu0
        %v734 = vadd.f32 0.0, %v733
        %735 = vmatmul.f32.gmra.mxu0 %v470
        %v736 = vpop.f32.mrf.mxu0
        %v737 = vadd.f32 0.0, %v736
        %738 = vmatmul.f32.gmra.mxu0 %v471
        %v739 = vpop.f32.mrf.mxu0
        %v740 = vadd.f32 0.0, %v739
        %741 = vmatmul.f32.gmra.mxu0 %v472
        %v742 = vpop.f32.mrf.mxu0
        %v743 = vadd.f32 0.0, %v742
        %744 = vmatmul.f32.gmra.mxu0 %v473
        %v745 = vpop.f32.mrf.mxu0
        %v746 = vadd.f32 0.0, %v745
        %747 = vmatmul.f32.gmra.mxu0 %v474
        %v748 = vpop.f32.mrf.mxu0
        %v749 = vadd.f32 0.0, %v748
        %750 = vmatmul.f32.gmra.mxu0 %v475
        %v751 = vpop.f32.mrf.mxu0
        %v752 = vadd.f32 0.0, %v751
        %753 = vmatmul.f32.gmra.mxu0 %v476
        %v754 = vpop.f32.mrf.mxu0
        %v755 = vadd.f32 0.0, %v754
        %756 = vmatmul.f32.gmra.mxu0 %v477
        %v757 = vpop.f32.mrf.mxu0
        %v758 = vadd.f32 0.0, %v757
        %759 = vmatmul.f32.gmra.mxu0 %v478
        %v760 = vpop.f32.mrf.mxu0
        %v761 = vadd.f32 0.0, %v760
        %762 = vdwg.mxu0
        %763 = vmatpush.msra.mxu0 %v633
        %764 = vmatpush.msra.mxu0 %v632
        %765 = vmatpush.msra.mxu0 %v631
        %766 = vmatpush.msra.mxu0 %v630
        %767 = vmatpush.msra.mxu0 %v629
        %768 = vmatpush.msra.mxu0 %v628
        %769 = vmatpush.msra.mxu0 %v627
        %770 = vmatpush.msra.mxu0 %v626
        %771 = vmatpush.msra.mxu0 %v625
        %772 = vmatpush.msra.mxu0 %v624
        %773 = vmatpush.msra.mxu0 %v623
        %774 = vmatpush.msra.mxu0 %v622
        %775 = vmatpush.msra.mxu0 %v621
        %776 = vmatpush.msra.mxu0 %v620
        %777 = vmatpush.msra.mxu0 %v619
        %778 = vmatpush.msra.mxu0 %v618
        %779 = vmatmul.f32.gmra.mxu0 %v483
        %v780 = vpop.f32.mrf.mxu0
        %v781 = vadd.f32 %v668, %v780
        %782 = vmatmul.f32.gmra.mxu0 %v484
        %v783 = vpop.f32.mrf.mxu0
        %v784 = vadd.f32 %v671, %v783
        %785 = vmatmul.f32.gmra.mxu0 %v485
        %v786 = vpop.f32.mrf.mxu0
        %v787 = vadd.f32 %v674, %v786
        %788 = vmatmul.f32.gmra.mxu0 %v486
        %v789 = vpop.f32.mrf.mxu0
        %v790 = vadd.f32 %v677, %v789
        %791 = vmatmul.f32.gmra.mxu0 %v487
        %v792 = vpop.f32.mrf.mxu0
        %v793 = vadd.f32 %v680, %v792
        %794 = vmatmul.f32.gmra.mxu0 %v488
        %v795 = vpop.f32.mrf.mxu0
        %v796 = vadd.f32 %v683, %v795
        %797 = vmatmul.f32.gmra.mxu0 %v489
        %v798 = vpop.f32.mrf.mxu0
        %v799 = vadd.f32 %v686, %v798
        %800 = vmatmul.f32.gmra.mxu0 %v490
        %v801 = vpop.f32.mrf.mxu0
        %v802 = vadd.f32 %v689, %v801
        %803 = vmatmul.f32.gmra.mxu0 %v491
        %v804 = vpop.f32.mrf.mxu0
        %v805 = vadd.f32 %v692, %v804
        %806 = vmatmul.f32.gmra.mxu0 %v492
        %v807 = vpop.f32.mrf.mxu0
        %v808 = vadd.f32 %v695, %v807
        %809 = vmatmul.f32.gmra.mxu0 %v493
        %v810 = vpop.f32.mrf.mxu0
        %v811 = vadd.f32 %v698, %v810
        %812 = vmatmul.f32.gmra.mxu0 %v494
        %v813 = vpop.f32.mrf.mxu0
        %v814 = vadd.f32 %v701, %v813
        %815 = vmatmul.f32.gmra.mxu0 %v495
        %v816 = vpop.f32.mrf.mxu0
        %v817 = vadd.f32 %v704, %v816
        %818 = vmatmul.f32.gmra.mxu0 %v496
        %v819 = vpop.f32.mrf.mxu0
        %v820 = vadd.f32 %v707, %v819
        %821 = vmatmul.f32.gmra.mxu0 %v497
        %v822 = vpop.f32.mrf.mxu0
        %v823 = vadd.f32 %v710, %v822
        %824 = vmatmul.f32.gmra.mxu0 %v498
        %v825 = vpop.f32.mrf.mxu0
        %v826 = vadd.f32 %v713, %v825
        %827 = vmatmul.f32.gmra.mxu0 %v499
        %v828 = vpop.f32.mrf.mxu0
        %v829 = vadd.f32 %v716, %v828
        %830 = vmatmul.f32.gmra.mxu0 %v500
        %v831 = vpop.f32.mrf.mxu0
        %v832 = vadd.f32 %v719, %v831
        %833 = vmatmul.f32.gmra.mxu0 %v501
        %v834 = vpop.f32.mrf.mxu0
        %v835 = vadd.f32 %v722, %v834
        %836 = vmatmul.f32.gmra.mxu0 %v502
        %v837 = vpop.f32.mrf.mxu0
        %v838 = vadd.f32 %v725, %v837
        %839 = vmatmul.f32.gmra.mxu0 %v503
        %v840 = vpop.f32.mrf.mxu0
        %v841 = vadd.f32 %v728, %v840
        %842 = vmatmul.f32.gmra.mxu0 %v504
        %v843 = vpop.f32.mrf.mxu0
        %v844 = vadd.f32 %v731, %v843
        %845 = vmatmul.f32.gmra.mxu0 %v505
        %v846 = vpop.f32.mrf.mxu0
        %v847 = vadd.f32 %v734, %v846
        %848 = vmatmul.f32.gmra.mxu0 %v506
        %v849 = vpop.f32.mrf.mxu0
        %v850 = vadd.f32 %v737, %v849
        %851 = vmatmul.f32.gmra.mxu0 %v507
        %v852 = vpop.f32.mrf.mxu0
        %v853 = vadd.f32 %v740, %v852
        %854 = vmatmul.f32.gmra.mxu0 %v508
        %v855 = vpop.f32.mrf.mxu0
        %v856 = vadd.f32 %v743, %v855
        %857 = vmatmul.f32.gmra.mxu0 %v509
        %v858 = vpop.f32.mrf.mxu0
        %v859 = vadd.f32 %v746, %v858
        %860 = vmatmul.f32.gmra.mxu0 %v510
        %v861 = vpop.f32.mrf.mxu0
        %v862 = vadd.f32 %v749, %v861
        %863 = vmatmul.f32.gmra.mxu0 %v511
        %v864 = vpop.f32.mrf.mxu0
        %v865 = vadd.f32 %v752, %v864
        %866 = vmatmul.f32.gmra.mxu0 %v512
        %v867 = vpop.f32.mrf.mxu0
        %v868 = vadd.f32 %v755, %v867
        %869 = vmatmul.f32.gmra.mxu0 %v513
        %v870 = vpop.f32.mrf.mxu0
        %v871 = vadd.f32 %v758, %v870
        %872 = vmatmul.f32.gmra.mxu0 %v514
        %v873 = vpop.f32.mrf.mxu0
        %v874 = vadd.f32 %v761, %v873
        %875 = vdwg.mxu0
        %876 = vmatpush.msra.mxu0 %v649
        %877 = vmatpush.msra.mxu0 %v648
        %878 = vmatpush.msra.mxu0 %v647
        %879 = vmatpush.msra.mxu0 %v646
        %880 = vmatpush.msra.mxu0 %v645
        %881 = vmatpush.msra.mxu0 %v644
        %882 = vmatpush.msra.mxu0 %v643
        %883 = vmatpush.msra.mxu0 %v642
        %884 = vmatpush.msra.mxu0 %v641
        %885 = vmatpush.msra.mxu0 %v640
        %886 = vmatpush.msra.mxu0 %v639
        %887 = vmatpush.msra.mxu0 %v638
        %888 = vmatpush.msra.mxu0 %v637
        %889 = vmatpush.msra.mxu0 %v636
        %890 = vmatpush.msra.mxu0 %v635
        %891 = vmatpush.msra.mxu0 %v634
        %892 = vmatmul.f32.gmra.mxu0 %v519
        %v893 = vpop.f32.mrf.mxu0
        %v894 = vadd.f32 %v781, %v893
        %895 = vmatmul.f32.gmra.mxu0 %v520
        %v896 = vpop.f32.mrf.mxu0
        %v897 = vadd.f32 %v784, %v896
        %898 = vmatmul.f32.gmra.mxu0 %v521
        %v899 = vpop.f32.mrf.mxu0
        %v900 = vadd.f32 %v787, %v899
        %901 = vmatmul.f32.gmra.mxu0 %v522
        %v902 = vpop.f32.mrf.mxu0
        %v903 = vadd.f32 %v790, %v902
        %904 = vmatmul.f32.gmra.mxu0 %v523
        %v905 = vpop.f32.mrf.mxu0
        %v906 = vadd.f32 %v793, %v905
        %907 = vmatmul.f32.gmra.mxu0 %v524
        %v908 = vpop.f32.mrf.mxu0
        %v909 = vadd.f32 %v796, %v908
        %910 = vmatmul.f32.gmra.mxu0 %v525
        %v911 = vpop.f32.mrf.mxu0
        %v912 = vadd.f32 %v799, %v911
        %913 = vmatmul.f32.gmra.mxu0 %v526
        %v914 = vpop.f32.mrf.mxu0
        %v915 = vadd.f32 %v802, %v914
        %916 = vmatmul.f32.gmra.mxu0 %v527
        %v917 = vpop.f32.mrf.mxu0
        %v918 = vadd.f32 %v805, %v917
        %919 = vmatmul.f32.gmra.mxu0 %v528
        %v920 = vpop.f32.mrf.mxu0
        %v921 = vadd.f32 %v808, %v920
        %922 = vmatmul.f32.gmra.mxu0 %v529
        %v923 = vpop.f32.mrf.mxu0
        %v924 = vadd.f32 %v811, %v923
        %925 = vmatmul.f32.gmra.mxu0 %v530
        %v926 = vpop.f32.mrf.mxu0
        %v927 = vadd.f32 %v814, %v926
        %928 = vmatmul.f32.gmra.mxu0 %v531
        %v929 = vpop.f32.mrf.mxu0
        %v930 = vadd.f32 %v817, %v929
        %931 = vmatmul.f32.gmra.mxu0 %v532
        %v932 = vpop.f32.mrf.mxu0
        %v933 = vadd.f32 %v820, %v932
        %934 = vmatmul.f32.gmra.mxu0 %v533
        %v935 = vpop.f32.mrf.mxu0
        %v936 = vadd.f32 %v823, %v935
        %937 = vmatmul.f32.gmra.mxu0 %v534
        %v938 = vpop.f32.mrf.mxu0
        %v939 = vadd.f32 %v826, %v938
        %940 = vmatmul.f32.gmra.mxu0 %v535
        %v941 = vpop.f32.mrf.mxu0
        %v942 = vadd.f32 %v829, %v941
        %943 = vmatmul.f32.gmra.mxu0 %v536
        %v944 = vpop.f32.mrf.mxu0
        %v945 = vadd.f32 %v832, %v944
        %946 = vmatmul.f32.gmra.mxu0 %v537
        %v947 = vpop.f32.mrf.mxu0
        %v948 = vadd.f32 %v835, %v947
        %949 = vmatmul.f32.gmra.mxu0 %v538
        %v950 = vpop.f32.mrf.mxu0
        %v951 = vadd.f32 %v838, %v950
        %952 = vmatmul.f32.gmra.mxu0 %v539
        %v953 = vpop.f32.mrf.mxu0
        %v954 = vadd.f32 %v841, %v953
        %955 = vmatmul.f32.gmra.mxu0 %v540
        %v956 = vpop.f32.mrf.mxu0
        %v957 = vadd.f32 %v844, %v956
        %958 = vmatmul.f32.gmra.mxu0 %v541
        %v959 = vpop.f32.mrf.mxu0
        %v960 = vadd.f32 %v847, %v959
        %961 = vmatmul.f32.gmra.mxu0 %v542
        %v962 = vpop.f32.mrf.mxu0
        %v963 = vadd.f32 %v850, %v962
        %964 = vmatmul.f32.gmra.mxu0 %v543
        %v965 = vpop.f32.mrf.mxu0
        %v966 = vadd.f32 %v853, %v965
        %967 = vmatmul.f32.gmra.mxu0 %v544
        %v968 = vpop.f32.mrf.mxu0
        %v969 = vadd.f32 %v856, %v968
        %970 = vmatmul.f32.gmra.mxu0 %v545
        %v971 = vpop.f32.mrf.mxu0
        %v972 = vadd.f32 %v859, %v971
        %973 = vmatmul.f32.gmra.mxu0 %v546
        %v974 = vpop.f32.mrf.mxu0
        %v975 = vadd.f32 %v862, %v974
        %976 = vmatmul.f32.gmra.mxu0 %v547
        %v977 = vpop.f32.mrf.mxu0
        %v978 = vadd.f32 %v865, %v977
        %979 = vmatmul.f32.gmra.mxu0 %v548
        %v980 = vpop.f32.mrf.mxu0
        %v981 = vadd.f32 %v868, %v980
        %982 = vmatmul.f32.gmra.mxu0 %v549
        %v983 = vpop.f32.mrf.mxu0
        %v984 = vadd.f32 %v871, %v983
        %985 = vmatmul.f32.gmra.mxu0 %v550
        %v986 = vpop.f32.mrf.mxu0
        %v987 = vadd.f32 %v874, %v986
        %988 = vdwg.mxu0
        %989 = vmatpush.msra.mxu0 %v568
        %990 = vmatpush.msra.mxu0 %v567
        %991 = vmatpush.msra.mxu0 %v566
        %992 = vmatpush.msra.mxu0 %v565
        %993 = vmatpush.msra.mxu0 %v564
        %994 = vmatpush.msra.mxu0 %v563
        %995 = vmatpush.msra.mxu0 %v562
        %996 = vmatpush.msra.mxu0 %v561
        %997 = vmatpush.msra.mxu0 %v560
        %998 = vmatpush.msra.mxu0 %v559
        %999 = vmatpush.msra.mxu0 %v558
        %1000 = vmatpush.msra.mxu0 %v557
        %1001 = vmatpush.msra.mxu0 %v556
        %1002 = vmatpush.msra.mxu0 %v555
        %1003 = vmatpush.msra.mxu0 %v554
        %1004 = vmatpush.msra.mxu0 %v553
        %1005 = vmatmul.f32.gmra.mxu0 %v445
        %v1006 = vpop.f32.mrf.mxu0
        %v1007 = vadd.f32 %v894, %v1006
        %1008 = vmatmul.f32.gmra.mxu0 %v446
        %v1009 = vpop.f32.mrf.mxu0
        %v1010 = vadd.f32 %v897, %v1009
        %1011 = vmatmul.f32.gmra.mxu0 %v447
        %v1012 = vpop.f32.mrf.mxu0
        %v1013 = vadd.f32 %v900, %v1012
        %1014 = vmatmul.f32.gmra.mxu0 %v448
        %v1015 = vpop.f32.mrf.mxu0
        %v1016 = vadd.f32 %v903, %v1015
        %1017 = vmatmul.f32.gmra.mxu0 %v449
        %v1018 = vpop.f32.mrf.mxu0
        %v1019 = vadd.f32 %v906, %v1018
        %1020 = vmatmul.f32.gmra.mxu0 %v450
        %v1021 = vpop.f32.mrf.mxu0
        %v1022 = vadd.f32 %v909, %v1021
        %1023 = vmatmul.f32.gmra.mxu0 %v451
        %v1024 = vpop.f32.mrf.mxu0
        %v1025 = vadd.f32 %v912, %v1024
        %1026 = vmatmul.f32.gmra.mxu0 %v452
        %v1027 = vpop.f32.mrf.mxu0
        %v1028 = vadd.f32 %v915, %v1027
        %1029 = vmatmul.f32.gmra.mxu0 %v453
        %v1030 = vpop.f32.mrf.mxu0
        %v1031 = vadd.f32 %v918, %v1030
        %1032 = vmatmul.f32.gmra.mxu0 %v454
        %v1033 = vpop.f32.mrf.mxu0
        %v1034 = vadd.f32 %v921, %v1033
        %1035 = vmatmul.f32.gmra.mxu0 %v455
        %v1036 = vpop.f32.mrf.mxu0
        %v1037 = vadd.f32 %v924, %v1036
        %1038 = vmatmul.f32.gmra.mxu0 %v456
        %v1039 = vpop.f32.mrf.mxu0
        %v1040 = vadd.f32 %v927, %v1039
        %1041 = vmatmul.f32.gmra.mxu0 %v457
        %v1042 = vpop.f32.mrf.mxu0
        %v1043 = vadd.f32 %v930, %v1042
        %1044 = vmatmul.f32.gmra.mxu0 %v458
        %v1045 = vpop.f32.mrf.mxu0
        %v1046 = vadd.f32 %v933, %v1045
        %1047 = vmatmul.f32.gmra.mxu0 %v459
        %v1048 = vpop.f32.mrf.mxu0
        %v1049 = vadd.f32 %v936, %v1048
        %1050 = vmatmul.f32.gmra.mxu0 %v460
        %v1051 = vpop.f32.mrf.mxu0
        %v1052 = vadd.f32 %v939, %v1051
        %1053 = vmatmul.f32.gmra.mxu0 %v461
        %v1054 = vpop.f32.mrf.mxu0
        %v1055 = vadd.f32 %v942, %v1054
        %1056 = vmatmul.f32.gmra.mxu0 %v462
        %v1057 = vpop.f32.mrf.mxu0
        %v1058 = vadd.f32 %v945, %v1057
        %1059 = vmatmul.f32.gmra.mxu0 %v463
        %v1060 = vpop.f32.mrf.mxu0
        %v1061 = vadd.f32 %v948, %v1060
        %1062 = vmatmul.f32.gmra.mxu0 %v464
        %v1063 = vpop.f32.mrf.mxu0
        %v1064 = vadd.f32 %v951, %v1063
        %1065 = vmatmul.f32.gmra.mxu0 %v465
        %v1066 = vpop.f32.mrf.mxu0
        %v1067 = vadd.f32 %v954, %v1066
        %1068 = vmatmul.f32.gmra.mxu0 %v466
        %v1069 = vpop.f32.mrf.mxu0
        %v1070 = vadd.f32 %v957, %v1069
        %1071 = vmatmul.f32.gmra.mxu0 %v467
        %v1072 = vpop.f32.mrf.mxu0
        %v1073 = vadd.f32 %v960, %v1072
        %1074 = vmatmul.f32.gmra.mxu0 %v468
        %v1075 = vpop.f32.mrf.mxu0
        %v1076 = vadd.f32 %v963, %v1075
        %1077 = vmatmul.f32.gmra.mxu0 %v469
        %v1078 = vpop.f32.mrf.mxu0
        %v1079 = vadd.f32 %v966, %v1078
        %1080 = vmatmul.f32.gmra.mxu0 %v470
        %v1081 = vpop.f32.mrf.mxu0
        %v1082 = vadd.f32 %v969, %v1081
        %1083 = vmatmul.f32.gmra.mxu0 %v471
        %v1084 = vpop.f32.mrf.mxu0
        %v1085 = vadd.f32 %v972, %v1084
        %1086 = vmatmul.f32.gmra.mxu0 %v472
        %v1087 = vpop.f32.mrf.mxu0
        %v1088 = vadd.f32 %v975, %v1087
        %1089 = vmatmul.f32.gmra.mxu0 %v473
        %v1090 = vpop.f32.mrf.mxu0
        %v1091 = vadd.f32 %v978, %v1090
        %1092 = vmatmul.f32.gmra.mxu0 %v474
        %v1093 = vpop.f32.mrf.mxu0
        %v1094 = vadd.f32 %v981, %v1093
        %1095 = vmatmul.f32.gmra.mxu0 %v475
        %v1096 = vpop.f32.mrf.mxu0
        %v1097 = vadd.f32 %v984, %v1096
        %1098 = vmatmul.f32.gmra.mxu0 %v476
        %v1099 = vpop.f32.mrf.mxu0
        %v1100 = vadd.f32 %v987, %v1099
        %1101 = vdwg.mxu0
        %1102 = vmatpush.msra.mxu0 %v584
        %1103 = vmatpush.msra.mxu0 %v583
        %1104 = vmatpush.msra.mxu0 %v582
        %1105 = vmatpush.msra.mxu0 %v581
        %1106 = vmatpush.msra.mxu0 %v580
        %1107 = vmatpush.msra.mxu0 %v579
        %1108 = vmatpush.msra.mxu0 %v578
        %1109 = vmatpush.msra.mxu0 %v577
        %1110 = vmatpush.msra.mxu0 %v576
        %1111 = vmatpush.msra.mxu0 %v575
        %1112 = vmatpush.msra.mxu0 %v574
        %1113 = vmatpush.msra.mxu0 %v573
        %1114 = vmatpush.msra.mxu0 %v572
        %1115 = vmatpush.msra.mxu0 %v571
        %1116 = vmatpush.msra.mxu0 %v570
        %1117 = vmatpush.msra.mxu0 %v569
        %1118 = vmatmul.f32.gmra.mxu0 %v481
        %v1119 = vpop.f32.mrf.mxu0
        %v1120 = vadd.f32 %v1007, %v1119
        %1121 = vmatmul.f32.gmra.mxu0 %v482
        %v1122 = vpop.f32.mrf.mxu0
        %v1123 = vadd.f32 %v1010, %v1122
        %1124 = vmatmul.f32.gmra.mxu0 %v483
        %v1125 = vpop.f32.mrf.mxu0
        %v1126 = vadd.f32 %v1013, %v1125
        %1127 = vmatmul.f32.gmra.mxu0 %v484
        %v1128 = vpop.f32.mrf.mxu0
        %v1129 = vadd.f32 %v1016, %v1128
        %1130 = vmatmul.f32.gmra.mxu0 %v485
        %v1131 = vpop.f32.mrf.mxu0
        %v1132 = vadd.f32 %v1019, %v1131
        %1133 = vmatmul.f32.gmra.mxu0 %v486
        %v1134 = vpop.f32.mrf.mxu0
        %v1135 = vadd.f32 %v1022, %v1134
        %1136 = vmatmul.f32.gmra.mxu0 %v487
        %v1137 = vpop.f32.mrf.mxu0
        %v1138 = vadd.f32 %v1025, %v1137
        %1139 = vmatmul.f32.gmra.mxu0 %v488
        %v1140 = vpop.f32.mrf.mxu0
        %v1141 = vadd.f32 %v1028, %v1140
        %1142 = vmatmul.f32.gmra.mxu0 %v489
        %v1143 = vpop.f32.mrf.mxu0
        %v1144 = vadd.f32 %v1031, %v1143
        %1145 = vmatmul.f32.gmra.mxu0 %v490
        %v1146 = vpop.f32.mrf.mxu0
        %v1147 = vadd.f32 %v1034, %v1146
        %1148 = vmatmul.f32.gmra.mxu0 %v491
        %v1149 = vpop.f32.mrf.mxu0
        %v1150 = vadd.f32 %v1037, %v1149
        %1151 = vmatmul.f32.gmra.mxu0 %v492
        %v1152 = vpop.f32.mrf.mxu0
        %v1153 = vadd.f32 %v1040, %v1152
        %1154 = vmatmul.f32.gmra.mxu0 %v493
        %v1155 = vpop.f32.mrf.mxu0
        %v1156 = vadd.f32 %v1043, %v1155
        %1157 = vmatmul.f32.gmra.mxu0 %v494
        %v1158 = vpop.f32.mrf.mxu0
        %v1159 = vadd.f32 %v1046, %v1158
        %1160 = vmatmul.f32.gmra.mxu0 %v495
        %v1161 = vpop.f32.mrf.mxu0
        %v1162 = vadd.f32 %v1049, %v1161
        %1163 = vmatmul.f32.gmra.mxu0 %v496
        %v1164 = vpop.f32.mrf.mxu0
        %v1165 = vadd.f32 %v1052, %v1164
        %1166 = vmatmul.f32.gmra.mxu0 %v497
        %v1167 = vpop.f32.mrf.mxu0
        %v1168 = vadd.f32 %v1055, %v1167
        %1169 = vmatmul.f32.gmra.mxu0 %v498
        %v1170 = vpop.f32.mrf.mxu0
        %v1171 = vadd.f32 %v1058, %v1170
        %1172 = vmatmul.f32.gmra.mxu0 %v499
        %v1173 = vpop.f32.mrf.mxu0
        %v1174 = vadd.f32 %v1061, %v1173
        %1175 = vmatmul.f32.gmra.mxu0 %v500
        %v1176 = vpop.f32.mrf.mxu0
        %v1177 = vadd.f32 %v1064, %v1176
        %1178 = vmatmul.f32.gmra.mxu0 %v501
        %v1179 = vpop.f32.mrf.mxu0
        %v1180 = vadd.f32 %v1067, %v1179
        %1181 = vmatmul.f32.gmra.mxu0 %v502
        %v1182 = vpop.f32.mrf.mxu0
        %v1183 = vadd.f32 %v1070, %v1182
        %1184 = vmatmul.f32.gmra.mxu0 %v503
        %v1185 = vpop.f32.mrf.mxu0
        %v1186 = vadd.f32 %v1073, %v1185
        %1187 = vmatmul.f32.gmra.mxu0 %v504
        %v1188 = vpop.f32.mrf.mxu0
        %v1189 = vadd.f32 %v1076, %v1188
        %1190 = vmatmul.f32.gmra.mxu0 %v505
        %v1191 = vpop.f32.mrf.mxu0
        %v1192 = vadd.f32 %v1079, %v1191
        %1193 = vmatmul.f32.gmra.mxu0 %v506
        %v1194 = vpop.f32.mrf.mxu0
        %v1195 = vadd.f32 %v1082, %v1194
        %1196 = vmatmul.f32.gmra.mxu0 %v507
        %v1197 = vpop.f32.mrf.mxu0
        %v1198 = vadd.f32 %v1085, %v1197
        %1199 = vmatmul.f32.gmra.mxu0 %v508
        %v1200 = vpop.f32.mrf.mxu0
        %v1201 = vadd.f32 %v1088, %v1200
        %1202 = vmatmul.f32.gmra.mxu0 %v509
        %v1203 = vpop.f32.mrf.mxu0
        %v1204 = vadd.f32 %v1091, %v1203
        %1205 = vmatmul.f32.gmra.mxu0 %v510
        %v1206 = vpop.f32.mrf.mxu0
        %v1207 = vadd.f32 %v1094, %v1206
        %1208 = vmatmul.f32.gmra.mxu0 %v511
        %v1209 = vpop.f32.mrf.mxu0
        %v1210 = vadd.f32 %v1097, %v1209
        %1211 = vmatmul.f32.gmra.mxu0 %v512
        %v1212 = vpop.f32.mrf.mxu0
        %v1213 = vadd.f32 %v1100, %v1212
        %1214 = vdwg.mxu0
        %1215 = vmatpush.msra.mxu0 %v600
        %1216 = vmatpush.msra.mxu0 %v599
        %1217 = vmatpush.msra.mxu0 %v598
        %1218 = vmatpush.msra.mxu0 %v597
        %1219 = vmatpush.msra.mxu0 %v596
        %1220 = vmatpush.msra.mxu0 %v595
        %1221 = vmatpush.msra.mxu0 %v594
        %1222 = vmatpush.msra.mxu0 %v593
        %1223 = vmatpush.msra.mxu0 %v592
        %1224 = vmatpush.msra.mxu0 %v591
        %1225 = vmatpush.msra.mxu0 %v590
        %1226 = vmatpush.msra.mxu0 %v589
        %1227 = vmatpush.msra.mxu0 %v588
        %1228 = vmatpush.msra.mxu0 %v587
        %1229 = vmatpush.msra.mxu0 %v586
        %1230 = vmatpush.msra.mxu0 %v585
        %1231 = vmatmul.f32.gmra.mxu0 %v517
        %v1232 = vpop.f32.mrf.mxu0
        %v1233 = vadd.f32 %v1120, %v1232
        %1234 = vmatmul.f32.gmra.mxu0 %v518
        %v1235 = vpop.f32.mrf.mxu0
        %v1236 = vadd.f32 %v1123, %v1235
        %1237 = vmatmul.f32.gmra.mxu0 %v519
        %v1238 = vpop.f32.mrf.mxu0
        %v1239 = vadd.f32 %v1126, %v1238
        %1240 = vmatmul.f32.gmra.mxu0 %v520
        %v1241 = vpop.f32.mrf.mxu0
        %v1242 = vadd.f32 %v1129, %v1241
        %1243 = vmatmul.f32.gmra.mxu0 %v521
        %v1244 = vpop.f32.mrf.mxu0
        %v1245 = vadd.f32 %v1132, %v1244
        %1246 = vmatmul.f32.gmra.mxu0 %v522
        %v1247 = vpop.f32.mrf.mxu0
        %v1248 = vadd.f32 %v1135, %v1247
        %1249 = vmatmul.f32.gmra.mxu0 %v523
        %v1250 = vpop.f32.mrf.mxu0
        %v1251 = vadd.f32 %v1138, %v1250
        %1252 = vmatmul.f32.gmra.mxu0 %v524
        %v1253 = vpop.f32.mrf.mxu0
        %v1254 = vadd.f32 %v1141, %v1253
        %1255 = vmatmul.f32.gmra.mxu0 %v525
        %v1256 = vpop.f32.mrf.mxu0
        %v1257 = vadd.f32 %v1144, %v1256
        %1258 = vmatmul.f32.gmra.mxu0 %v526
        %v1259 = vpop.f32.mrf.mxu0
        %v1260 = vadd.f32 %v1147, %v1259
        %1261 = vmatmul.f32.gmra.mxu0 %v527
        %v1262 = vpop.f32.mrf.mxu0
        %v1263 = vadd.f32 %v1150, %v1262
        %1264 = vmatmul.f32.gmra.mxu0 %v528
        %v1265 = vpop.f32.mrf.mxu0
        %v1266 = vadd.f32 %v1153, %v1265
        %1267 = vmatmul.f32.gmra.mxu0 %v529
        %v1268 = vpop.f32.mrf.mxu0
        %v1269 = vadd.f32 %v1156, %v1268
        %1270 = vmatmul.f32.gmra.mxu0 %v530
        %v1271 = vpop.f32.mrf.mxu0
        %v1272 = vadd.f32 %v1159, %v1271
        %1273 = vmatmul.f32.gmra.mxu0 %v531
        %v1274 = vpop.f32.mrf.mxu0
        %v1275 = vadd.f32 %v1162, %v1274
        %1276 = vmatmul.f32.gmra.mxu0 %v532
        %v1277 = vpop.f32.mrf.mxu0
        %v1278 = vadd.f32 %v1165, %v1277
        %1279 = vmatmul.f32.gmra.mxu0 %v533
        %v1280 = vpop.f32.mrf.mxu0
        %v1281 = vadd.f32 %v1168, %v1280
        %1282 = vmatmul.f32.gmra.mxu0 %v534
        %v1283 = vpop.f32.mrf.mxu0
        %v1284 = vadd.f32 %v1171, %v1283
        %1285 = vmatmul.f32.gmra.mxu0 %v535
        %v1286 = vpop.f32.mrf.mxu0
        %v1287 = vadd.f32 %v1174, %v1286
        %1288 = vmatmul.f32.gmra.mxu0 %v536
        %v1289 = vpop.f32.mrf.mxu0
        %v1290 = vadd.f32 %v1177, %v1289
        %1291 = vmatmul.f32.gmra.mxu0 %v537
        %v1292 = vpop.f32.mrf.mxu0
        %v1293 = vadd.f32 %v1180, %v1292
        %1294 = vmatmul.f32.gmra.mxu0 %v538
        %v1295 = vpop.f32.mrf.mxu0
        %v1296 = vadd.f32 %v1183, %v1295
        %1297 = vmatmul.f32.gmra.mxu0 %v539
        %v1298 = vpop.f32.mrf.mxu0
        %v1299 = vadd.f32 %v1186, %v1298
        %1300 = vmatmul.f32.gmra.mxu0 %v540
        %v1301 = vpop.f32.mrf.mxu0
        %v1302 = vadd.f32 %v1189, %v1301
        %1303 = vmatmul.f32.gmra.mxu0 %v541
        %v1304 = vpop.f32.mrf.mxu0
        %v1305 = vadd.f32 %v1192, %v1304
        %1306 = vmatmul.f32.gmra.mxu0 %v542
        %v1307 = vpop.f32.mrf.mxu0
        %v1308 = vadd.f32 %v1195, %v1307
        %1309 = vmatmul.f32.gmra.mxu0 %v543
        %v1310 = vpop.f32.mrf.mxu0
        %v1311 = vadd.f32 %v1198, %v1310
        %1312 = vmatmul.f32.gmra.mxu0 %v544
        %v1313 = vpop.f32.mrf.mxu0
        %v1314 = vadd.f32 %v1201, %v1313
        %1315 = vmatmul.f32.gmra.mxu0 %v545
        %v1316 = vpop.f32.mrf.mxu0
        %v1317 = vadd.f32 %v1204, %v1316
        %1318 = vmatmul.f32.gmra.mxu0 %v546
        %v1319 = vpop.f32.mrf.mxu0
        %v1320 = vadd.f32 %v1207, %v1319
        %1321 = vmatmul.f32.gmra.mxu0 %v547
        %v1322 = vpop.f32.mrf.mxu0
        %v1323 = vadd.f32 %v1210, %v1322
        %1324 = vmatmul.f32.gmra.mxu0 %v548
        %v1325 = vpop.f32.mrf.mxu0
        %v1326 = vadd.f32 %v1213, %v1325
        %1327 = vdwg.mxu0
        %s1328 = scalar_lea.vmem %s1, 768
        %v1329 = vld [vmem:[%s1328] sm:$0xff]
        %v1330 = vld [vmem:[%s1328 + $0x8] sm:$0xff]
        %v1331 = vld [vmem:[%s1328 + $0x10] sm:$0xff]
        %v1332 = vld [vmem:[%s1328 + $0x18] sm:$0xff]
        %v1333 = vld [vmem:[%s1328 + $0x20] sm:$0xff]
        %v1334 = vld [vmem:[%s1328 + $0x28] sm:$0xff]
        %v1335 = vld [vmem:[%s1328 + $0x30] sm:$0xff]
        %v1336 = vld [vmem:[%s1328 + $0x38] sm:$0xff]
        %v1337 = vld [vmem:[%s1328 + $0x40] sm:$0xff]
        %v1338 = vld [vmem:[%s1328 + $0x48] sm:$0xff]
        %v1339 = vld [vmem:[%s1328 + $0x50] sm:$0xff]
        %v1340 = vld [vmem:[%s1328 + $0x58] sm:$0xff]
        %v1341 = vld [vmem:[%s1328 + $0x60] sm:$0xff]
        %v1342 = vld [vmem:[%s1328 + $0x68] sm:$0xff]
        %v1343 = vld [vmem:[%s1328 + $0x70] sm:$0xff]
        %v1344 = vld [vmem:[%s1328 + $0x78] sm:$0xff]
        %v1345 = vld [vmem:[%s1328 + $0x80] sm:$0xff]
        %v1346 = vld [vmem:[%s1328 + $0x88] sm:$0xff]
        %v1347 = vld [vmem:[%s1328 + $0x90] sm:$0xff]
        %v1348 = vld [vmem:[%s1328 + $0x98] sm:$0xff]
        %v1349 = vld [vmem:[%s1328 + $0xa0] sm:$0xff]
        %v1350 = vld [vmem:[%s1328 + $0xa8] sm:$0xff]
        %v1351 = vld [vmem:[%s1328 + $0xb0] sm:$0xff]
        %v1352 = vld [vmem:[%s1328 + $0xb8] sm:$0xff]
        %v1353 = vld [vmem:[%s1328 + $0xc0] sm:$0xff]
        %v1354 = vld [vmem:[%s1328 + $0xc8] sm:$0xff]
        %v1355 = vld [vmem:[%s1328 + $0xd0] sm:$0xff]
        %v1356 = vld [vmem:[%s1328 + $0xd8] sm:$0xff]
        %v1357 = vld [vmem:[%s1328 + $0xe0] sm:$0xff]
        %v1358 = vld [vmem:[%s1328 + $0xe8] sm:$0xff]
        %v1359 = vld [vmem:[%s1328 + $0xf0] sm:$0xff]
        %v1360 = vld [vmem:[%s1328 + $0xf8] sm:$0xff]
        %v1361 = vld [vmem:[%s1328 + $0x100] sm:$0xff]
        %v1362 = vld [vmem:[%s1328 + $0x108] sm:$0xff]
        %v1363 = vld [vmem:[%s1328 + $0x110] sm:$0xff]
        %v1364 = vld [vmem:[%s1328 + $0x118] sm:$0xff]
        %v1365 = vld [vmem:[%s1328 + $0x120] sm:$0xff]
        %v1366 = vld [vmem:[%s1328 + $0x128] sm:$0xff]
        %v1367 = vld [vmem:[%s1328 + $0x130] sm:$0xff]
        %v1368 = vld [vmem:[%s1328 + $0x138] sm:$0xff]
        %v1369 = vld [vmem:[%s1328 + $0x140] sm:$0xff]
        %v1370 = vld [vmem:[%s1328 + $0x148] sm:$0xff]
        %v1371 = vld [vmem:[%s1328 + $0x150] sm:$0xff]
        %v1372 = vld [vmem:[%s1328 + $0x158] sm:$0xff]
        %v1373 = vld [vmem:[%s1328 + $0x160] sm:$0xff]
        %v1374 = vld [vmem:[%s1328 + $0x168] sm:$0xff]
        %v1375 = vld [vmem:[%s1328 + $0x170] sm:$0xff]
        %v1376 = vld [vmem:[%s1328 + $0x178] sm:$0xff]
        %1377 = vmatpush.msra.mxu0 %v1344
        %1378 = vmatpush.msra.mxu0 %v1343
        %1379 = vmatpush.msra.mxu0 %v1342
        %1380 = vmatpush.msra.mxu0 %v1341
        %1381 = vmatpush.msra.mxu0 %v1340
        %1382 = vmatpush.msra.mxu0 %v1339
        %1383 = vmatpush.msra.mxu0 %v1338
        %1384 = vmatpush.msra.mxu0 %v1337
        %1385 = vmatpush.msra.mxu0 %v1336
        %1386 = vmatpush.msra.mxu0 %v1335
        %1387 = vmatpush.msra.mxu0 %v1334
        %1388 = vmatpush.msra.mxu0 %v1333
        %1389 = vmatpush.msra.mxu0 %v1332
        %1390 = vmatpush.msra.mxu0 %v1331
        %1391 = vmatpush.msra.mxu0 %v1330
        %1392 = vmatpush.msra.mxu0 %v1329
        %1393 = vmatmul.f32.gmra.mxu0 %v449
        %v1394 = vpop.f32.mrf.mxu0
        %v1395 = vadd.f32 0.0, %v1394
        %1396 = vmatmul.f32.gmra.mxu0 %v450
        %v1397 = vpop.f32.mrf.mxu0
        %v1398 = vadd.f32 0.0, %v1397
        %1399 = vmatmul.f32.gmra.mxu0 %v451
        %v1400 = vpop.f32.mrf.mxu0
        %v1401 = vadd.f32 0.0, %v1400
        %1402 = vmatmul.f32.gmra.mxu0 %v452
        %v1403 = vpop.f32.mrf.mxu0
        %v1404 = vadd.f32 0.0, %v1403
        %1405 = vmatmul.f32.gmra.mxu0 %v453
        %v1406 = vpop.f32.mrf.mxu0
        %v1407 = vadd.f32 0.0, %v1406
        %1408 = vmatmul.f32.gmra.mxu0 %v454
        %v1409 = vpop.f32.mrf.mxu0
        %v1410 = vadd.f32 0.0, %v1409
        %1411 = vmatmul.f32.gmra.mxu0 %v455
        %v1412 = vpop.f32.mrf.mxu0
        %v1413 = vadd.f32 0.0, %v1412
        %1414 = vmatmul.f32.gmra.mxu0 %v456
        %v1415 = vpop.f32.mrf.mxu0
        %v1416 = vadd.f32 0.0, %v1415
        %1417 = vmatmul.f32.gmra.mxu0 %v457
        %v1418 = vpop.f32.mrf.mxu0
        %v1419 = vadd.f32 0.0, %v1418
        %1420 = vmatmul.f32.gmra.mxu0 %v458
        %v1421 = vpop.f32.mrf.mxu0
        %v1422 = vadd.f32 0.0, %v1421
        %1423 = vmatmul.f32.gmra.mxu0 %v459
        %v1424 = vpop.f32.mrf.mxu0
        %v1425 = vadd.f32 0.0, %v1424
        %1426 = vmatmul.f32.gmra.mxu0 %v460
        %v1427 = vpop.f32.mrf.mxu0
        %v1428 = vadd.f32 0.0, %v1427
        %1429 = vmatmul.f32.gmra.mxu0 %v461
        %v1430 = vpop.f32.mrf.mxu0
        %v1431 = vadd.f32 0.0, %v1430
        %1432 = vmatmul.f32.gmra.mxu0 %v462
        %v1433 = vpop.f32.mrf.mxu0
        %v1434 = vadd.f32 0.0, %v1433
        %1435 = vmatmul.f32.gmra.mxu0 %v463
        %v1436 = vpop.f32.mrf.mxu0
        %v1437 = vadd.f32 0.0, %v1436
        %1438 = vmatmul.f32.gmra.mxu0 %v464
        %v1439 = vpop.f32.mrf.mxu0
        %v1440 = vadd.f32 0.0, %v1439
        %1441 = vmatmul.f32.gmra.mxu0 %v465
        %v1442 = vpop.f32.mrf.mxu0
        %v1443 = vadd.f32 0.0, %v1442
        %1444 = vmatmul.f32.gmra.mxu0 %v466
        %v1445 = vpop.f32.mrf.mxu0
        %v1446 = vadd.f32 0.0, %v1445
        %1447 = vmatmul.f32.gmra.mxu0 %v467
        %v1448 = vpop.f32.mrf.mxu0
        %v1449 = vadd.f32 0.0, %v1448
        %1450 = vmatmul.f32.gmra.mxu0 %v468
        %v1451 = vpop.f32.mrf.mxu0
        %v1452 = vadd.f32 0.0, %v1451
        %1453 = vmatmul.f32.gmra.mxu0 %v469
        %v1454 = vpop.f32.mrf.mxu0
        %v1455 = vadd.f32 0.0, %v1454
        %1456 = vmatmul.f32.gmra.mxu0 %v470
        %v1457 = vpop.f32.mrf.mxu0
        %v1458 = vadd.f32 0.0, %v1457
        %1459 = vmatmul.f32.gmra.mxu0 %v471
        %v1460 = vpop.f32.mrf.mxu0
        %v1461 = vadd.f32 0.0, %v1460
        %1462 = vmatmul.f32.gmra.mxu0 %v472
        %v1463 = vpop.f32.mrf.mxu0
        %v1464 = vadd.f32 0.0, %v1463
        %1465 = vmatmul.f32.gmra.mxu0 %v473
        %v1466 = vpop.f32.mrf.mxu0
        %v1467 = vadd.f32 0.0, %v1466
        %1468 = vmatmul.f32.gmra.mxu0 %v474
        %v1469 = vpop.f32.mrf.mxu0
        %v1470 = vadd.f32 0.0, %v1469
        %1471 = vmatmul.f32.gmra.mxu0 %v475
        %v1472 = vpop.f32.mrf.mxu0
        %v1473 = vadd.f32 0.0, %v1472
        %1474 = vmatmul.f32.gmra.mxu0 %v476
        %v1475 = vpop.f32.mrf.mxu0
        %v1476 = vadd.f32 0.0, %v1475
        %1477 = vmatmul.f32.gmra.mxu0 %v477
        %v1478 = vpop.f32.mrf.mxu0
        %v1479 = vadd.f32 0.0, %v1478
        %1480 = vmatmul.f32.gmra.mxu0 %v478
        %v1481 = vpop.f32.mrf.mxu0
        %v1482 = vadd.f32 0.0, %v1481
        %1483 = vmatmul.f32.gmra.mxu0 %v479
        %v1484 = vpop.f32.mrf.mxu0
        %v1485 = vadd.f32 0.0, %v1484
        %1486 = vmatmul.f32.gmra.mxu0 %v480
        %v1487 = vpop.f32.mrf.mxu0
        %v1488 = vadd.f32 0.0, %v1487
        %1489 = vdwg.mxu0
        %1490 = vmatpush.msra.mxu0 %v1360
        %1491 = vmatpush.msra.mxu0 %v1359
        %1492 = vmatpush.msra.mxu0 %v1358
        %1493 = vmatpush.msra.mxu0 %v1357
        %1494 = vmatpush.msra.mxu0 %v1356
        %1495 = vmatpush.msra.mxu0 %v1355
        %1496 = vmatpush.msra.mxu0 %v1354
        %1497 = vmatpush.msra.mxu0 %v1353
        %1498 = vmatpush.msra.mxu0 %v1352
        %1499 = vmatpush.msra.mxu0 %v1351
        %1500 = vmatpush.msra.mxu0 %v1350
        %1501 = vmatpush.msra.mxu0 %v1349
        %1502 = vmatpush.msra.mxu0 %v1348
        %1503 = vmatpush.msra.mxu0 %v1347
        %1504 = vmatpush.msra.mxu0 %v1346
        %1505 = vmatpush.msra.mxu0 %v1345
        %1506 = vmatmul.f32.gmra.mxu0 %v485
        %v1507 = vpop.f32.mrf.mxu0
        %v1508 = vadd.f32 %v1395, %v1507
        %1509 = vmatmul.f32.gmra.mxu0 %v486
        %v1510 = vpop.f32.mrf.mxu0
        %v1511 = vadd.f32 %v1398, %v1510
        %1512 = vmatmul.f32.gmra.mxu0 %v487
        %v1513 = vpop.f32.mrf.mxu0
        %v1514 = vadd.f32 %v1401, %v1513
        %1515 = vmatmul.f32.gmra.mxu0 %v488
        %v1516 = vpop.f32.mrf.mxu0
        %v1517 = vadd.f32 %v1404, %v1516
        %1518 = vmatmul.f32.gmra.mxu0 %v489
        %v1519 = vpop.f32.mrf.mxu0
        %v1520 = vadd.f32 %v1407, %v1519
        %1521 = vmatmul.f32.gmra.mxu0 %v490
        %v1522 = vpop.f32.mrf.mxu0
        %v1523 = vadd.f32 %v1410, %v1522
        %1524 = vmatmul.f32.gmra.mxu0 %v491
        %v1525 = vpop.f32.mrf.mxu0
        %v1526 = vadd.f32 %v1413, %v1525
        %1527 = vmatmul.f32.gmra.mxu0 %v492
        %v1528 = vpop.f32.mrf.mxu0
        %v1529 = vadd.f32 %v1416, %v1528
        %1530 = vmatmul.f32.gmra.mxu0 %v493
        %v1531 = vpop.f32.mrf.mxu0
        %v1532 = vadd.f32 %v1419, %v1531
        %1533 = vmatmul.f32.gmra.mxu0 %v494
        %v1534 = vpop.f32.mrf.mxu0
        %v1535 = vadd.f32 %v1422, %v1534
        %1536 = vmatmul.f32.gmra.mxu0 %v495
        %v1537 = vpop.f32.mrf.mxu0
        %v1538 = vadd.f32 %v1425, %v1537
        %1539 = vmatmul.f32.gmra.mxu0 %v496
        %v1540 = vpop.f32.mrf.mxu0
        %v1541 = vadd.f32 %v1428, %v1540
        %1542 = vmatmul.f32.gmra.mxu0 %v497
        %v1543 = vpop.f32.mrf.mxu0
        %v1544 = vadd.f32 %v1431, %v1543
        %1545 = vmatmul.f32.gmra.mxu0 %v498
        %v1546 = vpop.f32.mrf.mxu0
        %v1547 = vadd.f32 %v1434, %v1546
        %1548 = vmatmul.f32.gmra.mxu0 %v499
        %v1549 = vpop.f32.mrf.mxu0
        %v1550 = vadd.f32 %v1437, %v1549
        %1551 = vmatmul.f32.gmra.mxu0 %v500
        %v1552 = vpop.f32.mrf.mxu0
        %v1553 = vadd.f32 %v1440, %v1552
        %1554 = vmatmul.f32.gmra.mxu0 %v501
        %v1555 = vpop.f32.mrf.mxu0
        %v1556 = vadd.f32 %v1443, %v1555
        %1557 = vmatmul.f32.gmra.mxu0 %v502
        %v1558 = vpop.f32.mrf.mxu0
        %v1559 = vadd.f32 %v1446, %v1558
        %1560 = vmatmul.f32.gmra.mxu0 %v503
        %v1561 = vpop.f32.mrf.mxu0
        %v1562 = vadd.f32 %v1449, %v1561
        %1563 = vmatmul.f32.gmra.mxu0 %v504
        %v1564 = vpop.f32.mrf.mxu0
        %v1565 = vadd.f32 %v1452, %v1564
        %1566 = vmatmul.f32.gmra.mxu0 %v505
        %v1567 = vpop.f32.mrf.mxu0
        %v1568 = vadd.f32 %v1455, %v1567
        %1569 = vmatmul.f32.gmra.mxu0 %v506
        %v1570 = vpop.f32.mrf.mxu0
        %v1571 = vadd.f32 %v1458, %v1570
        %1572 = vmatmul.f32.gmra.mxu0 %v507
        %v1573 = vpop.f32.mrf.mxu0
        %v1574 = vadd.f32 %v1461, %v1573
        %1575 = vmatmul.f32.gmra.mxu0 %v508
        %v1576 = vpop.f32.mrf.mxu0
        %v1577 = vadd.f32 %v1464, %v1576
        %1578 = vmatmul.f32.gmra.mxu0 %v509
        %v1579 = vpop.f32.mrf.mxu0
        %v1580 = vadd.f32 %v1467, %v1579
        %1581 = vmatmul.f32.gmra.mxu0 %v510
        %v1582 = vpop.f32.mrf.mxu0
        %v1583 = vadd.f32 %v1470, %v1582
        %1584 = vmatmul.f32.gmra.mxu0 %v511
        %v1585 = vpop.f32.mrf.mxu0
        %v1586 = vadd.f32 %v1473, %v1585
        %1587 = vmatmul.f32.gmra.mxu0 %v512
        %v1588 = vpop.f32.mrf.mxu0
        %v1589 = vadd.f32 %v1476, %v1588
        %1590 = vmatmul.f32.gmra.mxu0 %v513
        %v1591 = vpop.f32.mrf.mxu0
        %v1592 = vadd.f32 %v1479, %v1591
        %1593 = vmatmul.f32.gmra.mxu0 %v514
        %v1594 = vpop.f32.mrf.mxu0
        %v1595 = vadd.f32 %v1482, %v1594
        %1596 = vmatmul.f32.gmra.mxu0 %v515
        %v1597 = vpop.f32.mrf.mxu0
        %v1598 = vadd.f32 %v1485, %v1597
        %1599 = vmatmul.f32.gmra.mxu0 %v516
        %v1600 = vpop.f32.mrf.mxu0
        %v1601 = vadd.f32 %v1488, %v1600
        %1602 = vdwg.mxu0
        %1603 = vmatpush.msra.mxu0 %v1376
        %1604 = vmatpush.msra.mxu0 %v1375
        %1605 = vmatpush.msra.mxu0 %v1374
        %1606 = vmatpush.msra.mxu0 %v1373
        %1607 = vmatpush.msra.mxu0 %v1372
        %1608 = vmatpush.msra.mxu0 %v1371
        %1609 = vmatpush.msra.mxu0 %v1370
        %1610 = vmatpush.msra.mxu0 %v1369
        %1611 = vmatpush.msra.mxu0 %v1368
        %1612 = vmatpush.msra.mxu0 %v1367
        %1613 = vmatpush.msra.mxu0 %v1366
        %1614 = vmatpush.msra.mxu0 %v1365
        %1615 = vmatpush.msra.mxu0 %v1364
        %1616 = vmatpush.msra.mxu0 %v1363
        %1617 = vmatpush.msra.mxu0 %v1362
        %1618 = vmatpush.msra.mxu0 %v1361
        %1619 = vmatmul.f32.gmra.mxu0 %v521
        %v1620 = vpop.f32.mrf.mxu0
        %v1621 = vadd.f32 %v1508, %v1620
        %1622 = vmatmul.f32.gmra.mxu0 %v522
        %v1623 = vpop.f32.mrf.mxu0
        %v1624 = vadd.f32 %v1511, %v1623
        %1625 = vmatmul.f32.gmra.mxu0 %v523
        %v1626 = vpop.f32.mrf.mxu0
        %v1627 = vadd.f32 %v1514, %v1626
        %1628 = vmatmul.f32.gmra.mxu0 %v524
        %v1629 = vpop.f32.mrf.mxu0
        %v1630 = vadd.f32 %v1517, %v1629
        %1631 = vmatmul.f32.gmra.mxu0 %v525
        %v1632 = vpop.f32.mrf.mxu0
        %v1633 = vadd.f32 %v1520, %v1632
        %1634 = vmatmul.f32.gmra.mxu0 %v526
        %v1635 = vpop.f32.mrf.mxu0
        %v1636 = vadd.f32 %v1523, %v1635
        %1637 = vmatmul.f32.gmra.mxu0 %v527
        %v1638 = vpop.f32.mrf.mxu0
        %v1639 = vadd.f32 %v1526, %v1638
        %1640 = vmatmul.f32.gmra.mxu0 %v528
        %v1641 = vpop.f32.mrf.mxu0
        %v1642 = vadd.f32 %v1529, %v1641
        %1643 = vmatmul.f32.gmra.mxu0 %v529
        %v1644 = vpop.f32.mrf.mxu0
        %v1645 = vadd.f32 %v1532, %v1644
        %1646 = vmatmul.f32.gmra.mxu0 %v530
        %v1647 = vpop.f32.mrf.mxu0
        %v1648 = vadd.f32 %v1535, %v1647
        %1649 = vmatmul.f32.gmra.mxu0 %v531
        %v1650 = vpop.f32.mrf.mxu0
        %v1651 = vadd.f32 %v1538, %v1650
        %1652 = vmatmul.f32.gmra.mxu0 %v532
        %v1653 = vpop.f32.mrf.mxu0
        %v1654 = vadd.f32 %v1541, %v1653
        %1655 = vmatmul.f32.gmra.mxu0 %v533
        %v1656 = vpop.f32.mrf.mxu0
        %v1657 = vadd.f32 %v1544, %v1656
        %1658 = vmatmul.f32.gmra.mxu0 %v534
        %v1659 = vpop.f32.mrf.mxu0
        %v1660 = vadd.f32 %v1547, %v1659
        %1661 = vmatmul.f32.gmra.mxu0 %v535
        %v1662 = vpop.f32.mrf.mxu0
        %v1663 = vadd.f32 %v1550, %v1662
        %1664 = vmatmul.f32.gmra.mxu0 %v536
        %v1665 = vpop.f32.mrf.mxu0
        %v1666 = vadd.f32 %v1553, %v1665
        %1667 = vmatmul.f32.gmra.mxu0 %v537
        %v1668 = vpop.f32.mrf.mxu0
        %v1669 = vadd.f32 %v1556, %v1668
        %1670 = vmatmul.f32.gmra.mxu0 %v538
        %v1671 = vpop.f32.mrf.mxu0
        %v1672 = vadd.f32 %v1559, %v1671
        %1673 = vmatmul.f32.gmra.mxu0 %v539
        %v1674 = vpop.f32.mrf.mxu0
        %v1675 = vadd.f32 %v1562, %v1674
        %1676 = vmatmul.f32.gmra.mxu0 %v540
        %v1677 = vpop.f32.mrf.mxu0
        %v1678 = vadd.f32 %v1565, %v1677
        %1679 = vmatmul.f32.gmra.mxu0 %v541
        %v1680 = vpop.f32.mrf.mxu0
        %v1681 = vadd.f32 %v1568, %v1680
        %1682 = vmatmul.f32.gmra.mxu0 %v542
        %v1683 = vpop.f32.mrf.mxu0
        %v1684 = vadd.f32 %v1571, %v1683
        %1685 = vmatmul.f32.gmra.mxu0 %v543
        %v1686 = vpop.f32.mrf.mxu0
        %v1687 = vadd.f32 %v1574, %v1686
        %1688 = vmatmul.f32.gmra.mxu0 %v544
        %v1689 = vpop.f32.mrf.mxu0
        %v1690 = vadd.f32 %v1577, %v1689
        %1691 = vmatmul.f32.gmra.mxu0 %v545
        %v1692 = vpop.f32.mrf.mxu0
        %v1693 = vadd.f32 %v1580, %v1692
        %1694 = vmatmul.f32.gmra.mxu0 %v546
        %v1695 = vpop.f32.mrf.mxu0
        %v1696 = vadd.f32 %v1583, %v1695
        %1697 = vmatmul.f32.gmra.mxu0 %v547
        %v1698 = vpop.f32.mrf.mxu0
        %v1699 = vadd.f32 %v1586, %v1698
        %1700 = vmatmul.f32.gmra.mxu0 %v548
        %v1701 = vpop.f32.mrf.mxu0
        %v1702 = vadd.f32 %v1589, %v1701
        %1703 = vmatmul.f32.gmra.mxu0 %v549
        %v1704 = vpop.f32.mrf.mxu0
        %v1705 = vadd.f32 %v1592, %v1704
        %1706 = vmatmul.f32.gmra.mxu0 %v550
        %v1707 = vpop.f32.mrf.mxu0
        %v1708 = vadd.f32 %v1595, %v1707
        %1709 = vmatmul.f32.gmra.mxu0 %v551
        %v1710 = vpop.f32.mrf.mxu0
        %v1711 = vadd.f32 %v1598, %v1710
        %1712 = vmatmul.f32.gmra.mxu0 %v552
        %v1713 = vpop.f32.mrf.mxu0
        %v1714 = vadd.f32 %v1601, %v1713
        %1715 = vdwg.mxu0
        %v1716 = vadd.f32 %v1233, %v1621
        %v1717 = vadd.f32 %v1236, %v1624
        %v1718 = vadd.f32 %v1239, %v1627
        %v1719 = vadd.f32 %v1242, %v1630
        %v1720 = vadd.f32 %v1245, %v1633
        %v1721 = vadd.f32 %v1248, %v1636
        %v1722 = vadd.f32 %v1251, %v1639
        %v1723 = vadd.f32 %v1254, %v1642
        %v1724 = vadd.f32 %v1257, %v1645
        %v1725 = vadd.f32 %v1260, %v1648
        %v1726 = vadd.f32 %v1263, %v1651
        %v1727 = vadd.f32 %v1266, %v1654
        %v1728 = vadd.f32 %v1269, %v1657
        %v1729 = vadd.f32 %v1272, %v1660
        %v1730 = vadd.f32 %v1275, %v1663
        %v1731 = vadd.f32 %v1278, %v1666
        %v1732 = vadd.f32 %v1281, %v1669
        %v1733 = vadd.f32 %v1284, %v1672
        %v1734 = vadd.f32 %v1287, %v1675
        %v1735 = vadd.f32 %v1290, %v1678
        %v1736 = vadd.f32 %v1293, %v1681
        %v1737 = vadd.f32 %v1296, %v1684
        %v1738 = vadd.f32 %v1299, %v1687
        %v1739 = vadd.f32 %v1302, %v1690
        %v1740 = vadd.f32 %v1305, %v1693
        %v1741 = vadd.f32 %v1308, %v1696
        %v1742 = vadd.f32 %v1311, %v1699
        %v1743 = vadd.f32 %v1314, %v1702
        %v1744 = vadd.f32 %v1317, %v1705
        %v1745 = vadd.f32 %v1320, %v1708
        %v1746 = vadd.f32 %v1323, %v1711
        %v1747 = vadd.f32 %v1326, %v1714
        %v1748 = vld [vmem:[%s2] sm:$0x1]
        %v1749 = vperm.slane %v1748, 0
        %v1750 = vmul.f32 %v1716, %v1749
        %v1751 = vmul.f32 %v1717, %v1749
        %v1752 = vmul.f32 %v1718, %v1749
        %v1753 = vmul.f32 %v1719, %v1749
        %v1754 = vmul.f32 %v1720, %v1749
        %v1755 = vmul.f32 %v1721, %v1749
        %v1756 = vmul.f32 %v1722, %v1749
        %v1757 = vmul.f32 %v1723, %v1749
        %v1758 = vmul.f32 %v1724, %v1749
        %v1759 = vmul.f32 %v1725, %v1749
        %v1760 = vmul.f32 %v1726, %v1749
        %v1761 = vmul.f32 %v1727, %v1749
        %v1762 = vmul.f32 %v1728, %v1749
        %v1763 = vmul.f32 %v1729, %v1749
        %v1764 = vmul.f32 %v1730, %v1749
        %v1765 = vmul.f32 %v1731, %v1749
        %v1766 = vmul.f32 %v1732, %v1749
        %v1767 = vmul.f32 %v1733, %v1749
        %v1768 = vmul.f32 %v1734, %v1749
        %v1769 = vmul.f32 %v1735, %v1749
        %v1770 = vmul.f32 %v1736, %v1749
        %v1771 = vmul.f32 %v1737, %v1749
        %v1772 = vmul.f32 %v1738, %v1749
        %v1773 = vmul.f32 %v1739, %v1749
        %v1774 = vmul.f32 %v1740, %v1749
        %v1775 = vmul.f32 %v1741, %v1749
        %v1776 = vmul.f32 %v1742, %v1749
        %v1777 = vmul.f32 %v1743, %v1749
        %v1778 = vmul.f32 %v1744, %v1749
        %v1779 = vmul.f32 %v1745, %v1749
        %v1780 = vmul.f32 %v1746, %v1749
        %v1781 = vmul.f32 %v1747, %v1749
        %v1782 = vld [vmem:[%s2 + $0x1] sm:$0x1]
        %v1783 = vperm.slane %v1782, 0
        %v1784 = vadd.f32 %v1750, %v1783
        %v1785 = vadd.f32 %v1751, %v1783
        %v1786 = vadd.f32 %v1752, %v1783
        %v1787 = vadd.f32 %v1753, %v1783
        %v1788 = vadd.f32 %v1754, %v1783
        %v1789 = vadd.f32 %v1755, %v1783
        %v1790 = vadd.f32 %v1756, %v1783
        %v1791 = vadd.f32 %v1757, %v1783
        %v1792 = vadd.f32 %v1758, %v1783
        %v1793 = vadd.f32 %v1759, %v1783
        %v1794 = vadd.f32 %v1760, %v1783
        %v1795 = vadd.f32 %v1761, %v1783
        %v1796 = vadd.f32 %v1762, %v1783
        %v1797 = vadd.f32 %v1763, %v1783
        %v1798 = vadd.f32 %v1764, %v1783
        %v1799 = vadd.f32 %v1765, %v1783
        %v1800 = vadd.f32 %v1766, %v1783
        %v1801 = vadd.f32 %v1767, %v1783
        %v1802 = vadd.f32 %v1768, %v1783
        %v1803 = vadd.f32 %v1769, %v1783
        %v1804 = vadd.f32 %v1770, %v1783
        %v1805 = vadd.f32 %v1771, %v1783
        %v1806 = vadd.f32 %v1772, %v1783
        %v1807 = vadd.f32 %v1773, %v1783
        %v1808 = vadd.f32 %v1774, %v1783
        %v1809 = vadd.f32 %v1775, %v1783
        %v1810 = vadd.f32 %v1776, %v1783
        %v1811 = vadd.f32 %v1777, %v1783
        %v1812 = vadd.f32 %v1778, %v1783
        %v1813 = vadd.f32 %v1779, %v1783
        %v1814 = vadd.f32 %v1780, %v1783
        %v1815 = vadd.f32 %v1781, %v1783
        %v1816 = vmax.f32 %v1784, 0.0
        %v1817 = vmax.f32 %v1785, 0.0
        %v1818 = vmax.f32 %v1786, 0.0
        %v1819 = vmax.f32 %v1787, 0.0
        %v1820 = vmax.f32 %v1788, 0.0
        %v1821 = vmax.f32 %v1789, 0.0
        %v1822 = vmax.f32 %v1790, 0.0
        %v1823 = vmax.f32 %v1791, 0.0
        %v1824 = vmax.f32 %v1792, 0.0
        %v1825 = vmax.f32 %v1793, 0.0
        %v1826 = vmax.f32 %v1794, 0.0
        %v1827 = vmax.f32 %v1795, 0.0
        %v1828 = vmax.f32 %v1796, 0.0
        %v1829 = vmax.f32 %v1797, 0.0
        %v1830 = vmax.f32 %v1798, 0.0
        %v1831 = vmax.f32 %v1799, 0.0
        %v1832 = vmax.f32 %v1800, 0.0
        %v1833 = vmax.f32 %v1801, 0.0
        %v1834 = vmax.f32 %v1802, 0.0
        %v1835 = vmax.f32 %v1803, 0.0
        %v1836 = vmax.f32 %v1804, 0.0
        %v1837 = vmax.f32 %v1805, 0.0
        %v1838 = vmax.f32 %v1806, 0.0
        %v1839 = vmax.f32 %v1807, 0.0
        %v1840 = vmax.f32 %v1808, 0.0
        %v1841 = vmax.f32 %v1809, 0.0
        %v1842 = vmax.f32 %v1810, 0.0
        %v1843 = vmax.f32 %v1811, 0.0
        %v1844 = vmax.f32 %v1812, 0.0
        %v1845 = vmax.f32 %v1813, 0.0
        %v1846 = vmax.f32 %v1814, 0.0
        %v1847 = vmax.f32 %v1815, 0.0
        %1848 = vst [vmem:[%s136] sm:$0xff] %v1816
        %1849 = vst [vmem:[%s136 + $0x8] sm:$0xff] %v1817
        %1850 = vst [vmem:[%s136 + $0x10] sm:$0xff] %v1818
        %1851 = vst [vmem:[%s136 + $0x18] sm:$0xff] %v1819
        %1852 = vst [vmem:[%s136 + $0x20] sm:$0xff] %v1820
        %1853 = vst [vmem:[%s136 + $0x28] sm:$0xff] %v1821
        %1854 = vst [vmem:[%s136 + $0x30] sm:$0xff] %v1822
        %1855 = vst [vmem:[%s136 + $0x38] sm:$0xff] %v1823
        %1856 = vst [vmem:[%s136 + $0x40] sm:$0xff] %v1824
        %1857 = vst [vmem:[%s136 + $0x48] sm:$0xff] %v1825
        %1858 = vst [vmem:[%s136 + $0x50] sm:$0xff] %v1826
        %1859 = vst [vmem:[%s136 + $0x58] sm:$0xff] %v1827
        %1860 = vst [vmem:[%s136 + $0x60] sm:$0xff] %v1828
        %1861 = vst [vmem:[%s136 + $0x68] sm:$0xff] %v1829
        %1862 = vst [vmem:[%s136 + $0x70] sm:$0xff] %v1830
        %1863 = vst [vmem:[%s136 + $0x78] sm:$0xff] %v1831
        %1864 = vst [vmem:[%s136 + $0x80] sm:$0xff] %v1832
        %1865 = vst [vmem:[%s136 + $0x88] sm:$0xff] %v1833
        %1866 = vst [vmem:[%s136 + $0x90] sm:$0xff] %v1834
        %1867 = vst [vmem:[%s136 + $0x98] sm:$0xff] %v1835
        %1868 = vst [vmem:[%s136 + $0xa0] sm:$0xff] %v1836
        %1869 = vst [vmem:[%s136 + $0xa8] sm:$0xff] %v1837
        %1870 = vst [vmem:[%s136 + $0xb0] sm:$0xff] %v1838
        %1871 = vst [vmem:[%s136 + $0xb8] sm:$0xff] %v1839
        %1872 = vst [vmem:[%s136 + $0xc0] sm:$0xff] %v1840
        %1873 = vst [vmem:[%s136 + $0xc8] sm:$0xff] %v1841
        %1874 = vst [vmem:[%s136 + $0xd0] sm:$0xff] %v1842
        %1875 = vst [vmem:[%s136 + $0xd8] sm:$0xff] %v1843
        %1876 = vst [vmem:[%s136 + $0xe0] sm:$0xff] %v1844
        %1877 = vst [vmem:[%s136 + $0xe8] sm:$0xff] %v1845
        %1878 = vst [vmem:[%s136 + $0xf0] sm:$0xff] %v1846
        %1879 = vst [vmem:[%s136 + $0xf8] sm:$0xff] %v1847
        %s1880 = sand.u32 %s81, 1
        %s1881 = scalar_lea.sflag [#allocation5], %s1880
        %s1882 = sand.u32 %s81, 1
        %s1883 = smul.addr %s1882, 256
        %s1884 = scalar_lea.vmem [#allocation4], %s1883
        // Predicated region
        $region81: #{tpu_custom_call.1} parent=27 // pred_check
          %p1885 = pneg %p91
        $region82: #{tpu_custom_call.1} parent=27 // pred_check_branch
          %1887 = sbr.rel (%p1885) target = $region84
        $region83: #{tpu_custom_call.1} parent=27 // pred_region
          %s1888 = smul.u32 16, %s22
          %1890 = vsyncadd %s1881, 0
          %s1891 = smul.addr %s1888, 2
          %s1892 = smul.addr %s21, 32
          %s1893 = sadd.s32 %s1891, %s1892
          %s1894 = smul.addr %s1893, 8
          %s1895 = scalar_lea.hbm %s3, %s1894
          %s1896 = sshll.u32 %s1884, 4
          %s1897 = int_to_ptr.vmem [resolvable:$true] %s1896
          %s1898 = sshll.u32 %s1895, 4
          %s1899 = int_to_ptr.hbm [resolvable:$true] %s1898
          %1904 = dma.vmem_to_hbm [thread:$0]  %s1897, 4096, %s1899, %s1881, 128, 128, 8
        $region84: #{tpu_custom_call.1} parent=27 // pred_fallthru
          _
      $region28: #{tpu_custom_call.1} parent=5 // pred_fallthru
        _
      %p1905 = scmp.le.s32.totalorder 2, %s12
      // Predicated region
      $region85: #{tpu_custom_call.1} parent=5 // pred_check
        %p1906 = pneg %p1905
      $region86: #{tpu_custom_call.1} parent=5 // pred_check_branch
        %1908 = sbr.rel (%p1906) target = $region88
      $region87: #{tpu_custom_call.1} parent=5 // pred_region
        %s1909 = ssub.s32 %s12, 2
        // Predicated region
        $region89: #{tpu_custom_call.1} parent=87 // pred_check
          %p1910 = pneg %p97
        $region90: #{tpu_custom_call.1} parent=87 // pred_check_branch
          %1912 = sbr.rel (%p1910) target = $region92
        $region91: #{tpu_custom_call.1} parent=87 // pred_region
          %s1913 = sand.u32 %s82, 1
          %s1914 = scalar_lea.sflag [#allocation5], %s1913
          %s1915 = sand.u32 %s82, 1
          %s1916 = smul.addr %s1915, 256
          %s1917 = scalar_lea.vmem [#allocation4], %s1916
          %1919 = dma.done %s1914, 4096
        $region92: #{tpu_custom_call.1} parent=87 // pred_fallthru
          _
      $region88: #{tpu_custom_call.1} parent=5 // pred_fallthru
        _
    $region6: #{tpu_custom_call.1} parent=1 // loop_footer
      %s16 = sadd.s32 1, %s12
    $region7: #{tpu_custom_call.1} parent=1 // loop_footer_branch
      %11 = sbr.rel target = $region3
    $region8: #{tpu_custom_call.1} parent=1 // loop_exit
      _
    %1920 = vsyncpa [#allocation5], 1
    %s1921 = scalar_lea.sflag [#allocation5], 1
    %1922 = vsyncpa %s1921, 1
  %1923 = vsyncmov [#allocation3]
  %s1924 = vpop.sfrf %1923
  %p1925 = scmp.eq.s32.totalorder %s1924, 0
  %p1926 = pneg %p1925
  %1928 = shalt.err (%p1926)
  %s1929 = scalar_lea.sflag [#allocation3], 1
  %1930 = vsyncmov %s1929
  %s1931 = vpop.sfrf %1930
  %p1932 = scmp.eq.s32.totalorder %s1931, 0
  %p1933 = pneg %p1932
  %1935 = shalt.err (%p1933)

// kernel: tpu_custom_call.1
$region0: #{tpu_custom_call.1}
  #allocation0 [shape = 'u32[]', space=smem, size = 0x4, offset = 0x4, fixed_abs, tag = 'smem constant byte address 0x4 - core index']
  #allocation1 [shape = 'u32[72,128]{1,0:T(1,128)}', space=vmem, size = 0x9000, scoped, tag = 'internal scratch']
  #allocation2 [shape = 'f32[2,18,18,128]{3,2,1,0:T(8,128)}', space=vmem, size = 0x6c000, scoped, tag = 'scratch operand']
  #allocation3 [shape = 's32[2]{0}', space=sflag, size = 0x8, scoped, tag = 'scratch operand']
  #allocation6 [shape = 's32[]', space=sflag, size = 0x4, offset = 0, fixed_abs, tag = 'sflag constant byte address 0x0 - dummy sync flag']
  #allocation7 [shape = 's32[]', space=sflag, size = 0x4, offset = 0, fixed_abs, tag = 'sflag constant byte address 0x0 - dummy sync flag']
  %s0 = inlined_call_operand.vmem [shape: f32[2,18,18,128], index: 0, kind: input, shape index: {}]
  %s1 = inlined_call_operand.vmem [shape: f32[3,384,128], index: 1, kind: input, shape index: {}]
  %s2 = inlined_call_operand.vmem [shape: f32[2,128], index: 2, kind: input, shape index: {}]
  %s3 = inlined_call_operand.hbm [shape: f32[2,16,16,128], index: 3, kind: output, shape index: {}]
  %s4 = sld [smem:[#allocation0]]
  $region93: #{tpu_custom_call.1} parent=0
    _
  %s6 = ssub.s32 1, %s4
  %s7 = scalar_select 0, %s6, %s4
  $region1: #{tpu_custom_call.1} parent=0
    #allocation4 [shape = 'u8[262144]{0}', space=vmem, size = 0x40000, scoped, tag = 'output window, operand 0']
    #allocation5 [shape = 's32[2]{0}', space=sflag, size = 0x8, scoped, tag = 'scoped memory for tpu_custom_call.1']
    %8 = vsyncpa [#allocation5], 0
    %s9 = scalar_lea.sflag [#allocation5], 1
    %10 = vsyncpa %s9, 0
    loop: start=0, step=1, limit=4
    $region2: #{tpu_custom_call.1} parent=1 // loop_pre_header
      _
    $region3: #{tpu_custom_call.1} parent=1 // loop_header
      %s12 = sphi 0, %s16
      %p13 = scmp.ge.s32.totalorder %s12, 4
      %s19 = sphi 0, %s31
      %s20 = sphi 0, %s27
      %s21 = sphi 0, %s19
      %s22 = sphi 0, %s20
      %s23 = sphi 0, %s21
      %s24 = sphi 0, %s22
      %s32 = sphi 0, %s32
      %s34 = sphi 0, %s32
      %s35 = sphi 0, %s34
      %s49 = sphi 0, %s35
      %s53 = sphi 0, %s53
      %s55 = sphi 0, %s53
      %s56 = sphi 0, %s55
      %s70 = sphi 0, %s56
      %s78 = sphi 0, %s80
      %s81 = sphi 0, %s78
      %s82 = sphi 0, %s81
      %s98 = sphi 0, %s82
    $region4: #{tpu_custom_call.1} parent=1 // loop_header_branch
      %15 = sbr.rel (%p13) target = $region8
    $region5: #{tpu_custom_call.1} parent=1 // loop_body
      %s17 = ssub.s32 %s12, 1
      %s18 = ssub.s32 %s12, 2
      %s25 = sadd.s32 1, %s20
      %p26 = scmp.ge.s32.totalorder %s25, 1
      %s27 = scalar_select %p26, 0, %s25
      %s28 = sadd.s32 1, %s19
      %s29 = scalar_select %p26, %s28, %s19
      %p30 = scmp.ge.s32.totalorder %s29, 2
      %s31 = scalar_select %p30, 0, %s29
      %s33 = sadd.s32 %s32, 1
      %p36 = scmp.eq.s32.totalorder %s12, 1
      %p37 = scmp.ne.s32.totalorder %s32, %s34
      %p38 = scmp.eq.s32.totalorder %s12, 0
      %p39 = por %p37, %p38
      %p40 = scmp.ne.s32.totalorder %s32, %s34
      %p41 = scmp.eq.s32.totalorder %s17, 1
      %p42 = por %p40, %p41
      %p43 = scmp.ne.s32.totalorder %s34, %s35
      %p44 = scmp.eq.s32.totalorder %s17, 0
      %p45 = por %p43, %p44
      %p46 = scmp.ne.s32.totalorder %s34, %s35
      %p47 = scmp.eq.s32.totalorder %s18, 1
      %p48 = por %p46, %p47
      %p50 = scmp.ne.s32.totalorder %s35, %s49
      %p51 = scmp.eq.s32.totalorder %s18, 0
      %p52 = por %p50, %p51
      %s54 = sadd.s32 %s53, 1
      %p57 = scmp.eq.s32.totalorder %s12, 1
      %p58 = scmp.ne.s32.totalorder %s53, %s55
      %p59 = scmp.eq.s32.totalorder %s12, 0
      %p60 = por %p58, %p59
      %p61 = scmp.ne.s32.totalorder %s53, %s55
      %p62 = scmp.eq.s32.totalorder %s17, 1
      %p63 = por %p61, %p62
      %p64 = scmp.ne.s32.totalorder %s55, %s56
      %p65 = scmp.eq.s32.totalorder %s17, 0
      %p66 = por %p64, %p65
      %p67 = scmp.ne.s32.totalorder %s55, %s56
      %p68 = scmp.eq.s32.totalorder %s18, 1
      %p69 = por %p67, %p68
      %p71 = scmp.ne.s32.totalorder %s56, %s70
      %p72 = scmp.eq.s32.totalorder %s18, 0
      %p73 = por %p71, %p72
      %s74 = ssub.s32 %s19, %s31
      %s75 = ssub.s32 %s20, %s27
      %s76 = sor.u32 %s74, %s75
      %p77 = scmp.eq.s32.totalorder %s76, 0
      %s79 = sadd.s32 %s78, 1
      %s80 = scalar_select %p77, %s78, %s79
      %p83 = pneg %p77
      %p84 = scmp.eq.s32.totalorder %s12, 1
      %p85 = por %p83, %p84
      %p86 = scmp.ne.s32.totalorder %s78, %s81
      %p87 = scmp.eq.s32.totalorder %s12, 0
      %p88 = por %p86, %p87
      %p89 = scmp.ne.s32.totalorder %s78, %s81
      %p90 = scmp.eq.s32.totalorder %s17, 1
      %p91 = por %p89, %p90
      %p92 = scmp.ne.s32.totalorder %s81, %s82
      %p93 = scmp.eq.s32.totalorder %s17, 0
      %p94 = por %p92, %p93
      %p95 = scmp.ne.s32.totalorder %s81, %s82
      %p96 = scmp.eq.s32.totalorder %s18, 1
      %p97 = por %p95, %p96
      %p99 = scmp.ne.s32.totalorder %s82, %s98
      %p100 = scmp.eq.s32.totalorder %s18, 0
      %p101 = por %p99, %p100
      %p102 = scmp.le.s32.totalorder 1, %s12
      %p103 = scmp.lt.s32.totalorder %s12, 3
      %p104 = pnand %p102, %p103
      %p105 = pneg %p104
      // Predicated region
      $region9: #{tpu_custom_call.1} parent=5 // pred_check
        _
      $region10: #{tpu_custom_call.1} parent=5 // pred_check_branch
        %107 = sbr.rel (%p104) target = $region12
      $region11: #{tpu_custom_call.1} parent=5 // pred_region
        %s108 = ssub.s32 %s12, 1
        // Predicated region
        $region13: #{tpu_custom_call.1} parent=11 // pred_check
          %p109 = pneg %p45
        $region14: #{tpu_custom_call.1} parent=11 // pred_check_branch
          %111 = sbr.rel (%p109) target = $region16
        $region15: #{tpu_custom_call.1} parent=11 // pred_region
          _
        $region16: #{tpu_custom_call.1} parent=11 // pred_fallthru
          _
        // Predicated region
        $region17: #{tpu_custom_call.1} parent=11 // pred_check
          %p112 = pneg %p66
        $region18: #{tpu_custom_call.1} parent=11 // pred_check_branch
          %114 = sbr.rel (%p112) target = $region20
        $region19: #{tpu_custom_call.1} parent=11 // pred_region
          _
        $region20: #{tpu_custom_call.1} parent=11 // pred_fallthru
          _
      $region12: #{tpu_custom_call.1} parent=5 // pred_fallthru
        _
      %p115 = scmp.lt.s32.totalorder %s12, 2
      // Predicated region
      $region21: #{tpu_custom_call.1} parent=5 // pred_check
        %p116 = pneg %p115
      $region22: #{tpu_custom_call.1} parent=5 // pred_check_branch
        %118 = sbr.rel (%p116) target = $region24
      $region23: #{tpu_custom_call.1} parent=5 // pred_region
        _
      $region24: #{tpu_custom_call.1} parent=5 // pred_fallthru
        _
      %p119 = scmp.le.s32.totalorder 1, %s12
      %p120 = scmp.lt.s32.totalorder %s12, 3
      %p121 = pnand %p119, %p120
      %p122 = pneg %p121
      // Predicated region
      $region25: #{tpu_custom_call.1} parent=5 // pred_check
        _
      $region26: #{tpu_custom_call.1} parent=5 // pred_check_branch
        %124 = sbr.rel (%p121) target = $region28
      $region27: #{tpu_custom_call.1} parent=5 // pred_region
        %s125 = ssub.s32 %s12, 1
        %p126 = pneg %p45
        %p127 = pneg %p42
        %p128 = pneg %p66
        %p129 = pneg %p63
        %p130 = pneg %p94
        %p131 = pneg %p91
        %s132 = sand.u32 %s81, 1
        %s133 = scalar_lea.sflag [#allocation5], %s132
        %s134 = sand.u32 %s81, 1
        %s135 = smul.addr %s134, 256
        %s136 = scalar_lea.vmem [#allocation4], %s135
        %s137 = smul.u32 16, %s22
        %p138 = scmp.lt.s32.totalorder %s22, 0
        %s139 = ssub.s32 0, %s22
        %s140 = scalar_select %p138, %s139, %s22
        %s141 = sand.u32 %s140, 1
        %s142 = ssub.s32 0, %s141
        %s143 = scalar_select %p138, %s142, %s141
        %p144 = scmp.ne.s32.totalorder %s143, 0
        %p145 = scmp.lt.s32.totalorder %s143, 0
        %p146 = pnand %p145, %p144
        %p147 = pneg %p146
        %s148 = sadd.s32 %s143, 2
        %s149 = scalar_select %p147, %s148, %s143
        %p150 = scmp.eq.s32.totalorder %s22, 0
        // Predicated region
        $region29: #{tpu_custom_call.1} parent=27 // pred_check
          %p151 = pneg %p150
        $region30: #{tpu_custom_call.1} parent=27 // pred_check_branch
          %153 = sbr.rel (%p151) target = $region32
        $region31: #{tpu_custom_call.1} parent=27 // pred_region
          %s154 = smul.u32 %s21, 432
          %s155 = scalar_lea.vmem %s0, %s154
          // Predicated region
          $region33: #{tpu_custom_call.1} parent=31 // pred_check
            _
          $region34: #{tpu_custom_call.1} parent=31 // pred_check_branch
            %157 = sbr.rel (0) target = $region36
          $region35: #{tpu_custom_call.1} parent=31 // pred_region
            %s158 = scalar_lea.vmem %s155, 16
            %s159 = scalar_lea.vmem [#allocation2], 16
            loop: start=0, step=1, limit=1
            $region37: #{tpu_custom_call.1} parent=35 // loop_pre_header
              _
            $region38: #{tpu_custom_call.1} parent=35 // loop_header
              %s161 = sphi 0, %s165
              %p162 = scmp.ge.s32.totalorder %s161, 1
              %s166 = sphi %s155, %s155
              %s167 = sphi [#allocation2], [#allocation2]
            $region39: #{tpu_custom_call.1} parent=35 // loop_header_branch
              %164 = sbr.rel (%p162) target = $region43
            $region40: #{tpu_custom_call.1} parent=35 // loop_body
              %v168 = vld [vmem:[%s166] sm:$0xff]
              %169 = vst [vmem:[%s167] sm:$0xff] %v168
              %v170 = vld [vmem:[%s166 + $0x8] sm:$0xff]
              %171 = vst [vmem:[%s167 + $0x8] sm:$0xff] %v170
              %v172 = vld [vmem:[%s166 + $0x18] sm:$0xff]
              %173 = vst [vmem:[%s167 + $0x18] sm:$0xff] %v172
              %v174 = vld [vmem:[%s166 + $0x20] sm:$0xff]
              %175 = vst [vmem:[%s167 + $0x20] sm:$0xff] %v174
              %v176 = vld [vmem:[%s166 + $0x30] sm:$0xff]
              %177 = vst [vmem:[%s167 + $0x30] sm:$0xff] %v176
              %v178 = vld [vmem:[%s166 + $0x38] sm:$0xff]
              %179 = vst [vmem:[%s167 + $0x38] sm:$0xff] %v178
              %v180 = vld [vmem:[%s166 + $0x48] sm:$0xff]
              %181 = vst [vmem:[%s167 + $0x48] sm:$0xff] %v180
              %v182 = vld [vmem:[%s166 + $0x50] sm:$0xff]
              %183 = vst [vmem:[%s167 + $0x50] sm:$0xff] %v182
              %v184 = vld [vmem:[%s166 + $0x60] sm:$0xff]
              %185 = vst [vmem:[%s167 + $0x60] sm:$0xff] %v184
              %v186 = vld [vmem:[%s166 + $0x68] sm:$0xff]
              %187 = vst [vmem:[%s167 + $0x68] sm:$0xff] %v186
              %v188 = vld [vmem:[%s166 + $0x78] sm:$0xff]
              %189 = vst [vmem:[%s167 + $0x78] sm:$0xff] %v188
              %v190 = vld [vmem:[%s166 + $0x80] sm:$0xff]
              %191 = vst [vmem:[%s167 + $0x80] sm:$0xff] %v190
              %v192 = vld [vmem:[%s166 + $0x90] sm:$0xff]
              %193 = vst [vmem:[%s167 + $0x90] sm:$0xff] %v192
              %v194 = vld [vmem:[%s166 + $0x98] sm:$0xff]
              %195 = vst [vmem:[%s167 + $0x98] sm:$0xff] %v194
              %v196 = vld [vmem:[%s166 + $0xa8] sm:$0xff]
              %197 = vst [vmem:[%s167 + $0xa8] sm:$0xff] %v196
              %v198 = vld [vmem:[%s166 + $0xb0] sm:$0xff]
              %199 = vst [vmem:[%s167 + $0xb0] sm:$0xff] %v198
              %v200 = vld [vmem:[%s166 + $0xc0] sm:$0xff]
              %201 = vst [vmem:[%s167 + $0xc0] sm:$0xff] %v200
              %v202 = vld [vmem:[%s166 + $0xc8] sm:$0xff]
              %203 = vst [vmem:[%s167 + $0xc8] sm:$0xff] %v202
              %v204 = vld [vmem:[%s166 + $0xd8] sm:$0xff]
              %205 = vst [vmem:[%s167 + $0xd8] sm:$0xff] %v204
              %v206 = vld [vmem:[%s166 + $0xe0] sm:$0xff]
              %207 = vst [vmem:[%s167 + $0xe0] sm:$0xff] %v206
              %v208 = vld [vmem:[%s166 + $0xf0] sm:$0xff]
              %209 = vst [vmem:[%s167 + $0xf0] sm:$0xff] %v208
              %v210 = vld [vmem:[%s166 + $0xf8] sm:$0xff]
              %211 = vst [vmem:[%s167 + $0xf8] sm:$0xff] %v210
              %v212 = vld [vmem:[%s166 + $0x108] sm:$0xff]
              %213 = vst [vmem:[%s167 + $0x108] sm:$0xff] %v212
              %v214 = vld [vmem:[%s166 + $0x110] sm:$0xff]
              %215 = vst [vmem:[%s167 + $0x110] sm:$0xff] %v214
              %v216 = vld [vmem:[%s166 + $0x120] sm:$0xff]
              %217 = vst [vmem:[%s167 + $0x120] sm:$0xff] %v216
              %v218 = vld [vmem:[%s166 + $0x128] sm:$0xff]
              %219 = vst [vmem:[%s167 + $0x128] sm:$0xff] %v218
              %v220 = vld [vmem:[%s166 + $0x138] sm:$0xff]
              %221 = vst [vmem:[%s167 + $0x138] sm:$0xff] %v220
              %v222 = vld [vmem:[%s166 + $0x140] sm:$0xff]
              %223 = vst [vmem:[%s167 + $0x140] sm:$0xff] %v222
              %v224 = vld [vmem:[%s166 + $0x150] sm:$0xff]
              %225 = vst [vmem:[%s167 + $0x150] sm:$0xff] %v224
              %v226 = vld [vmem:[%s166 + $0x158] sm:$0xff]
              %227 = vst [vmem:[%s167 + $0x158] sm:$0xff] %v226
              %v228 = vld [vmem:[%s166 + $0x168] sm:$0xff]
              %229 = vst [vmem:[%s167 + $0x168] sm:$0xff] %v228
              %v230 = vld [vmem:[%s166 + $0x170] sm:$0xff]
              %231 = vst [vmem:[%s167 + $0x170] sm:$0xff] %v230
              %v232 = vld [vmem:[%s166 + $0x180] sm:$0xff]
              %233 = vst [vmem:[%s167 + $0x180] sm:$0xff] %v232
              %v234 = vld [vmem:[%s166 + $0x188] sm:$0xff]
              %235 = vst [vmem:[%s167 + $0x188] sm:$0xff] %v234
              %v236 = vld [vmem:[%s166 + $0x198] sm:$0xff]
              %237 = vst [vmem:[%s167 + $0x198] sm:$0xff] %v236
              %v238 = vld [vmem:[%s166 + $0x1a0] sm:$0xff]
              %239 = vst [vmem:[%s167 + $0x1a0] sm:$0xff] %v238
            $region41: #{tpu_custom_call.1} parent=35 // loop_footer
              %s165 = sadd.s32 1, %s161
            $region42: #{tpu_custom_call.1} parent=35 // loop_footer_branch
              %160 = sbr.rel target = $region38
            $region43: #{tpu_custom_call.1} parent=35 // loop_exit
              _
            %s241 = ssub.s32 4, 1
            loop: start=0, step=1, limit=1
            $region44: #{tpu_custom_call.1} parent=35 // loop_pre_header
              _
            $region45: #{tpu_custom_call.1} parent=35 // loop_header
              %s243 = sphi 0, %s247
              %p244 = scmp.ge.s32.totalorder %s243, 1
              %s248 = sphi %s158, %s158
              %s249 = sphi %s159, %s159
            $region46: #{tpu_custom_call.1} parent=35 // loop_header_branch
              %246 = sbr.rel (%p244) target = $region50
            $region47: #{tpu_custom_call.1} parent=35 // loop_body
              %v250 = vld [vmem:[%s248] sm:%s241]
              %251 = vst [vmem:[%s249] sm:%s241] %v250
              %v252 = vld [vmem:[%s248 + $0x18] sm:%s241]
              %253 = vst [vmem:[%s249 + $0x18] sm:%s241] %v252
              %v254 = vld [vmem:[%s248 + $0x30] sm:%s241]
              %255 = vst [vmem:[%s249 + $0x30] sm:%s241] %v254
              %v256 = vld [vmem:[%s248 + $0x48] sm:%s241]
              %257 = vst [vmem:[%s249 + $0x48] sm:%s241] %v256
              %v258 = vld [vmem:[%s248 + $0x60] sm:%s241]
              %259 = vst [vmem:[%s249 + $0x60] sm:%s241] %v258
              %v260 = vld [vmem:[%s248 + $0x78] sm:%s241]
              %261 = vst [vmem:[%s249 + $0x78] sm:%s241] %v260
              %v262 = vld [vmem:[%s248 + $0x90] sm:%s241]
              %263 = vst [vmem:[%s249 + $0x90] sm:%s241] %v262
              %v264 = vld [vmem:[%s248 + $0xa8] sm:%s241]
              %265 = vst [vmem:[%s249 + $0xa8] sm:%s241] %v264
              %v266 = vld [vmem:[%s248 + $0xc0] sm:%s241]
              %267 = vst [vmem:[%s249 + $0xc0] sm:%s241] %v266
              %v268 = vld [vmem:[%s248 + $0xd8] sm:%s241]
              %269 = vst [vmem:[%s249 + $0xd8] sm:%s241] %v268
              %v270 = vld [vmem:[%s248 + $0xf0] sm:%s241]
              %271 = vst [vmem:[%s249 + $0xf0] sm:%s241] %v270
              %v272 = vld [vmem:[%s248 + $0x108] sm:%s241]
              %273 = vst [vmem:[%s249 + $0x108] sm:%s241] %v272
              %v274 = vld [vmem:[%s248 + $0x120] sm:%s241]
              %275 = vst [vmem:[%s249 + $0x120] sm:%s241] %v274
              %v276 = vld [vmem:[%s248 + $0x138] sm:%s241]
              %277 = vst [vmem:[%s249 + $0x138] sm:%s241] %v276
              %v278 = vld [vmem:[%s248 + $0x150] sm:%s241]
              %279 = vst [vmem:[%s249 + $0x150] sm:%s241] %v278
              %v280 = vld [vmem:[%s248 + $0x168] sm:%s241]
              %281 = vst [vmem:[%s249 + $0x168] sm:%s241] %v280
              %v282 = vld [vmem:[%s248 + $0x180] sm:%s241]
              %283 = vst [vmem:[%s249 + $0x180] sm:%s241] %v282
              %v284 = vld [vmem:[%s248 + $0x198] sm:%s241]
              %285 = vst [vmem:[%s249 + $0x198] sm:%s241] %v284
            $region48: #{tpu_custom_call.1} parent=35 // loop_footer
              %s247 = sadd.s32 1, %s243
            $region49: #{tpu_custom_call.1} parent=35 // loop_footer_branch
              %242 = sbr.rel target = $region45
            $region50: #{tpu_custom_call.1} parent=35 // loop_exit
              _
          $region36: #{tpu_custom_call.1} parent=31 // pred_fallthru
            _
          // Predicated region
          $region51: #{tpu_custom_call.1} parent=31 // pred_check
            _
          $region52: #{tpu_custom_call.1} parent=31 // pred_check_branch
            %288 = sbr.rel (0) target = $region54
          $region53: #{tpu_custom_call.1} parent=31 // pred_region
            %289 = vsyncadd [#allocation3], 5184
          $region54: #{tpu_custom_call.1} parent=31 // pred_fallthru
            _
        $region32: #{tpu_custom_call.1} parent=27 // pred_fallthru
          _
        %s290 = smul.u32 %s149, 432
        %s291 = scalar_lea.vmem [#allocation2], %s290
        %s292 = scalar_lea.sflag [#allocation3], %s149
        %s293 = smul.u32 18, 18
        %s294 = smul.u32 %s293, 1
        %s295 = sshll.u32 %s294, 4
        %296 = dma.done %s292, %s295
        %s297 = sadd.s32 %s22, 1
        %p298 = scmp.lt.s32.totalorder %s297, 1
        // Predicated region
        $region55: #{tpu_custom_call.1} parent=27 // pred_check
          %p299 = pneg %p298
        $region56: #{tpu_custom_call.1} parent=27 // pred_check_branch
          %301 = sbr.rel (%p299) target = $region58
        $region57: #{tpu_custom_call.1} parent=27 // pred_region
          %s302 = ssub.s32 1, %s149
          %s303 = smul.u32 %s297, 16
          %s304 = smul.u32 %s303, 24
          %s305 = smul.u32 %s21, 432
          %s306 = sadd.s32 %s304, %s305
          %s307 = scalar_lea.vmem %s0, %s306
          %s308 = smul.u32 %s302, 432
          %s309 = scalar_lea.vmem [#allocation2], %s308
          %s310 = scalar_lea.sflag [#allocation3], %s302
          // Predicated region
          $region59: #{tpu_custom_call.1} parent=57 // pred_check
            _
          $region60: #{tpu_custom_call.1} parent=57 // pred_check_branch
            %312 = sbr.rel (0) target = $region62
          $region61: #{tpu_custom_call.1} parent=57 // pred_region
            %s313 = scalar_lea.vmem %s307, 16
            %s314 = scalar_lea.vmem %s309, 16 [#allocation2]
            loop: start=0, step=1, limit=1
            $region63: #{tpu_custom_call.1} parent=61 // loop_pre_header
              _
            $region64: #{tpu_custom_call.1} parent=61 // loop_header
              %s316 = sphi 0, %s320
              %p317 = scmp.ge.s32.totalorder %s316, 1
              %s321 = sphi %s307, %s307
              %s322 = sphi %s309, %s309
            $region65: #{tpu_custom_call.1} parent=61 // loop_header_branch
              %319 = sbr.rel (%p317) target = $region69
            $region66: #{tpu_custom_call.1} parent=61 // loop_body
              %v323 = vld [vmem:[%s321] sm:$0xff]
              %324 = vst [vmem:[%s322] sm:$0xff] %v323
              %v325 = vld [vmem:[%s321 + $0x8] sm:$0xff]
              %326 = vst [vmem:[%s322 + $0x8] sm:$0xff] %v325
              %v327 = vld [vmem:[%s321 + $0x18] sm:$0xff]
              %328 = vst [vmem:[%s322 + $0x18] sm:$0xff] %v327
              %v329 = vld [vmem:[%s321 + $0x20] sm:$0xff]
              %330 = vst [vmem:[%s322 + $0x20] sm:$0xff] %v329
              %v331 = vld [vmem:[%s321 + $0x30] sm:$0xff]
              %332 = vst [vmem:[%s322 + $0x30] sm:$0xff] %v331
              %v333 = vld [vmem:[%s321 + $0x38] sm:$0xff]
              %334 = vst [vmem:[%s322 + $0x38] sm:$0xff] %v333
              %v335 = vld [vmem:[%s321 + $0x48] sm:$0xff]
              %336 = vst [vmem:[%s322 + $0x48] sm:$0xff] %v335
              %v337 = vld [vmem:[%s321 + $0x50] sm:$0xff]
              %338 = vst [vmem:[%s322 + $0x50] sm:$0xff] %v337
              %v339 = vld [vmem:[%s321 + $0x60] sm:$0xff]
              %340 = vst [vmem:[%s322 + $0x60] sm:$0xff] %v339
              %v341 = vld [vmem:[%s321 + $0x68] sm:$0xff]
              %342 = vst [vmem:[%s322 + $0x68] sm:$0xff] %v341
              %v343 = vld [vmem:[%s321 + $0x78] sm:$0xff]
              %344 = vst [vmem:[%s322 + $0x78] sm:$0xff] %v343
              %v345 = vld [vmem:[%s321 + $0x80] sm:$0xff]
              %346 = vst [vmem:[%s322 + $0x80] sm:$0xff] %v345
              %v347 = vld [vmem:[%s321 + $0x90] sm:$0xff]
              %348 = vst [vmem:[%s322 + $0x90] sm:$0xff] %v347
              %v349 = vld [vmem:[%s321 + $0x98] sm:$0xff]
              %350 = vst [vmem:[%s322 + $0x98] sm:$0xff] %v349
              %v351 = vld [vmem:[%s321 + $0xa8] sm:$0xff]
              %352 = vst [vmem:[%s322 + $0xa8] sm:$0xff] %v351
              %v353 = vld [vmem:[%s321 + $0xb0] sm:$0xff]
              %354 = vst [vmem:[%s322 + $0xb0] sm:$0xff] %v353
              %v355 = vld [vmem:[%s321 + $0xc0] sm:$0xff]
              %356 = vst [vmem:[%s322 + $0xc0] sm:$0xff] %v355
              %v357 = vld [vmem:[%s321 + $0xc8] sm:$0xff]
              %358 = vst [vmem:[%s322 + $0xc8] sm:$0xff] %v357
              %v359 = vld [vmem:[%s321 + $0xd8] sm:$0xff]
              %360 = vst [vmem:[%s322 + $0xd8] sm:$0xff] %v359
              %v361 = vld [vmem:[%s321 + $0xe0] sm:$0xff]
              %362 = vst [vmem:[%s322 + $0xe0] sm:$0xff] %v361
              %v363 = vld [vmem:[%s321 + $0xf0] sm:$0xff]
              %364 = vst [vmem:[%s322 + $0xf0] sm:$0xff] %v363
              %v365 = vld [vmem:[%s321 + $0xf8] sm:$0xff]
              %366 = vst [vmem:[%s322 + $0xf8] sm:$0xff] %v365
              %v367 = vld [vmem:[%s321 + $0x108] sm:$0xff]
              %368 = vst [vmem:[%s322 + $0x108] sm:$0xff] %v367
              %v369 = vld [vmem:[%s321 + $0x110] sm:$0xff]
              %370 = vst [vmem:[%s322 + $0x110] sm:$0xff] %v369
              %v371 = vld [vmem:[%s321 + $0x120] sm:$0xff]
              %372 = vst [vmem:[%s322 + $0x120] sm:$0xff] %v371
              %v373 = vld [vmem:[%s321 + $0x128] sm:$0xff]
              %374 = vst [vmem:[%s322 + $0x128] sm:$0xff] %v373
              %v375 = vld [vmem:[%s321 + $0x138] sm:$0xff]
              %376 = vst [vmem:[%s322 + $0x138] sm:$0xff] %v375
              %v377 = vld [vmem:[%s321 + $0x140] sm:$0xff]
              %378 = vst [vmem:[%s322 + $0x140] sm:$0xff] %v377
              %v379 = vld [vmem:[%s321 + $0x150] sm:$0xff]
              %380 = vst [vmem:[%s322 + $0x150] sm:$0xff] %v379
              %v381 = vld [vmem:[%s321 + $0x158] sm:$0xff]
              %382 = vst [vmem:[%s322 + $0x158] sm:$0xff] %v381
              %v383 = vld [vmem:[%s321 + $0x168] sm:$0xff]
              %384 = vst [vmem:[%s322 + $0x168] sm:$0xff] %v383
              %v385 = vld [vmem:[%s321 + $0x170] sm:$0xff]
              %386 = vst [vmem:[%s322 + $0x170] sm:$0xff] %v385
              %v387 = vld [vmem:[%s321 + $0x180] sm:$0xff]
              %388 = vst [vmem:[%s322 + $0x180] sm:$0xff] %v387
              %v389 = vld [vmem:[%s321 + $0x188] sm:$0xff]
              %390 = vst [vmem:[%s322 + $0x188] sm:$0xff] %v389
              %v391 = vld [vmem:[%s321 + $0x198] sm:$0xff]
              %392 = vst [vmem:[%s322 + $0x198] sm:$0xff] %v391
              %v393 = vld [vmem:[%s321 + $0x1a0] sm:$0xff]
              %394 = vst [vmem:[%s322 + $0x1a0] sm:$0xff] %v393
            $region67: #{tpu_custom_call.1} parent=61 // loop_footer
              %s320 = sadd.s32 1, %s316
            $region68: #{tpu_custom_call.1} parent=61 // loop_footer_branch
              %315 = sbr.rel target = $region64
            $region69: #{tpu_custom_call.1} parent=61 // loop_exit
              _
            %s396 = ssub.s32 4, 1
            loop: start=0, step=1, limit=1
            $region70: #{tpu_custom_call.1} parent=61 // loop_pre_header
              _
            $region71: #{tpu_custom_call.1} parent=61 // loop_header
              %s398 = sphi 0, %s402
              %p399 = scmp.ge.s32.totalorder %s398, 1
              %s403 = sphi %s313, %s313
              %s404 = sphi %s314, %s314
            $region72: #{tpu_custom_call.1} parent=61 // loop_header_branch
              %401 = sbr.rel (%p399) target = $region76
            $region73: #{tpu_custom_call.1} parent=61 // loop_body
              %v405 = vld [vmem:[%s403] sm:%s396]
              %406 = vst [vmem:[%s404] sm:%s396] %v405
              %v407 = vld [vmem:[%s403 + $0x18] sm:%s396]
              %408 = vst [vmem:[%s404 + $0x18] sm:%s396] %v407
              %v409 = vld [vmem:[%s403 + $0x30] sm:%s396]
              %410 = vst [vmem:[%s404 + $0x30] sm:%s396] %v409
              %v411 = vld [vmem:[%s403 + $0x48] sm:%s396]
              %412 = vst [vmem:[%s404 + $0x48] sm:%s396] %v411
              %v413 = vld [vmem:[%s403 + $0x60] sm:%s396]
              %414 = vst [vmem:[%s404 + $0x60] sm:%s396] %v413
              %v415 = vld [vmem:[%s403 + $0x78] sm:%s396]
              %416 = vst [vmem:[%s404 + $0x78] sm:%s396] %v415
              %v417 = vld [vmem:[%s403 + $0x90] sm:%s396]
              %418 = vst [vmem:[%s404 + $0x90] sm:%s396] %v417
              %v419 = vld [vmem:[%s403 + $0xa8] sm:%s396]
              %420 = vst [vmem:[%s404 + $0xa8] sm:%s396] %v419
              %v421 = vld [vmem:[%s403 + $0xc0] sm:%s396]
              %422 = vst [vmem:[%s404 + $0xc0] sm:%s396] %v421
              %v423 = vld [vmem:[%s403 + $0xd8] sm:%s396]
              %424 = vst [vmem:[%s404 + $0xd8] sm:%s396] %v423
              %v425 = vld [vmem:[%s403 + $0xf0] sm:%s396]
              %426 = vst [vmem:[%s404 + $0xf0] sm:%s396] %v425
              %v427 = vld [vmem:[%s403 + $0x108] sm:%s396]
              %428 = vst [vmem:[%s404 + $0x108] sm:%s396] %v427
              %v429 = vld [vmem:[%s403 + $0x120] sm:%s396]
              %430 = vst [vmem:[%s404 + $0x120] sm:%s396] %v429
              %v431 = vld [vmem:[%s403 + $0x138] sm:%s396]
              %432 = vst [vmem:[%s404 + $0x138] sm:%s396] %v431
              %v433 = vld [vmem:[%s403 + $0x150] sm:%s396]
              %434 = vst [vmem:[%s404 + $0x150] sm:%s396] %v433
              %v435 = vld [vmem:[%s403 + $0x168] sm:%s396]
              %436 = vst [vmem:[%s404 + $0x168] sm:%s396] %v435
              %v437 = vld [vmem:[%s403 + $0x180] sm:%s396]
              %438 = vst [vmem:[%s404 + $0x180] sm:%s396] %v437
              %v439 = vld [vmem:[%s403 + $0x198] sm:%s396]
              %440 = vst [vmem:[%s404 + $0x198] sm:%s396] %v439
            $region74: #{tpu_custom_call.1} parent=61 // loop_footer
              %s402 = sadd.s32 1, %s398
            $region75: #{tpu_custom_call.1} parent=61 // loop_footer_branch
              %397 = sbr.rel target = $region71
            $region76: #{tpu_custom_call.1} parent=61 // loop_exit
              _
          $region62: #{tpu_custom_call.1} parent=57 // pred_fallthru
            _
          // Predicated region
          $region77: #{tpu_custom_call.1} parent=57 // pred_check
            _
          $region78: #{tpu_custom_call.1} parent=57 // pred_check_branch
            %443 = sbr.rel (0) target = $region80
          $region79: #{tpu_custom_call.1} parent=57 // pred_region
            %444 = vsyncadd %s310, 5184
          $region80: #{tpu_custom_call.1} parent=57 // pred_fallthru
            _
        $region58: #{tpu_custom_call.1} parent=27 // pred_fallthru
          _
        %v445 = vld [vmem:[%s291] sm:$0xff]
        %v446 = vld [vmem:[%s291 + $0x8] sm:$0xff]
        %v447 = vld [vmem:[%s291 + $0x18] sm:$0xff]
        %v448 = vld [vmem:[%s291 + $0x20] sm:$0xff]
        %v449 = vld [vmem:[%s291 + $0x30] sm:$0xff]
        %v450 = vld [vmem:[%s291 + $0x38] sm:$0xff]
        %v451 = vld [vmem:[%s291 + $0x48] sm:$0xff]
        %v452 = vld [vmem:[%s291 + $0x50] sm:$0xff]
        %v453 = vld [vmem:[%s291 + $0x60] sm:$0xff]
        %v454 = vld [vmem:[%s291 + $0x68] sm:$0xff]
        %v455 = vld [vmem:[%s291 + $0x78] sm:$0xff]
        %v456 = vld [vmem:[%s291 + $0x80] sm:$0xff]
        %v457 = vld [vmem:[%s291 + $0x90] sm:$0xff]
        %v458 = vld [vmem:[%s291 + $0x98] sm:$0xff]
        %v459 = vld [vmem:[%s291 + $0xa8] sm:$0xff]
        %v460 = vld [vmem:[%s291 + $0xb0] sm:$0xff]
        %v461 = vld [vmem:[%s291 + $0xc0] sm:$0xff]
        %v462 = vld [vmem:[%s291 + $0xc8] sm:$0xff]
        %v463 = vld [vmem:[%s291 + $0xd8] sm:$0xff]
        %v464 = vld [vmem:[%s291 + $0xe0] sm:$0xff]
        %v465 = vld [vmem:[%s291 + $0xf0] sm:$0xff]
        %v466 = vld [vmem:[%s291 + $0xf8] sm:$0xff]
        %v467 = vld [vmem:[%s291 + $0x108] sm:$0xff]
        %v468 = vld [vmem:[%s291 + $0x110] sm:$0xff]
        %v469 = vld [vmem:[%s291 + $0x120] sm:$0xff]
        %v470 = vld [vmem:[%s291 + $0x128] sm:$0xff]
        %v471 = vld [vmem:[%s291 + $0x138] sm:$0xff]
        %v472 = vld [vmem:[%s291 + $0x140] sm:$0xff]
        %v473 = vld [vmem:[%s291 + $0x150] sm:$0xff]
        %v474 = vld [vmem:[%s291 + $0x158] sm:$0xff]
        %v475 = vld [vmem:[%s291 + $0x168] sm:$0xff]
        %v476 = vld [vmem:[%s291 + $0x170] sm:$0xff]
        %v477 = vld [vmem:[%s291 + $0x180] sm:$0xff]
        %v478 = vld [vmem:[%s291 + $0x188] sm:$0xff]
        %v479 = vld [vmem:[%s291 + $0x198] sm:$0xff]
        %v480 = vld [vmem:[%s291 + $0x1a0] sm:$0xff]
        %v481 = vld [vmem:[%s291 + $0x1] sm:$0xff]
        %v482 = vld [vmem:[%s291 + $0x9] sm:$0xff]
        %v483 = vld [vmem:[%s291 + $0x19] sm:$0xff]
        %v484 = vld [vmem:[%s291 + $0x21] sm:$0xff]
        %v485 = vld [vmem:[%s291 + $0x31] sm:$0xff]
        %v486 = vld [vmem:[%s291 + $0x39] sm:$0xff]
        %v487 = vld [vmem:[%s291 + $0x49] sm:$0xff]
        %v488 = vld [vmem:[%s291 + $0x51] sm:$0xff]
        %v489 = vld [vmem:[%s291 + $0x61] sm:$0xff]
        %v490 = vld [vmem:[%s291 + $0x69] sm:$0xff]
        %v491 = vld [vmem:[%s291 + $0x79] sm:$0xff]
        %v492 = vld [vmem:[%s291 + $0x81] sm:$0xff]
        %v493 = vld [vmem:[%s291 + $0x91] sm:$0xff]
        %v494 = vld [vmem:[%s291 + $0x99] sm:$0xff]
        %v495 = vld [vmem:[%s291 + $0xa9] sm:$0xff]
        %v496 = vld [vmem:[%s291 + $0xb1] sm:$0xff]
        %v497 = vld [vmem:[%s291 + $0xc1] sm:$0xff]
        %v498 = vld [vmem:[%s291 + $0xc9] sm:$0xff]
        %v499 = vld [vmem:[%s291 + $0xd9] sm:$0xff]
        %v500 = vld [vmem:[%s291 + $0xe1] sm:$0xff]
        %v501 = vld [vmem:[%s291 + $0xf1] sm:$0xff]
        %v502 = vld [vmem:[%s291 + $0xf9] sm:$0xff]
        %v503 = vld [vmem:[%s291 + $0x109] sm:$0xff]
        %v504 = vld [vmem:[%s291 + $0x111] sm:$0xff]
        %v505 = vld [vmem:[%s291 + $0x121] sm:$0xff]
        %v506 = vld [vmem:[%s291 + $0x129] sm:$0xff]
        %v507 = vld [vmem:[%s291 + $0x139] sm:$0xff]
        %v508 = vld [vmem:[%s291 + $0x141] sm:$0xff]
        %v509 = vld [vmem:[%s291 + $0x151] sm:$0xff]
        %v510 = vld [vmem:[%s291 + $0x159] sm:$0xff]
        %v511 = vld [vmem:[%s291 + $0x169] sm:$0xff]
        %v512 = vld [vmem:[%s291 + $0x171] sm:$0xff]
        %v513 = vld [vmem:[%s291 + $0x181] sm:$0xff]
        %v514 = vld [vmem:[%s291 + $0x189] sm:$0xff]
        %v515 = vld [vmem:[%s291 + $0x199] sm:$0xff]
        %v516 = vld [vmem:[%s291 + $0x1a1] sm:$0xff]
        %v517 = vld [vmem:[%s291 + $0x2] sm:$0xff]
        %v518 = vld [vmem:[%s291 + $0xa] sm:$0xff]
        %v519 = vld [vmem:[%s291 + $0x1a] sm:$0xff]
        %v520 = vld [vmem:[%s291 + $0x22] sm:$0xff]
        %v521 = vld [vmem:[%s291 + $0x32] sm:$0xff]
        %v522 = vld [vmem:[%s291 + $0x3a] sm:$0xff]
        %v523 = vld [vmem:[%s291 + $0x4a] sm:$0xff]
        %v524 = vld [vmem:[%s291 + $0x52] sm:$0xff]
        %v525 = vld [vmem:[%s291 + $0x62] sm:$0xff]
        %v526 = vld [vmem:[%s291 + $0x6a] sm:$0xff]
        %v527 = vld [vmem:[%s291 + $0x7a] sm:$0xff]
        %v528 = vld [vmem:[%s291 + $0x82] sm:$0xff]
        %v529 = vld [vmem:[%s291 + $0x92] sm:$0xff]
        %v530 = vld [vmem:[%s291 + $0x9a] sm:$0xff]
        %v531 = vld [vmem:[%s291 + $0xaa] sm:$0xff]
        %v532 = vld [vmem:[%s291 + $0xb2] sm:$0xff]
        %v533 = vld [vmem:[%s291 + $0xc2] sm:$0xff]
        %v534 = vld [vmem:[%s291 + $0xca] sm:$0xff]
        %v535 = vld [vmem:[%s291 + $0xda] sm:$0xff]
        %v536 = vld [vmem:[%s291 + $0xe2] sm:$0xff]
        %v537 = vld [vmem:[%s291 + $0xf2] sm:$0xff]
        %v538 = vld [vmem:[%s291 + $0xfa] sm:$0xff]
        %v539 = vld [vmem:[%s291 + $0x10a] sm:$0xff]
        %v540 = vld [vmem:[%s291 + $0x112] sm:$0xff]
        %v541 = vld [vmem:[%s291 + $0x122] sm:$0xff]
        %v542 = vld [vmem:[%s291 + $0x12a] sm:$0xff]
        %v543 = vld [vmem:[%s291 + $0x13a] sm:$0xff]
        %v544 = vld [vmem:[%s291 + $0x142] sm:$0xff]
        %v545 = vld [vmem:[%s291 + $0x152] sm:$0xff]
        %v546 = vld [vmem:[%s291 + $0x15a] sm:$0xff]
        %v547 = vld [vmem:[%s291 + $0x16a] sm:$0xff]
        %v548 = vld [vmem:[%s291 + $0x172] sm:$0xff]
        %v549 = vld [vmem:[%s291 + $0x182] sm:$0xff]
        %v550 = vld [vmem:[%s291 + $0x18a] sm:$0xff]
        %v551 = vld [vmem:[%s291 + $0x19a] sm:$0xff]
        %v552 = vld [vmem:[%s291 + $0x1a2] sm:$0xff]
        %v553 = vld [vmem:[%s1] sm:$0xff]
        %v554 = vld [vmem:[%s1 + $0x8] sm:$0xff]
        %v555 = vld [vmem:[%s1 + $0x10] sm:$0xff]
        %v556 = vld [vmem:[%s1 + $0x18] sm:$0xff]
        %v557 = vld [vmem:[%s1 + $0x20] sm:$0xff]
        %v558 = vld [vmem:[%s1 + $0x28] sm:$0xff]
        %v559 = vld [vmem:[%s1 + $0x30] sm:$0xff]
        %v560 = vld [vmem:[%s1 + $0x38] sm:$0xff]
        %v561 = vld [vmem:[%s1 + $0x40] sm:$0xff]
        %v562 = vld [vmem:[%s1 + $0x48] sm:$0xff]
        %v563 = vld [vmem:[%s1 + $0x50] sm:$0xff]
        %v564 = vld [vmem:[%s1 + $0x58] sm:$0xff]
        %v565 = vld [vmem:[%s1 + $0x60] sm:$0xff]
        %v566 = vld [vmem:[%s1 + $0x68] sm:$0xff]
        %v567 = vld [vmem:[%s1 + $0x70] sm:$0xff]
        %v568 = vld [vmem:[%s1 + $0x78] sm:$0xff]
        %v569 = vld [vmem:[%s1 + $0x80] sm:$0xff]
        %v570 = vld [vmem:[%s1 + $0x88] sm:$0xff]
        %v571 = vld [vmem:[%s1 + $0x90] sm:$0xff]
        %v572 = vld [vmem:[%s1 + $0x98] sm:$0xff]
        %v573 = vld [vmem:[%s1 + $0xa0] sm:$0xff]
        %v574 = vld [vmem:[%s1 + $0xa8] sm:$0xff]
        %v575 = vld [vmem:[%s1 + $0xb0] sm:$0xff]
        %v576 = vld [vmem:[%s1 + $0xb8] sm:$0xff]
        %v577 = vld [vmem:[%s1 + $0xc0] sm:$0xff]
        %v578 = vld [vmem:[%s1 + $0xc8] sm:$0xff]
        %v579 = vld [vmem:[%s1 + $0xd0] sm:$0xff]
        %v580 = vld [vmem:[%s1 + $0xd8] sm:$0xff]
        %v581 = vld [vmem:[%s1 + $0xe0] sm:$0xff]
        %v582 = vld [vmem:[%s1 + $0xe8] sm:$0xff]
        %v583 = vld [vmem:[%s1 + $0xf0] sm:$0xff]
        %v584 = vld [vmem:[%s1 + $0xf8] sm:$0xff]
        %v585 = vld [vmem:[%s1 + $0x100] sm:$0xff]
        %v586 = vld [vmem:[%s1 + $0x108] sm:$0xff]
        %v587 = vld [vmem:[%s1 + $0x110] sm:$0xff]
        %v588 = vld [vmem:[%s1 + $0x118] sm:$0xff]
        %v589 = vld [vmem:[%s1 + $0x120] sm:$0xff]
        %v590 = vld [vmem:[%s1 + $0x128] sm:$0xff]
        %v591 = vld [vmem:[%s1 + $0x130] sm:$0xff]
        %v592 = vld [vmem:[%s1 + $0x138] sm:$0xff]
        %v593 = vld [vmem:[%s1 + $0x140] sm:$0xff]
        %v594 = vld [vmem:[%s1 + $0x148] sm:$0xff]
        %v595 = vld [vmem:[%s1 + $0x150] sm:$0xff]
        %v596 = vld [vmem:[%s1 + $0x158] sm:$0xff]
        %v597 = vld [vmem:[%s1 + $0x160] sm:$0xff]
        %v598 = vld [vmem:[%s1 + $0x168] sm:$0xff]
        %v599 = vld [vmem:[%s1 + $0x170] sm:$0xff]
        %v600 = vld [vmem:[%s1 + $0x178] sm:$0xff]
        %s601 = scalar_lea.vmem %s1, 384
        %v602 = vld [vmem:[%s601] sm:$0xff]
        %v603 = vld [vmem:[%s601 + $0x8] sm:$0xff]
        %v604 = vld [vmem:[%s601 + $0x10] sm:$0xff]
        %v605 = vld [vmem:[%s601 + $0x18] sm:$0xff]
        %v606 = vld [vmem:[%s601 + $0x20] sm:$0xff]
        %v607 = vld [vmem:[%s601 + $0x28] sm:$0xff]
        %v608 = vld [vmem:[%s601 + $0x30] sm:$0xff]
        %v609 = vld [vmem:[%s601 + $0x38] sm:$0xff]
        %v610 = vld [vmem:[%s601 + $0x40] sm:$0xff]
        %v611 = vld [vmem:[%s601 + $0x48] sm:$0xff]
        %v612 = vld [vmem:[%s601 + $0x50] sm:$0xff]
        %v613 = vld [vmem:[%s601 + $0x58] sm:$0xff]
        %v614 = vld [vmem:[%s601 + $0x60] sm:$0xff]
        %v615 = vld [vmem:[%s601 + $0x68] sm:$0xff]
        %v616 = vld [vmem:[%s601 + $0x70] sm:$0xff]
        %v617 = vld [vmem:[%s601 + $0x78] sm:$0xff]
        %v618 = vld [vmem:[%s601 + $0x80] sm:$0xff]
        %v619 = vld [vmem:[%s601 + $0x88] sm:$0xff]
        %v620 = vld [vmem:[%s601 + $0x90] sm:$0xff]
        %v621 = vld [vmem:[%s601 + $0x98] sm:$0xff]
        %v622 = vld [vmem:[%s601 + $0xa0] sm:$0xff]
        %v623 = vld [vmem:[%s601 + $0xa8] sm:$0xff]
        %v624 = vld [vmem:[%s601 + $0xb0] sm:$0xff]
        %v625 = vld [vmem:[%s601 + $0xb8] sm:$0xff]
        %v626 = vld [vmem:[%s601 + $0xc0] sm:$0xff]
        %v627 = vld [vmem:[%s601 + $0xc8] sm:$0xff]
        %v628 = vld [vmem:[%s601 + $0xd0] sm:$0xff]
        %v629 = vld [vmem:[%s601 + $0xd8] sm:$0xff]
        %v630 = vld [vmem:[%s601 + $0xe0] sm:$0xff]
        %v631 = vld [vmem:[%s601 + $0xe8] sm:$0xff]
        %v632 = vld [vmem:[%s601 + $0xf0] sm:$0xff]
        %v633 = vld [vmem:[%s601 + $0xf8] sm:$0xff]
        %v634 = vld [vmem:[%s601 + $0x100] sm:$0xff]
        %v635 = vld [vmem:[%s601 + $0x108] sm:$0xff]
        %v636 = vld [vmem:[%s601 + $0x110] sm:$0xff]
        %v637 = vld [vmem:[%s601 + $0x118] sm:$0xff]
        %v638 = vld [vmem:[%s601 + $0x120] sm:$0xff]
        %v639 = vld [vmem:[%s601 + $0x128] sm:$0xff]
        %v640 = vld [vmem:[%s601 + $0x130] sm:$0xff]
        %v641 = vld [vmem:[%s601 + $0x138] sm:$0xff]
        %v642 = vld [vmem:[%s601 + $0x140] sm:$0xff]
        %v643 = vld [vmem:[%s601 + $0x148] sm:$0xff]
        %v644 = vld [vmem:[%s601 + $0x150] sm:$0xff]
        %v645 = vld [vmem:[%s601 + $0x158] sm:$0xff]
        %v646 = vld [vmem:[%s601 + $0x160] sm:$0xff]
        %v647 = vld [vmem:[%s601 + $0x168] sm:$0xff]
        %v648 = vld [vmem:[%s601 + $0x170] sm:$0xff]
        %v649 = vld [vmem:[%s601 + $0x178] sm:$0xff]
        %650 = vmatpush.msra.mxu0 %v617
        %651 = vmatpush.msra.mxu0 %v616
        %652 = vmatpush.msra.mxu0 %v615
        %653 = vmatpush.msra.mxu0 %v614
        %654 = vmatpush.msra.mxu0 %v613
        %655 = vmatpush.msra.mxu0 %v612
        %656 = vmatpush.msra.mxu0 %v611
        %657 = vmatpush.msra.mxu0 %v610
        %658 = vmatpush.msra.mxu0 %v609
        %659 = vmatpush.msra.mxu0 %v608
        %660 = vmatpush.msra.mxu0 %v607
        %661 = vmatpush.msra.mxu0 %v606
        %662 = vmatpush.msra.mxu0 %v605
        %663 = vmatpush.msra.mxu0 %v604
        %664 = vmatpush.msra.mxu0 %v603
        %665 = vmatpush.msra.mxu0 %v602
        %666 = vmatmul.f32.gmra.mxu0 %v447
        %v667 = vpop.f32.mrf.mxu0
        %v668 = vadd.f32 0.0, %v667
        %669 = vmatmul.f32.gmra.mxu0 %v448
        %v670 = vpop.f32.mrf.mxu0
        %v671 = vadd.f32 0.0, %v670
        %672 = vmatmul.f32.gmra.mxu0 %v449
        %v673 = vpop.f32.mrf.mxu0
        %v674 = vadd.f32 0.0, %v673
        %675 = vmatmul.f32.gmra.mxu0 %v450
        %v676 = vpop.f32.mrf.mxu0
        %v677 = vadd.f32 0.0, %v676
        %678 = vmatmul.f32.gmra.mxu0 %v451
        %v679 = vpop.f32.mrf.mxu0
        %v680 = vadd.f32 0.0, %v679
        %681 = vmatmul.f32.gmra.mxu0 %v452
        %v682 = vpop.f32.mrf.mxu0
        %v683 = vadd.f32 0.0, %v682
        %684 = vmatmul.f32.gmra.mxu0 %v453
        %v685 = vpop.f32.mrf.mxu0
        %v686 = vadd.f32 0.0, %v685
        %687 = vmatmul.f32.gmra.mxu0 %v454
        %v688 = vpop.f32.mrf.mxu0
        %v689 = vadd.f32 0.0, %v688
        %690 = vmatmul.f32.gmra.mxu0 %v455
        %v691 = vpop.f32.mrf.mxu0
        %v692 = vadd.f32 0.0, %v691
        %693 = vmatmul.f32.gmra.mxu0 %v456
        %v694 = vpop.f32.mrf.mxu0
        %v695 = vadd.f32 0.0, %v694
        %696 = vmatmul.f32.gmra.mxu0 %v457
        %v697 = vpop.f32.mrf.mxu0
        %v698 = vadd.f32 0.0, %v697
        %699 = vmatmul.f32.gmra.mxu0 %v458
        %v700 = vpop.f32.mrf.mxu0
        %v701 = vadd.f32 0.0, %v700
        %702 = vmatmul.f32.gmra.mxu0 %v459
        %v703 = vpop.f32.mrf.mxu0
        %v704 = vadd.f32 0.0, %v703
        %705 = vmatmul.f32.gmra.mxu0 %v460
        %v706 = vpop.f32.mrf.mxu0
        %v707 = vadd.f32 0.0, %v706
        %708 = vmatmul.f32.gmra.mxu0 %v461
        %v709 = vpop.f32.mrf.mxu0
        %v710 = vadd.f32 0.0, %v709
        %711 = vmatmul.f32.gmra.mxu0 %v462
        %v712 = vpop.f32.mrf.mxu0
        %v713 = vadd.f32 0.0, %v712
        %714 = vmatmul.f32.gmra.mxu0 %v463
        %v715 = vpop.f32.mrf.mxu0
        %v716 = vadd.f32 0.0, %v715
        %717 = vmatmul.f32.gmra.mxu0 %v464
        %v718 = vpop.f32.mrf.mxu0
        %v719 = vadd.f32 0.0, %v718
        %720 = vmatmul.f32.gmra.mxu0 %v465
        %v721 = vpop.f32.mrf.mxu0
        %v722 = vadd.f32 0.0, %v721
        %723 = vmatmul.f32.gmra.mxu0 %v466
        %v724 = vpop.f32.mrf.mxu0
        %v725 = vadd.f32 0.0, %v724
        %726 = vmatmul.f32.gmra.mxu0 %v467
        %v727 = vpop.f32.mrf.mxu0
        %v728 = vadd.f32 0.0, %v727
        %729 = vmatmul.f32.gmra.mxu0 %v468
        %v730 = vpop.f32.mrf.mxu0
        %v731 = vadd.f32 0.0, %v730
        %732 = vmatmul.f32.gmra.mxu0 %v469
        %v733 = vpop.f32.mrf.mxu0
        %v734 = vadd.f32 0.0, %v733
        %735 = vmatmul.f32.gmra.mxu0 %v470
        %v736 = vpop.f32.mrf.mxu0
        %v737 = vadd.f32 0.0, %v736
        %738 = vmatmul.f32.gmra.mxu0 %v471
        %v739 = vpop.f32.mrf.mxu0
        %v740 = vadd.f32 0.0, %v739
        %741 = vmatmul.f32.gmra.mxu0 %v472
        %v742 = vpop.f32.mrf.mxu0
        %v743 = vadd.f32 0.0, %v742
        %744 = vmatmul.f32.gmra.mxu0 %v473
        %v745 = vpop.f32.mrf.mxu0
        %v746 = vadd.f32 0.0, %v745
        %747 = vmatmul.f32.gmra.mxu0 %v474
        %v748 = vpop.f32.mrf.mxu0
        %v749 = vadd.f32 0.0, %v748
        %750 = vmatmul.f32.gmra.mxu0 %v475
        %v751 = vpop.f32.mrf.mxu0
        %v752 = vadd.f32 0.0, %v751
        %753 = vmatmul.f32.gmra.mxu0 %v476
        %v754 = vpop.f32.mrf.mxu0
        %v755 = vadd.f32 0.0, %v754
        %756 = vmatmul.f32.gmra.mxu0 %v477
        %v757 = vpop.f32.mrf.mxu0
        %v758 = vadd.f32 0.0, %v757
        %759 = vmatmul.f32.gmra.mxu0 %v478
        %v760 = vpop.f32.mrf.mxu0
        %v761 = vadd.f32 0.0, %v760
        %762 = vdwg.mxu0
        %763 = vmatpush.msra.mxu0 %v633
        %764 = vmatpush.msra.mxu0 %v632
        %765 = vmatpush.msra.mxu0 %v631
        %766 = vmatpush.msra.mxu0 %v630
        %767 = vmatpush.msra.mxu0 %v629
        %768 = vmatpush.msra.mxu0 %v628
        %769 = vmatpush.msra.mxu0 %v627
        %770 = vmatpush.msra.mxu0 %v626
        %771 = vmatpush.msra.mxu0 %v625
        %772 = vmatpush.msra.mxu0 %v624
        %773 = vmatpush.msra.mxu0 %v623
        %774 = vmatpush.msra.mxu0 %v622
        %775 = vmatpush.msra.mxu0 %v621
        %776 = vmatpush.msra.mxu0 %v620
        %777 = vmatpush.msra.mxu0 %v619
        %778 = vmatpush.msra.mxu0 %v618
        %779 = vmatmul.f32.gmra.mxu0 %v483
        %v780 = vpop.f32.mrf.mxu0
        %v781 = vadd.f32 %v668, %v780
        %782 = vmatmul.f32.gmra.mxu0 %v484
        %v783 = vpop.f32.mrf.mxu0
        %v784 = vadd.f32 %v671, %v783
        %785 = vmatmul.f32.gmra.mxu0 %v485
        %v786 = vpop.f32.mrf.mxu0
        %v787 = vadd.f32 %v674, %v786
        %788 = vmatmul.f32.gmra.mxu0 %v486
        %v789 = vpop.f32.mrf.mxu0
        %v790 = vadd.f32 %v677, %v789
        %791 = vmatmul.f32.gmra.mxu0 %v487
        %v792 = vpop.f32.mrf.mxu0
        %v793 = vadd.f32 %v680, %v792
        %794 = vmatmul.f32.gmra.mxu0 %v488
        %v795 = vpop.f32.mrf.mxu0
        %v796 = vadd.f32 %v683, %v795
        %797 = vmatmul.f32.gmra.mxu0 %v489
        %v798 = vpop.f32.mrf.mxu0
        %v799 = vadd.f32 %v686, %v798
        %800 = vmatmul.f32.gmra.mxu0 %v490
        %v801 = vpop.f32.mrf.mxu0
        %v802 = vadd.f32 %v689, %v801
        %803 = vmatmul.f32.gmra.mxu0 %v491
        %v804 = vpop.f32.mrf.mxu0
        %v805 = vadd.f32 %v692, %v804
        %806 = vmatmul.f32.gmra.mxu0 %v492
        %v807 = vpop.f32.mrf.mxu0
        %v808 = vadd.f32 %v695, %v807
        %809 = vmatmul.f32.gmra.mxu0 %v493
        %v810 = vpop.f32.mrf.mxu0
        %v811 = vadd.f32 %v698, %v810
        %812 = vmatmul.f32.gmra.mxu0 %v494
        %v813 = vpop.f32.mrf.mxu0
        %v814 = vadd.f32 %v701, %v813
        %815 = vmatmul.f32.gmra.mxu0 %v495
        %v816 = vpop.f32.mrf.mxu0
        %v817 = vadd.f32 %v704, %v816
        %818 = vmatmul.f32.gmra.mxu0 %v496
        %v819 = vpop.f32.mrf.mxu0
        %v820 = vadd.f32 %v707, %v819
        %821 = vmatmul.f32.gmra.mxu0 %v497
        %v822 = vpop.f32.mrf.mxu0
        %v823 = vadd.f32 %v710, %v822
        %824 = vmatmul.f32.gmra.mxu0 %v498
        %v825 = vpop.f32.mrf.mxu0
        %v826 = vadd.f32 %v713, %v825
        %827 = vmatmul.f32.gmra.mxu0 %v499
        %v828 = vpop.f32.mrf.mxu0
        %v829 = vadd.f32 %v716, %v828
        %830 = vmatmul.f32.gmra.mxu0 %v500
        %v831 = vpop.f32.mrf.mxu0
        %v832 = vadd.f32 %v719, %v831
        %833 = vmatmul.f32.gmra.mxu0 %v501
        %v834 = vpop.f32.mrf.mxu0
        %v835 = vadd.f32 %v722, %v834
        %836 = vmatmul.f32.gmra.mxu0 %v502
        %v837 = vpop.f32.mrf.mxu0
        %v838 = vadd.f32 %v725, %v837
        %839 = vmatmul.f32.gmra.mxu0 %v503
        %v840 = vpop.f32.mrf.mxu0
        %v841 = vadd.f32 %v728, %v840
        %842 = vmatmul.f32.gmra.mxu0 %v504
        %v843 = vpop.f32.mrf.mxu0
        %v844 = vadd.f32 %v731, %v843
        %845 = vmatmul.f32.gmra.mxu0 %v505
        %v846 = vpop.f32.mrf.mxu0
        %v847 = vadd.f32 %v734, %v846
        %848 = vmatmul.f32.gmra.mxu0 %v506
        %v849 = vpop.f32.mrf.mxu0
        %v850 = vadd.f32 %v737, %v849
        %851 = vmatmul.f32.gmra.mxu0 %v507
        %v852 = vpop.f32.mrf.mxu0
        %v853 = vadd.f32 %v740, %v852
        %854 = vmatmul.f32.gmra.mxu0 %v508
        %v855 = vpop.f32.mrf.mxu0
        %v856 = vadd.f32 %v743, %v855
        %857 = vmatmul.f32.gmra.mxu0 %v509
        %v858 = vpop.f32.mrf.mxu0
        %v859 = vadd.f32 %v746, %v858
        %860 = vmatmul.f32.gmra.mxu0 %v510
        %v861 = vpop.f32.mrf.mxu0
        %v862 = vadd.f32 %v749, %v861
        %863 = vmatmul.f32.gmra.mxu0 %v511
        %v864 = vpop.f32.mrf.mxu0
        %v865 = vadd.f32 %v752, %v864
        %866 = vmatmul.f32.gmra.mxu0 %v512
        %v867 = vpop.f32.mrf.mxu0
        %v868 = vadd.f32 %v755, %v867
        %869 = vmatmul.f32.gmra.mxu0 %v513
        %v870 = vpop.f32.mrf.mxu0
        %v871 = vadd.f32 %v758, %v870
        %872 = vmatmul.f32.gmra.mxu0 %v514
        %v873 = vpop.f32.mrf.mxu0
        %v874 = vadd.f32 %v761, %v873
        %875 = vdwg.mxu0
        %876 = vmatpush.msra.mxu0 %v649
        %877 = vmatpush.msra.mxu0 %v648
        %878 = vmatpush.msra.mxu0 %v647
        %879 = vmatpush.msra.mxu0 %v646
        %880 = vmatpush.msra.mxu0 %v645
        %881 = vmatpush.msra.mxu0 %v644
        %882 = vmatpush.msra.mxu0 %v643
        %883 = vmatpush.msra.mxu0 %v642
        %884 = vmatpush.msra.mxu0 %v641
        %885 = vmatpush.msra.mxu0 %v640
        %886 = vmatpush.msra.mxu0 %v639
        %887 = vmatpush.msra.mxu0 %v638
        %888 = vmatpush.msra.mxu0 %v637
        %889 = vmatpush.msra.mxu0 %v636
        %890 = vmatpush.msra.mxu0 %v635
        %891 = vmatpush.msra.mxu0 %v634
        %892 = vmatmul.f32.gmra.mxu0 %v519
        %v893 = vpop.f32.mrf.mxu0
        %v894 = vadd.f32 %v781, %v893
        %895 = vmatmul.f32.gmra.mxu0 %v520
        %v896 = vpop.f32.mrf.mxu0
        %v897 = vadd.f32 %v784, %v896
        %898 = vmatmul.f32.gmra.mxu0 %v521
        %v899 = vpop.f32.mrf.mxu0
        %v900 = vadd.f32 %v787, %v899
        %901 = vmatmul.f32.gmra.mxu0 %v522
        %v902 = vpop.f32.mrf.mxu0
        %v903 = vadd.f32 %v790, %v902
        %904 = vmatmul.f32.gmra.mxu0 %v523
        %v905 = vpop.f32.mrf.mxu0
        %v906 = vadd.f32 %v793, %v905
        %907 = vmatmul.f32.gmra.mxu0 %v524
        %v908 = vpop.f32.mrf.mxu0
        %v909 = vadd.f32 %v796, %v908
        %910 = vmatmul.f32.gmra.mxu0 %v525
        %v911 = vpop.f32.mrf.mxu0
        %v912 = vadd.f32 %v799, %v911
        %913 = vmatmul.f32.gmra.mxu0 %v526
        %v914 = vpop.f32.mrf.mxu0
        %v915 = vadd.f32 %v802, %v914
        %916 = vmatmul.f32.gmra.mxu0 %v527
        %v917 = vpop.f32.mrf.mxu0
        %v918 = vadd.f32 %v805, %v917
        %919 = vmatmul.f32.gmra.mxu0 %v528
        %v920 = vpop.f32.mrf.mxu0
        %v921 = vadd.f32 %v808, %v920
        %922 = vmatmul.f32.gmra.mxu0 %v529
        %v923 = vpop.f32.mrf.mxu0
        %v924 = vadd.f32 %v811, %v923
        %925 = vmatmul.f32.gmra.mxu0 %v530
        %v926 = vpop.f32.mrf.mxu0
        %v927 = vadd.f32 %v814, %v926
        %928 = vmatmul.f32.gmra.mxu0 %v531
        %v929 = vpop.f32.mrf.mxu0
        %v930 = vadd.f32 %v817, %v929
        %931 = vmatmul.f32.gmra.mxu0 %v532
        %v932 = vpop.f32.mrf.mxu0
        %v933 = vadd.f32 %v820, %v932
        %934 = vmatmul.f32.gmra.mxu0 %v533
        %v935 = vpop.f32.mrf.mxu0
        %v936 = vadd.f32 %v823, %v935
        %937 = vmatmul.f32.gmra.mxu0 %v534
        %v938 = vpop.f32.mrf.mxu0
        %v939 = vadd.f32 %v826, %v938
        %940 = vmatmul.f32.gmra.mxu0 %v535
        %v941 = vpop.f32.mrf.mxu0
        %v942 = vadd.f32 %v829, %v941
        %943 = vmatmul.f32.gmra.mxu0 %v536
        %v944 = vpop.f32.mrf.mxu0
        %v945 = vadd.f32 %v832, %v944
        %946 = vmatmul.f32.gmra.mxu0 %v537
        %v947 = vpop.f32.mrf.mxu0
        %v948 = vadd.f32 %v835, %v947
        %949 = vmatmul.f32.gmra.mxu0 %v538
        %v950 = vpop.f32.mrf.mxu0
        %v951 = vadd.f32 %v838, %v950
        %952 = vmatmul.f32.gmra.mxu0 %v539
        %v953 = vpop.f32.mrf.mxu0
        %v954 = vadd.f32 %v841, %v953
        %955 = vmatmul.f32.gmra.mxu0 %v540
        %v956 = vpop.f32.mrf.mxu0
        %v957 = vadd.f32 %v844, %v956
        %958 = vmatmul.f32.gmra.mxu0 %v541
        %v959 = vpop.f32.mrf.mxu0
        %v960 = vadd.f32 %v847, %v959
        %961 = vmatmul.f32.gmra.mxu0 %v542
        %v962 = vpop.f32.mrf.mxu0
        %v963 = vadd.f32 %v850, %v962
        %964 = vmatmul.f32.gmra.mxu0 %v543
        %v965 = vpop.f32.mrf.mxu0
        %v966 = vadd.f32 %v853, %v965
        %967 = vmatmul.f32.gmra.mxu0 %v544
        %v968 = vpop.f32.mrf.mxu0
        %v969 = vadd.f32 %v856, %v968
        %970 = vmatmul.f32.gmra.mxu0 %v545
        %v971 = vpop.f32.mrf.mxu0
        %v972 = vadd.f32 %v859, %v971
        %973 = vmatmul.f32.gmra.mxu0 %v546
        %v974 = vpop.f32.mrf.mxu0
        %v975 = vadd.f32 %v862, %v974
        %976 = vmatmul.f32.gmra.mxu0 %v547
        %v977 = vpop.f32.mrf.mxu0
        %v978 = vadd.f32 %v865, %v977
        %979 = vmatmul.f32.gmra.mxu0 %v548
        %v980 = vpop.f32.mrf.mxu0
        %v981 = vadd.f32 %v868, %v980
        %982 = vmatmul.f32.gmra.mxu0 %v549
        %v983 = vpop.f32.mrf.mxu0
        %v984 = vadd.f32 %v871, %v983
        %985 = vmatmul.f32.gmra.mxu0 %v550
        %v986 = vpop.f32.mrf.mxu0
        %v987 = vadd.f32 %v874, %v986
        %988 = vdwg.mxu0
        %989 = vmatpush.msra.mxu0 %v568
        %990 = vmatpush.msra.mxu0 %v567
        %991 = vmatpush.msra.mxu0 %v566
        %992 = vmatpush.msra.mxu0 %v565
        %993 = vmatpush.msra.mxu0 %v564
        %994 = vmatpush.msra.mxu0 %v563
        %995 = vmatpush.msra.mxu0 %v562
        %996 = vmatpush.msra.mxu0 %v561
        %997 = vmatpush.msra.mxu0 %v560
        %998 = vmatpush.msra.mxu0 %v559
        %999 = vmatpush.msra.mxu0 %v558
        %1000 = vmatpush.msra.mxu0 %v557
        %1001 = vmatpush.msra.mxu0 %v556
        %1002 = vmatpush.msra.mxu0 %v555
        %1003 = vmatpush.msra.mxu0 %v554
        %1004 = vmatpush.msra.mxu0 %v553
        %1005 = vmatmul.f32.gmra.mxu0 %v445
        %v1006 = vpop.f32.mrf.mxu0
        %v1007 = vadd.f32 %v894, %v1006
        %1008 = vmatmul.f32.gmra.mxu0 %v446
        %v1009 = vpop.f32.mrf.mxu0
        %v1010 = vadd.f32 %v897, %v1009
        %1011 = vmatmul.f32.gmra.mxu0 %v447
        %v1012 = vpop.f32.mrf.mxu0
        %v1013 = vadd.f32 %v900, %v1012
        %1014 = vmatmul.f32.gmra.mxu0 %v448
        %v1015 = vpop.f32.mrf.mxu0
        %v1016 = vadd.f32 %v903, %v1015
        %1017 = vmatmul.f32.gmra.mxu0 %v449
        %v1018 = vpop.f32.mrf.mxu0
        %v1019 = vadd.f32 %v906, %v1018
        %1020 = vmatmul.f32.gmra.mxu0 %v450
        %v1021 = vpop.f32.mrf.mxu0
        %v1022 = vadd.f32 %v909, %v1021
        %1023 = vmatmul.f32.gmra.mxu0 %v451
        %v1024 = vpop.f32.mrf.mxu0
        %v1025 = vadd.f32 %v912, %v1024
        %1026 = vmatmul.f32.gmra.mxu0 %v452
        %v1027 = vpop.f32.mrf.mxu0
        %v1028 = vadd.f32 %v915, %v1027
        %1029 = vmatmul.f32.gmra.mxu0 %v453
        %v1030 = vpop.f32.mrf.mxu0
        %v1031 = vadd.f32 %v918, %v1030
        %1032 = vmatmul.f32.gmra.mxu0 %v454
        %v1033 = vpop.f32.mrf.mxu0
        %v1034 = vadd.f32 %v921, %v1033
        %1035 = vmatmul.f32.gmra.mxu0 %v455
        %v1036 = vpop.f32.mrf.mxu0
        %v1037 = vadd.f32 %v924, %v1036
        %1038 = vmatmul.f32.gmra.mxu0 %v456
        %v1039 = vpop.f32.mrf.mxu0
        %v1040 = vadd.f32 %v927, %v1039
        %1041 = vmatmul.f32.gmra.mxu0 %v457
        %v1042 = vpop.f32.mrf.mxu0
        %v1043 = vadd.f32 %v930, %v1042
        %1044 = vmatmul.f32.gmra.mxu0 %v458
        %v1045 = vpop.f32.mrf.mxu0
        %v1046 = vadd.f32 %v933, %v1045
        %1047 = vmatmul.f32.gmra.mxu0 %v459
        %v1048 = vpop.f32.mrf.mxu0
        %v1049 = vadd.f32 %v936, %v1048
        %1050 = vmatmul.f32.gmra.mxu0 %v460
        %v1051 = vpop.f32.mrf.mxu0
        %v1052 = vadd.f32 %v939, %v1051
        %1053 = vmatmul.f32.gmra.mxu0 %v461
        %v1054 = vpop.f32.mrf.mxu0
        %v1055 = vadd.f32 %v942, %v1054
        %1056 = vmatmul.f32.gmra.mxu0 %v462
        %v1057 = vpop.f32.mrf.mxu0
        %v1058 = vadd.f32 %v945, %v1057
        %1059 = vmatmul.f32.gmra.mxu0 %v463
        %v1060 = vpop.f32.mrf.mxu0
        %v1061 = vadd.f32 %v948, %v1060
        %1062 = vmatmul.f32.gmra.mxu0 %v464
        %v1063 = vpop.f32.mrf.mxu0
        %v1064 = vadd.f32 %v951, %v1063
        %1065 = vmatmul.f32.gmra.mxu0 %v465
        %v1066 = vpop.f32.mrf.mxu0
        %v1067 = vadd.f32 %v954, %v1066
        %1068 = vmatmul.f32.gmra.mxu0 %v466
        %v1069 = vpop.f32.mrf.mxu0
        %v1070 = vadd.f32 %v957, %v1069
        %1071 = vmatmul.f32.gmra.mxu0 %v467
        %v1072 = vpop.f32.mrf.mxu0
        %v1073 = vadd.f32 %v960, %v1072
        %1074 = vmatmul.f32.gmra.mxu0 %v468
        %v1075 = vpop.f32.mrf.mxu0
        %v1076 = vadd.f32 %v963, %v1075
        %1077 = vmatmul.f32.gmra.mxu0 %v469
        %v1078 = vpop.f32.mrf.mxu0
        %v1079 = vadd.f32 %v966, %v1078
        %1080 = vmatmul.f32.gmra.mxu0 %v470
        %v1081 = vpop.f32.mrf.mxu0
        %v1082 = vadd.f32 %v969, %v1081
        %1083 = vmatmul.f32.gmra.mxu0 %v471
        %v1084 = vpop.f32.mrf.mxu0
        %v1085 = vadd.f32 %v972, %v1084
        %1086 = vmatmul.f32.gmra.mxu0 %v472
        %v1087 = vpop.f32.mrf.mxu0
        %v1088 = vadd.f32 %v975, %v1087
        %1089 = vmatmul.f32.gmra.mxu0 %v473
        %v1090 = vpop.f32.mrf.mxu0
        %v1091 = vadd.f32 %v978, %v1090
        %1092 = vmatmul.f32.gmra.mxu0 %v474
        %v1093 = vpop.f32.mrf.mxu0
        %v1094 = vadd.f32 %v981, %v1093
        %1095 = vmatmul.f32.gmra.mxu0 %v475
        %v1096 = vpop.f32.mrf.mxu0
        %v1097 = vadd.f32 %v984, %v1096
        %1098 = vmatmul.f32.gmra.mxu0 %v476
        %v1099 = vpop.f32.mrf.mxu0
        %v1100 = vadd.f32 %v987, %v1099
        %1101 = vdwg.mxu0
        %1102 = vmatpush.msra.mxu0 %v584
        %1103 = vmatpush.msra.mxu0 %v583
        %1104 = vmatpush.msra.mxu0 %v582
        %1105 = vmatpush.msra.mxu0 %v581
        %1106 = vmatpush.msra.mxu0 %v580
        %1107 = vmatpush.msra.mxu0 %v579
        %1108 = vmatpush.msra.mxu0 %v578
        %1109 = vmatpush.msra.mxu0 %v577
        %1110 = vmatpush.msra.mxu0 %v576
        %1111 = vmatpush.msra.mxu0 %v575
        %1112 = vmatpush.msra.mxu0 %v574
        %1113 = vmatpush.msra.mxu0 %v573
        %1114 = vmatpush.msra.mxu0 %v572
        %1115 = vmatpush.msra.mxu0 %v571
        %1116 = vmatpush.msra.mxu0 %v570
        %1117 = vmatpush.msra.mxu0 %v569
        %1118 = vmatmul.f32.gmra.mxu0 %v481
        %v1119 = vpop.f32.mrf.mxu0
        %v1120 = vadd.f32 %v1007, %v1119
        %1121 = vmatmul.f32.gmra.mxu0 %v482
        %v1122 = vpop.f32.mrf.mxu0
        %v1123 = vadd.f32 %v1010, %v1122
        %1124 = vmatmul.f32.gmra.mxu0 %v483
        %v1125 = vpop.f32.mrf.mxu0
        %v1126 = vadd.f32 %v1013, %v1125
        %1127 = vmatmul.f32.gmra.mxu0 %v484
        %v1128 = vpop.f32.mrf.mxu0
        %v1129 = vadd.f32 %v1016, %v1128
        %1130 = vmatmul.f32.gmra.mxu0 %v485
        %v1131 = vpop.f32.mrf.mxu0
        %v1132 = vadd.f32 %v1019, %v1131
        %1133 = vmatmul.f32.gmra.mxu0 %v486
        %v1134 = vpop.f32.mrf.mxu0
        %v1135 = vadd.f32 %v1022, %v1134
        %1136 = vmatmul.f32.gmra.mxu0 %v487
        %v1137 = vpop.f32.mrf.mxu0
        %v1138 = vadd.f32 %v1025, %v1137
        %1139 = vmatmul.f32.gmra.mxu0 %v488
        %v1140 = vpop.f32.mrf.mxu0
        %v1141 = vadd.f32 %v1028, %v1140
        %1142 = vmatmul.f32.gmra.mxu0 %v489
        %v1143 = vpop.f32.mrf.mxu0
        %v1144 = vadd.f32 %v1031, %v1143
        %1145 = vmatmul.f32.gmra.mxu0 %v490
        %v1146 = vpop.f32.mrf.mxu0
        %v1147 = vadd.f32 %v1034, %v1146
        %1148 = vmatmul.f32.gmra.mxu0 %v491
        %v1149 = vpop.f32.mrf.mxu0
        %v1150 = vadd.f32 %v1037, %v1149
        %1151 = vmatmul.f32.gmra.mxu0 %v492
        %v1152 = vpop.f32.mrf.mxu0
        %v1153 = vadd.f32 %v1040, %v1152
        %1154 = vmatmul.f32.gmra.mxu0 %v493
        %v1155 = vpop.f32.mrf.mxu0
        %v1156 = vadd.f32 %v1043, %v1155
        %1157 = vmatmul.f32.gmra.mxu0 %v494
        %v1158 = vpop.f32.mrf.mxu0
        %v1159 = vadd.f32 %v1046, %v1158
        %1160 = vmatmul.f32.gmra.mxu0 %v495
        %v1161 = vpop.f32.mrf.mxu0
        %v1162 = vadd.f32 %v1049, %v1161
        %1163 = vmatmul.f32.gmra.mxu0 %v496
        %v1164 = vpop.f32.mrf.mxu0
        %v1165 = vadd.f32 %v1052, %v1164
        %1166 = vmatmul.f32.gmra.mxu0 %v497
        %v1167 = vpop.f32.mrf.mxu0
        %v1168 = vadd.f32 %v1055, %v1167
        %1169 = vmatmul.f32.gmra.mxu0 %v498
        %v1170 = vpop.f32.mrf.mxu0
        %v1171 = vadd.f32 %v1058, %v1170
        %1172 = vmatmul.f32.gmra.mxu0 %v499
        %v1173 = vpop.f32.mrf.mxu0
        %v1174 = vadd.f32 %v1061, %v1173
        %1175 = vmatmul.f32.gmra.mxu0 %v500
        %v1176 = vpop.f32.mrf.mxu0
        %v1177 = vadd.f32 %v1064, %v1176
        %1178 = vmatmul.f32.gmra.mxu0 %v501
        %v1179 = vpop.f32.mrf.mxu0
        %v1180 = vadd.f32 %v1067, %v1179
        %1181 = vmatmul.f32.gmra.mxu0 %v502
        %v1182 = vpop.f32.mrf.mxu0
        %v1183 = vadd.f32 %v1070, %v1182
        %1184 = vmatmul.f32.gmra.mxu0 %v503
        %v1185 = vpop.f32.mrf.mxu0
        %v1186 = vadd.f32 %v1073, %v1185
        %1187 = vmatmul.f32.gmra.mxu0 %v504
        %v1188 = vpop.f32.mrf.mxu0
        %v1189 = vadd.f32 %v1076, %v1188
        %1190 = vmatmul.f32.gmra.mxu0 %v505
        %v1191 = vpop.f32.mrf.mxu0
        %v1192 = vadd.f32 %v1079, %v1191
        %1193 = vmatmul.f32.gmra.mxu0 %v506
        %v1194 = vpop.f32.mrf.mxu0
        %v1195 = vadd.f32 %v1082, %v1194
        %1196 = vmatmul.f32.gmra.mxu0 %v507
        %v1197 = vpop.f32.mrf.mxu0
        %v1198 = vadd.f32 %v1085, %v1197
        %1199 = vmatmul.f32.gmra.mxu0 %v508
        %v1200 = vpop.f32.mrf.mxu0
        %v1201 = vadd.f32 %v1088, %v1200
        %1202 = vmatmul.f32.gmra.mxu0 %v509
        %v1203 = vpop.f32.mrf.mxu0
        %v1204 = vadd.f32 %v1091, %v1203
        %1205 = vmatmul.f32.gmra.mxu0 %v510
        %v1206 = vpop.f32.mrf.mxu0
        %v1207 = vadd.f32 %v1094, %v1206
        %1208 = vmatmul.f32.gmra.mxu0 %v511
        %v1209 = vpop.f32.mrf.mxu0
        %v1210 = vadd.f32 %v1097, %v1209
        %1211 = vmatmul.f32.gmra.mxu0 %v512
        %v1212 = vpop.f32.mrf.mxu0
        %v1213 = vadd.f32 %v1100, %v1212
        %1214 = vdwg.mxu0
        %1215 = vmatpush.msra.mxu0 %v600
        %1216 = vmatpush.msra.mxu0 %v599
        %1217 = vmatpush.msra.mxu0 %v598
        %1218 = vmatpush.msra.mxu0 %v597
        %1219 = vmatpush.msra.mxu0 %v596
        %1220 = vmatpush.msra.mxu0 %v595
        %1221 = vmatpush.msra.mxu0 %v594
        %1222 = vmatpush.msra.mxu0 %v593
        %1223 = vmatpush.msra.mxu0 %v592
        %1224 = vmatpush.msra.mxu0 %v591
        %1225 = vmatpush.msra.mxu0 %v590
        %1226 = vmatpush.msra.mxu0 %v589
        %1227 = vmatpush.msra.mxu0 %v588
        %1228 = vmatpush.msra.mxu0 %v587
        %1229 = vmatpush.msra.mxu0 %v586
        %1230 = vmatpush.msra.mxu0 %v585
        %1231 = vmatmul.f32.gmra.mxu0 %v517
        %v1232 = vpop.f32.mrf.mxu0
        %v1233 = vadd.f32 %v1120, %v1232
        %1234 = vmatmul.f32.gmra.mxu0 %v518
        %v1235 = vpop.f32.mrf.mxu0
        %v1236 = vadd.f32 %v1123, %v1235
        %1237 = vmatmul.f32.gmra.mxu0 %v519
        %v1238 = vpop.f32.mrf.mxu0
        %v1239 = vadd.f32 %v1126, %v1238
        %1240 = vmatmul.f32.gmra.mxu0 %v520
        %v1241 = vpop.f32.mrf.mxu0
        %v1242 = vadd.f32 %v1129, %v1241
        %1243 = vmatmul.f32.gmra.mxu0 %v521
        %v1244 = vpop.f32.mrf.mxu0
        %v1245 = vadd.f32 %v1132, %v1244
        %1246 = vmatmul.f32.gmra.mxu0 %v522
        %v1247 = vpop.f32.mrf.mxu0
        %v1248 = vadd.f32 %v1135, %v1247
        %1249 = vmatmul.f32.gmra.mxu0 %v523
        %v1250 = vpop.f32.mrf.mxu0
        %v1251 = vadd.f32 %v1138, %v1250
        %1252 = vmatmul.f32.gmra.mxu0 %v524
        %v1253 = vpop.f32.mrf.mxu0
        %v1254 = vadd.f32 %v1141, %v1253
        %1255 = vmatmul.f32.gmra.mxu0 %v525
        %v1256 = vpop.f32.mrf.mxu0
        %v1257 = vadd.f32 %v1144, %v1256
        %1258 = vmatmul.f32.gmra.mxu0 %v526
        %v1259 = vpop.f32.mrf.mxu0
        %v1260 = vadd.f32 %v1147, %v1259
        %1261 = vmatmul.f32.gmra.mxu0 %v527
        %v1262 = vpop.f32.mrf.mxu0
        %v1263 = vadd.f32 %v1150, %v1262
        %1264 = vmatmul.f32.gmra.mxu0 %v528
        %v1265 = vpop.f32.mrf.mxu0
        %v1266 = vadd.f32 %v1153, %v1265
        %1267 = vmatmul.f32.gmra.mxu0 %v529
        %v1268 = vpop.f32.mrf.mxu0
        %v1269 = vadd.f32 %v1156, %v1268
        %1270 = vmatmul.f32.gmra.mxu0 %v530
        %v1271 = vpop.f32.mrf.mxu0
        %v1272 = vadd.f32 %v1159, %v1271
        %1273 = vmatmul.f32.gmra.mxu0 %v531
        %v1274 = vpop.f32.mrf.mxu0
        %v1275 = vadd.f32 %v1162, %v1274
        %1276 = vmatmul.f32.gmra.mxu0 %v532
        %v1277 = vpop.f32.mrf.mxu0
        %v1278 = vadd.f32 %v1165, %v1277
        %1279 = vmatmul.f32.gmra.mxu0 %v533
        %v1280 = vpop.f32.mrf.mxu0
        %v1281 = vadd.f32 %v1168, %v1280
        %1282 = vmatmul.f32.gmra.mxu0 %v534
        %v1283 = vpop.f32.mrf.mxu0
        %v1284 = vadd.f32 %v1171, %v1283
        %1285 = vmatmul.f32.gmra.mxu0 %v535
        %v1286 = vpop.f32.mrf.mxu0
        %v1287 = vadd.f32 %v1174, %v1286
        %1288 = vmatmul.f32.gmra.mxu0 %v536
        %v1289 = vpop.f32.mrf.mxu0
        %v1290 = vadd.f32 %v1177, %v1289
        %1291 = vmatmul.f32.gmra.mxu0 %v537
        %v1292 = vpop.f32.mrf.mxu0
        %v1293 = vadd.f32 %v1180, %v1292
        %1294 = vmatmul.f32.gmra.mxu0 %v538
        %v1295 = vpop.f32.mrf.mxu0
        %v1296 = vadd.f32 %v1183, %v1295
        %1297 = vmatmul.f32.gmra.mxu0 %v539
        %v1298 = vpop.f32.mrf.mxu0
        %v1299 = vadd.f32 %v1186, %v1298
        %1300 = vmatmul.f32.gmra.mxu0 %v540
        %v1301 = vpop.f32.mrf.mxu0
        %v1302 = vadd.f32 %v1189, %v1301
        %1303 = vmatmul.f32.gmra.mxu0 %v541
        %v1304 = vpop.f32.mrf.mxu0
        %v1305 = vadd.f32 %v1192, %v1304
        %1306 = vmatmul.f32.gmra.mxu0 %v542
        %v1307 = vpop.f32.mrf.mxu0
        %v1308 = vadd.f32 %v1195, %v1307
        %1309 = vmatmul.f32.gmra.mxu0 %v543
        %v1310 = vpop.f32.mrf.mxu0
        %v1311 = vadd.f32 %v1198, %v1310
        %1312 = vmatmul.f32.gmra.mxu0 %v544
        %v1313 = vpop.f32.mrf.mxu0
        %v1314 = vadd.f32 %v1201, %v1313
        %1315 = vmatmul.f32.gmra.mxu0 %v545
        %v1316 = vpop.f32.mrf.mxu0
        %v1317 = vadd.f32 %v1204, %v1316
        %1318 = vmatmul.f32.gmra.mxu0 %v546
        %v1319 = vpop.f32.mrf.mxu0
        %v1320 = vadd.f32 %v1207, %v1319
        %1321 = vmatmul.f32.gmra.mxu0 %v547
        %v1322 = vpop.f32.mrf.mxu0
        %v1323 = vadd.f32 %v1210, %v1322
        %1324 = vmatmul.f32.gmra.mxu0 %v548
        %v1325 = vpop.f32.mrf.mxu0
        %v1326 = vadd.f32 %v1213, %v1325
        %1327 = vdwg.mxu0
        %s1328 = scalar_lea.vmem %s1, 768
        %v1329 = vld [vmem:[%s1328] sm:$0xff]
        %v1330 = vld [vmem:[%s1328 + $0x8] sm:$0xff]
        %v1331 = vld [vmem:[%s1328 + $0x10] sm:$0xff]
        %v1332 = vld [vmem:[%s1328 + $0x18] sm:$0xff]
        %v1333 = vld [vmem:[%s1328 + $0x20] sm:$0xff]
        %v1334 = vld [vmem:[%s1328 + $0x28] sm:$0xff]
        %v1335 = vld [vmem:[%s1328 + $0x30] sm:$0xff]
        %v1336 = vld [vmem:[%s1328 + $0x38] sm:$0xff]
        %v1337 = vld [vmem:[%s1328 + $0x40] sm:$0xff]
        %v1338 = vld [vmem:[%s1328 + $0x48] sm:$0xff]
        %v1339 = vld [vmem:[%s1328 + $0x50] sm:$0xff]
        %v1340 = vld [vmem:[%s1328 + $0x58] sm:$0xff]
        %v1341 = vld [vmem:[%s1328 + $0x60] sm:$0xff]
        %v1342 = vld [vmem:[%s1328 + $0x68] sm:$0xff]
        %v1343 = vld [vmem:[%s1328 + $0x70] sm:$0xff]
        %v1344 = vld [vmem:[%s1328 + $0x78] sm:$0xff]
        %v1345 = vld [vmem:[%s1328 + $0x80] sm:$0xff]
        %v1346 = vld [vmem:[%s1328 + $0x88] sm:$0xff]
        %v1347 = vld [vmem:[%s1328 + $0x90] sm:$0xff]
        %v1348 = vld [vmem:[%s1328 + $0x98] sm:$0xff]
        %v1349 = vld [vmem:[%s1328 + $0xa0] sm:$0xff]
        %v1350 = vld [vmem:[%s1328 + $0xa8] sm:$0xff]
        %v1351 = vld [vmem:[%s1328 + $0xb0] sm:$0xff]
        %v1352 = vld [vmem:[%s1328 + $0xb8] sm:$0xff]
        %v1353 = vld [vmem:[%s1328 + $0xc0] sm:$0xff]
        %v1354 = vld [vmem:[%s1328 + $0xc8] sm:$0xff]
        %v1355 = vld [vmem:[%s1328 + $0xd0] sm:$0xff]
        %v1356 = vld [vmem:[%s1328 + $0xd8] sm:$0xff]
        %v1357 = vld [vmem:[%s1328 + $0xe0] sm:$0xff]
        %v1358 = vld [vmem:[%s1328 + $0xe8] sm:$0xff]
        %v1359 = vld [vmem:[%s1328 + $0xf0] sm:$0xff]
        %v1360 = vld [vmem:[%s1328 + $0xf8] sm:$0xff]
        %v1361 = vld [vmem:[%s1328 + $0x100] sm:$0xff]
        %v1362 = vld [vmem:[%s1328 + $0x108] sm:$0xff]
        %v1363 = vld [vmem:[%s1328 + $0x110] sm:$0xff]
        %v1364 = vld [vmem:[%s1328 + $0x118] sm:$0xff]
        %v1365 = vld [vmem:[%s1328 + $0x120] sm:$0xff]
        %v1366 = vld [vmem:[%s1328 + $0x128] sm:$0xff]
        %v1367 = vld [vmem:[%s1328 + $0x130] sm:$0xff]
        %v1368 = vld [vmem:[%s1328 + $0x138] sm:$0xff]
        %v1369 = vld [vmem:[%s1328 + $0x140] sm:$0xff]
        %v1370 = vld [vmem:[%s1328 + $0x148] sm:$0xff]
        %v1371 = vld [vmem:[%s1328 + $0x150] sm:$0xff]
        %v1372 = vld [vmem:[%s1328 + $0x158] sm:$0xff]
        %v1373 = vld [vmem:[%s1328 + $0x160] sm:$0xff]
        %v1374 = vld [vmem:[%s1328 + $0x168] sm:$0xff]
        %v1375 = vld [vmem:[%s1328 + $0x170] sm:$0xff]
        %v1376 = vld [vmem:[%s1328 + $0x178] sm:$0xff]
        %1377 = vmatpush.msra.mxu0 %v1344
        %1378 = vmatpush.msra.mxu0 %v1343
        %1379 = vmatpush.msra.mxu0 %v1342
        %1380 = vmatpush.msra.mxu0 %v1341
        %1381 = vmatpush.msra.mxu0 %v1340
        %1382 = vmatpush.msra.mxu0 %v1339
        %1383 = vmatpush.msra.mxu0 %v1338
        %1384 = vmatpush.msra.mxu0 %v1337
        %1385 = vmatpush.msra.mxu0 %v1336
        %1386 = vmatpush.msra.mxu0 %v1335
        %1387 = vmatpush.msra.mxu0 %v1334
        %1388 = vmatpush.msra.mxu0 %v1333
        %1389 = vmatpush.msra.mxu0 %v1332
        %1390 = vmatpush.msra.mxu0 %v1331
        %1391 = vmatpush.msra.mxu0 %v1330
        %1392 = vmatpush.msra.mxu0 %v1329
        %1393 = vmatmul.f32.gmra.mxu0 %v449
        %v1394 = vpop.f32.mrf.mxu0
        %v1395 = vadd.f32 0.0, %v1394
        %1396 = vmatmul.f32.gmra.mxu0 %v450
        %v1397 = vpop.f32.mrf.mxu0
        %v1398 = vadd.f32 0.0, %v1397
        %1399 = vmatmul.f32.gmra.mxu0 %v451
        %v1400 = vpop.f32.mrf.mxu0
        %v1401 = vadd.f32 0.0, %v1400
        %1402 = vmatmul.f32.gmra.mxu0 %v452
        %v1403 = vpop.f32.mrf.mxu0
        %v1404 = vadd.f32 0.0, %v1403
        %1405 = vmatmul.f32.gmra.mxu0 %v453
        %v1406 = vpop.f32.mrf.mxu0
        %v1407 = vadd.f32 0.0, %v1406
        %1408 = vmatmul.f32.gmra.mxu0 %v454
        %v1409 = vpop.f32.mrf.mxu0
        %v1410 = vadd.f32 0.0, %v1409
        %1411 = vmatmul.f32.gmra.mxu0 %v455
        %v1412 = vpop.f32.mrf.mxu0
        %v1413 = vadd.f32 0.0, %v1412
        %1414 = vmatmul.f32.gmra.mxu0 %v456
        %v1415 = vpop.f32.mrf.mxu0
        %v1416 = vadd.f32 0.0, %v1415
        %1417 = vmatmul.f32.gmra.mxu0 %v457
        %v1418 = vpop.f32.mrf.mxu0
        %v1419 = vadd.f32 0.0, %v1418
        %1420 = vmatmul.f32.gmra.mxu0 %v458
        %v1421 = vpop.f32.mrf.mxu0
        %v1422 = vadd.f32 0.0, %v1421
        %1423 = vmatmul.f32.gmra.mxu0 %v459
        %v1424 = vpop.f32.mrf.mxu0
        %v1425 = vadd.f32 0.0, %v1424
        %1426 = vmatmul.f32.gmra.mxu0 %v460
        %v1427 = vpop.f32.mrf.mxu0
        %v1428 = vadd.f32 0.0, %v1427
        %1429 = vmatmul.f32.gmra.mxu0 %v461
        %v1430 = vpop.f32.mrf.mxu0
        %v1431 = vadd.f32 0.0, %v1430
        %1432 = vmatmul.f32.gmra.mxu0 %v462
        %v1433 = vpop.f32.mrf.mxu0
        %v1434 = vadd.f32 0.0, %v1433
        %1435 = vmatmul.f32.gmra.mxu0 %v463
        %v1436 = vpop.f32.mrf.mxu0
        %v1437 = vadd.f32 0.0, %v1436
        %1438 = vmatmul.f32.gmra.mxu0 %v464
        %v1439 = vpop.f32.mrf.mxu0
        %v1440 = vadd.f32 0.0, %v1439
        %1441 = vmatmul.f32.gmra.mxu0 %v465
        %v1442 = vpop.f32.mrf.mxu0
        %v1443 = vadd.f32 0.0, %v1442
        %1444 = vmatmul.f32.gmra.mxu0 %v466
        %v1445 = vpop.f32.mrf.mxu0
        %v1446 = vadd.f32 0.0, %v1445
        %1447 = vmatmul.f32.gmra.mxu0 %v467
        %v1448 = vpop.f32.mrf.mxu0
        %v1449 = vadd.f32 0.0, %v1448
        %1450 = vmatmul.f32.gmra.mxu0 %v468
        %v1451 = vpop.f32.mrf.mxu0
        %v1452 = vadd.f32 0.0, %v1451
        %1453 = vmatmul.f32.gmra.mxu0 %v469
        %v1454 = vpop.f32.mrf.mxu0
        %v1455 = vadd.f32 0.0, %v1454
        %1456 = vmatmul.f32.gmra.mxu0 %v470
        %v1457 = vpop.f32.mrf.mxu0
        %v1458 = vadd.f32 0.0, %v1457
        %1459 = vmatmul.f32.gmra.mxu0 %v471
        %v1460 = vpop.f32.mrf.mxu0
        %v1461 = vadd.f32 0.0, %v1460
        %1462 = vmatmul.f32.gmra.mxu0 %v472
        %v1463 = vpop.f32.mrf.mxu0
        %v1464 = vadd.f32 0.0, %v1463
        %1465 = vmatmul.f32.gmra.mxu0 %v473
        %v1466 = vpop.f32.mrf.mxu0
        %v1467 = vadd.f32 0.0, %v1466
        %1468 = vmatmul.f32.gmra.mxu0 %v474
        %v1469 = vpop.f32.mrf.mxu0
        %v1470 = vadd.f32 0.0, %v1469
        %1471 = vmatmul.f32.gmra.mxu0 %v475
        %v1472 = vpop.f32.mrf.mxu0
        %v1473 = vadd.f32 0.0, %v1472
        %1474 = vmatmul.f32.gmra.mxu0 %v476
        %v1475 = vpop.f32.mrf.mxu0
        %v1476 = vadd.f32 0.0, %v1475
        %1477 = vmatmul.f32.gmra.mxu0 %v477
        %v1478 = vpop.f32.mrf.mxu0
        %v1479 = vadd.f32 0.0, %v1478
        %1480 = vmatmul.f32.gmra.mxu0 %v478
        %v1481 = vpop.f32.mrf.mxu0
        %v1482 = vadd.f32 0.0, %v1481
        %1483 = vmatmul.f32.gmra.mxu0 %v479
        %v1484 = vpop.f32.mrf.mxu0
        %v1485 = vadd.f32 0.0, %v1484
        %1486 = vmatmul.f32.gmra.mxu0 %v480
        %v1487 = vpop.f32.mrf.mxu0
        %v1488 = vadd.f32 0.0, %v1487
        %1489 = vdwg.mxu0
        %1490 = vmatpush.msra.mxu0 %v1360
        %1491 = vmatpush.msra.mxu0 %v1359
        %1492 = vmatpush.msra.mxu0 %v1358
        %1493 = vmatpush.msra.mxu0 %v1357
        %1494 = vmatpush.msra.mxu0 %v1356
        %1495 = vmatpush.msra.mxu0 %v1355
        %1496 = vmatpush.msra.mxu0 %v1354
        %1497 = vmatpush.msra.mxu0 %v1353
        %1498 = vmatpush.msra.mxu0 %v1352
        %1499 = vmatpush.msra.mxu0 %v1351
        %1500 = vmatpush.msra.mxu0 %v1350
        %1501 = vmatpush.msra.mxu0 %v1349
        %1502 = vmatpush.msra.mxu0 %v1348
        %1503 = vmatpush.msra.mxu0 %v1347
        %1504 = vmatpush.msra.mxu0 %v1346
        %1505 = vmatpush.msra.mxu0 %v1345
        %1506 = vmatmul.f32.gmra.mxu0 %v485
        %v1507 = vpop.f32.mrf.mxu0
        %v1508 = vadd.f32 %v1395, %v1507
        %1509 = vmatmul.f32.gmra.mxu0 %v486
        %v1510 = vpop.f32.mrf.mxu0
        %v1511 = vadd.f32 %v1398, %v1510
        %1512 = vmatmul.f32.gmra.mxu0 %v487
        %v1513 = vpop.f32.mrf.mxu0
        %v1514 = vadd.f32 %v1401, %v1513
        %1515 = vmatmul.f32.gmra.mxu0 %v488
        %v1516 = vpop.f32.mrf.mxu0
        %v1517 = vadd.f32 %v1404, %v1516
        %1518 = vmatmul.f32.gmra.mxu0 %v489
        %v1519 = vpop.f32.mrf.mxu0
        %v1520 = vadd.f32 %v1407, %v1519
        %1521 = vmatmul.f32.gmra.mxu0 %v490
        %v1522 = vpop.f32.mrf.mxu0
        %v1523 = vadd.f32 %v1410, %v1522
        %1524 = vmatmul.f32.gmra.mxu0 %v491
        %v1525 = vpop.f32.mrf.mxu0
        %v1526 = vadd.f32 %v1413, %v1525
        %1527 = vmatmul.f32.gmra.mxu0 %v492
        %v1528 = vpop.f32.mrf.mxu0
        %v1529 = vadd.f32 %v1416, %v1528
        %1530 = vmatmul.f32.gmra.mxu0 %v493
        %v1531 = vpop.f32.mrf.mxu0
        %v1532 = vadd.f32 %v1419, %v1531
        %1533 = vmatmul.f32.gmra.mxu0 %v494
        %v1534 = vpop.f32.mrf.mxu0
        %v1535 = vadd.f32 %v1422, %v1534
        %1536 = vmatmul.f32.gmra.mxu0 %v495
        %v1537 = vpop.f32.mrf.mxu0
        %v1538 = vadd.f32 %v1425, %v1537
        %1539 = vmatmul.f32.gmra.mxu0 %v496
        %v1540 = vpop.f32.mrf.mxu0
        %v1541 = vadd.f32 %v1428, %v1540
        %1542 = vmatmul.f32.gmra.mxu0 %v497
        %v1543 = vpop.f32.mrf.mxu0
        %v1544 = vadd.f32 %v1431, %v1543
        %1545 = vmatmul.f32.gmra.mxu0 %v498
        %v1546 = vpop.f32.mrf.mxu0
        %v1547 = vadd.f32 %v1434, %v1546
        %1548 = vmatmul.f32.gmra.mxu0 %v499
        %v1549 = vpop.f32.mrf.mxu0
        %v1550 = vadd.f32 %v1437, %v1549
        %1551 = vmatmul.f32.gmra.mxu0 %v500
        %v1552 = vpop.f32.mrf.mxu0
        %v1553 = vadd.f32 %v1440, %v1552
        %1554 = vmatmul.f32.gmra.mxu0 %v501
        %v1555 = vpop.f32.mrf.mxu0
        %v1556 = vadd.f32 %v1443, %v1555
        %1557 = vmatmul.f32.gmra.mxu0 %v502
        %v1558 = vpop.f32.mrf.mxu0
        %v1559 = vadd.f32 %v1446, %v1558
        %1560 = vmatmul.f32.gmra.mxu0 %v503
        %v1561 = vpop.f32.mrf.mxu0
        %v1562 = vadd.f32 %v1449, %v1561
        %1563 = vmatmul.f32.gmra.mxu0 %v504
        %v1564 = vpop.f32.mrf.mxu0
        %v1565 = vadd.f32 %v1452, %v1564
        %1566 = vmatmul.f32.gmra.mxu0 %v505
        %v1567 = vpop.f32.mrf.mxu0
        %v1568 = vadd.f32 %v1455, %v1567
        %1569 = vmatmul.f32.gmra.mxu0 %v506
        %v1570 = vpop.f32.mrf.mxu0
        %v1571 = vadd.f32 %v1458, %v1570
        %1572 = vmatmul.f32.gmra.mxu0 %v507
        %v1573 = vpop.f32.mrf.mxu0
        %v1574 = vadd.f32 %v1461, %v1573
        %1575 = vmatmul.f32.gmra.mxu0 %v508
        %v1576 = vpop.f32.mrf.mxu0
        %v1577 = vadd.f32 %v1464, %v1576
        %1578 = vmatmul.f32.gmra.mxu0 %v509
        %v1579 = vpop.f32.mrf.mxu0
        %v1580 = vadd.f32 %v1467, %v1579
        %1581 = vmatmul.f32.gmra.mxu0 %v510
        %v1582 = vpop.f32.mrf.mxu0
        %v1583 = vadd.f32 %v1470, %v1582
        %1584 = vmatmul.f32.gmra.mxu0 %v511
        %v1585 = vpop.f32.mrf.mxu0
        %v1586 = vadd.f32 %v1473, %v1585
        %1587 = vmatmul.f32.gmra.mxu0 %v512
        %v1588 = vpop.f32.mrf.mxu0
        %v1589 = vadd.f32 %v1476, %v1588
        %1590 = vmatmul.f32.gmra.mxu0 %v513
        %v1591 = vpop.f32.mrf.mxu0
        %v1592 = vadd.f32 %v1479, %v1591
        %1593 = vmatmul.f32.gmra.mxu0 %v514
        %v1594 = vpop.f32.mrf.mxu0
        %v1595 = vadd.f32 %v1482, %v1594
        %1596 = vmatmul.f32.gmra.mxu0 %v515
        %v1597 = vpop.f32.mrf.mxu0
        %v1598 = vadd.f32 %v1485, %v1597
        %1599 = vmatmul.f32.gmra.mxu0 %v516
        %v1600 = vpop.f32.mrf.mxu0
        %v1601 = vadd.f32 %v1488, %v1600
        %1602 = vdwg.mxu0
        %1603 = vmatpush.msra.mxu0 %v1376
        %1604 = vmatpush.msra.mxu0 %v1375
        %1605 = vmatpush.msra.mxu0 %v1374
        %1606 = vmatpush.msra.mxu0 %v1373
        %1607 = vmatpush.msra.mxu0 %v1372
        %1608 = vmatpush.msra.mxu0 %v1371
        %1609 = vmatpush.msra.mxu0 %v1370
        %1610 = vmatpush.msra.mxu0 %v1369
        %1611 = vmatpush.msra.mxu0 %v1368
        %1612 = vmatpush.msra.mxu0 %v1367
        %1613 = vmatpush.msra.mxu0 %v1366
        %1614 = vmatpush.msra.mxu0 %v1365
        %1615 = vmatpush.msra.mxu0 %v1364
        %1616 = vmatpush.msra.mxu0 %v1363
        %1617 = vmatpush.msra.mxu0 %v1362
        %1618 = vmatpush.msra.mxu0 %v1361
        %1619 = vmatmul.f32.gmra.mxu0 %v521
        %v1620 = vpop.f32.mrf.mxu0
        %v1621 = vadd.f32 %v1508, %v1620
        %1622 = vmatmul.f32.gmra.mxu0 %v522
        %v1623 = vpop.f32.mrf.mxu0
        %v1624 = vadd.f32 %v1511, %v1623
        %1625 = vmatmul.f32.gmra.mxu0 %v523
        %v1626 = vpop.f32.mrf.mxu0
        %v1627 = vadd.f32 %v1514, %v1626
        %1628 = vmatmul.f32.gmra.mxu0 %v524
        %v1629 = vpop.f32.mrf.mxu0
        %v1630 = vadd.f32 %v1517, %v1629
        %1631 = vmatmul.f32.gmra.mxu0 %v525
        %v1632 = vpop.f32.mrf.mxu0
        %v1633 = vadd.f32 %v1520, %v1632
        %1634 = vmatmul.f32.gmra.mxu0 %v526
        %v1635 = vpop.f32.mrf.mxu0
        %v1636 = vadd.f32 %v1523, %v1635
        %1637 = vmatmul.f32.gmra.mxu0 %v527
        %v1638 = vpop.f32.mrf.mxu0
        %v1639 = vadd.f32 %v1526, %v1638
        %1640 = vmatmul.f32.gmra.mxu0 %v528
        %v1641 = vpop.f32.mrf.mxu0
        %v1642 = vadd.f32 %v1529, %v1641
        %1643 = vmatmul.f32.gmra.mxu0 %v529
        %v1644 = vpop.f32.mrf.mxu0
        %v1645 = vadd.f32 %v1532, %v1644
        %1646 = vmatmul.f32.gmra.mxu0 %v530
        %v1647 = vpop.f32.mrf.mxu0
        %v1648 = vadd.f32 %v1535, %v1647
        %1649 = vmatmul.f32.gmra.mxu0 %v531
        %v1650 = vpop.f32.mrf.mxu0
        %v1651 = vadd.f32 %v1538, %v1650
        %1652 = vmatmul.f32.gmra.mxu0 %v532
        %v1653 = vpop.f32.mrf.mxu0
        %v1654 = vadd.f32 %v1541, %v1653
        %1655 = vmatmul.f32.gmra.mxu0 %v533
        %v1656 = vpop.f32.mrf.mxu0
        %v1657 = vadd.f32 %v1544, %v1656
        %1658 = vmatmul.f32.gmra.mxu0 %v534
        %v1659 = vpop.f32.mrf.mxu0
        %v1660 = vadd.f32 %v1547, %v1659
        %1661 = vmatmul.f32.gmra.mxu0 %v535
        %v1662 = vpop.f32.mrf.mxu0
        %v1663 = vadd.f32 %v1550, %v1662
        %1664 = vmatmul.f32.gmra.mxu0 %v536
        %v1665 = vpop.f32.mrf.mxu0
        %v1666 = vadd.f32 %v1553, %v1665
        %1667 = vmatmul.f32.gmra.mxu0 %v537
        %v1668 = vpop.f32.mrf.mxu0
        %v1669 = vadd.f32 %v1556, %v1668
        %1670 = vmatmul.f32.gmra.mxu0 %v538
        %v1671 = vpop.f32.mrf.mxu0
        %v1672 = vadd.f32 %v1559, %v1671
        %1673 = vmatmul.f32.gmra.mxu0 %v539
        %v1674 = vpop.f32.mrf.mxu0
        %v1675 = vadd.f32 %v1562, %v1674
        %1676 = vmatmul.f32.gmra.mxu0 %v540
        %v1677 = vpop.f32.mrf.mxu0
        %v1678 = vadd.f32 %v1565, %v1677
        %1679 = vmatmul.f32.gmra.mxu0 %v541
        %v1680 = vpop.f32.mrf.mxu0
        %v1681 = vadd.f32 %v1568, %v1680
        %1682 = vmatmul.f32.gmra.mxu0 %v542
        %v1683 = vpop.f32.mrf.mxu0
        %v1684 = vadd.f32 %v1571, %v1683
        %1685 = vmatmul.f32.gmra.mxu0 %v543
        %v1686 = vpop.f32.mrf.mxu0
        %v1687 = vadd.f32 %v1574, %v1686
        %1688 = vmatmul.f32.gmra.mxu0 %v544
        %v1689 = vpop.f32.mrf.mxu0
        %v1690 = vadd.f32 %v1577, %v1689
        %1691 = vmatmul.f32.gmra.mxu0 %v545
        %v1692 = vpop.f32.mrf.mxu0
        %v1693 = vadd.f32 %v1580, %v1692
        %1694 = vmatmul.f32.gmra.mxu0 %v546
        %v1695 = vpop.f32.mrf.mxu0
        %v1696 = vadd.f32 %v1583, %v1695
        %1697 = vmatmul.f32.gmra.mxu0 %v547
        %v1698 = vpop.f32.mrf.mxu0
        %v1699 = vadd.f32 %v1586, %v1698
        %1700 = vmatmul.f32.gmra.mxu0 %v548
        %v1701 = vpop.f32.mrf.mxu0
        %v1702 = vadd.f32 %v1589, %v1701
        %1703 = vmatmul.f32.gmra.mxu0 %v549
        %v1704 = vpop.f32.mrf.mxu0
        %v1705 = vadd.f32 %v1592, %v1704
        %1706 = vmatmul.f32.gmra.mxu0 %v550
        %v1707 = vpop.f32.mrf.mxu0
        %v1708 = vadd.f32 %v1595, %v1707
        %1709 = vmatmul.f32.gmra.mxu0 %v551
        %v1710 = vpop.f32.mrf.mxu0
        %v1711 = vadd.f32 %v1598, %v1710
        %1712 = vmatmul.f32.gmra.mxu0 %v552
        %v1713 = vpop.f32.mrf.mxu0
        %v1714 = vadd.f32 %v1601, %v1713
        %1715 = vdwg.mxu0
        %v1716 = vadd.f32 %v1233, %v1621
        %v1717 = vadd.f32 %v1236, %v1624
        %v1718 = vadd.f32 %v1239, %v1627
        %v1719 = vadd.f32 %v1242, %v1630
        %v1720 = vadd.f32 %v1245, %v1633
        %v1721 = vadd.f32 %v1248, %v1636
        %v1722 = vadd.f32 %v1251, %v1639
        %v1723 = vadd.f32 %v1254, %v1642
        %v1724 = vadd.f32 %v1257, %v1645
        %v1725 = vadd.f32 %v1260, %v1648
        %v1726 = vadd.f32 %v1263, %v1651
        %v1727 = vadd.f32 %v1266, %v1654
        %v1728 = vadd.f32 %v1269, %v1657
        %v1729 = vadd.f32 %v1272, %v1660
        %v1730 = vadd.f32 %v1275, %v1663
        %v1731 = vadd.f32 %v1278, %v1666
        %v1732 = vadd.f32 %v1281, %v1669
        %v1733 = vadd.f32 %v1284, %v1672
        %v1734 = vadd.f32 %v1287, %v1675
        %v1735 = vadd.f32 %v1290, %v1678
        %v1736 = vadd.f32 %v1293, %v1681
        %v1737 = vadd.f32 %v1296, %v1684
        %v1738 = vadd.f32 %v1299, %v1687
        %v1739 = vadd.f32 %v1302, %v1690
        %v1740 = vadd.f32 %v1305, %v1693
        %v1741 = vadd.f32 %v1308, %v1696
        %v1742 = vadd.f32 %v1311, %v1699
        %v1743 = vadd.f32 %v1314, %v1702
        %v1744 = vadd.f32 %v1317, %v1705
        %v1745 = vadd.f32 %v1320, %v1708
        %v1746 = vadd.f32 %v1323, %v1711
        %v1747 = vadd.f32 %v1326, %v1714
        %v1748 = vld [vmem:[%s2] sm:$0x1]
        %v1749 = vperm.slane %v1748, 0
        %v1750 = vmul.f32 %v1716, %v1749
        %v1751 = vmul.f32 %v1717, %v1749
        %v1752 = vmul.f32 %v1718, %v1749
        %v1753 = vmul.f32 %v1719, %v1749
        %v1754 = vmul.f32 %v1720, %v1749
        %v1755 = vmul.f32 %v1721, %v1749
        %v1756 = vmul.f32 %v1722, %v1749
        %v1757 = vmul.f32 %v1723, %v1749
        %v1758 = vmul.f32 %v1724, %v1749
        %v1759 = vmul.f32 %v1725, %v1749
        %v1760 = vmul.f32 %v1726, %v1749
        %v1761 = vmul.f32 %v1727, %v1749
        %v1762 = vmul.f32 %v1728, %v1749
        %v1763 = vmul.f32 %v1729, %v1749
        %v1764 = vmul.f32 %v1730, %v1749
        %v1765 = vmul.f32 %v1731, %v1749
        %v1766 = vmul.f32 %v1732, %v1749
        %v1767 = vmul.f32 %v1733, %v1749
        %v1768 = vmul.f32 %v1734, %v1749
        %v1769 = vmul.f32 %v1735, %v1749
        %v1770 = vmul.f32 %v1736, %v1749
        %v1771 = vmul.f32 %v1737, %v1749
        %v1772 = vmul.f32 %v1738, %v1749
        %v1773 = vmul.f32 %v1739, %v1749
        %v1774 = vmul.f32 %v1740, %v1749
        %v1775 = vmul.f32 %v1741, %v1749
        %v1776 = vmul.f32 %v1742, %v1749
        %v1777 = vmul.f32 %v1743, %v1749
        %v1778 = vmul.f32 %v1744, %v1749
        %v1779 = vmul.f32 %v1745, %v1749
        %v1780 = vmul.f32 %v1746, %v1749
        %v1781 = vmul.f32 %v1747, %v1749
        %v1782 = vld [vmem:[%s2 + $0x1] sm:$0x1]
        %v1783 = vperm.slane %v1782, 0
        %v1784 = vadd.f32 %v1750, %v1783
        %v1785 = vadd.f32 %v1751, %v1783
        %v1786 = vadd.f32 %v1752, %v1783
        %v1787 = vadd.f32 %v1753, %v1783
        %v1788 = vadd.f32 %v1754, %v1783
        %v1789 = vadd.f32 %v1755, %v1783
        %v1790 = vadd.f32 %v1756, %v1783
        %v1791 = vadd.f32 %v1757, %v1783
        %v1792 = vadd.f32 %v1758, %v1783
        %v1793 = vadd.f32 %v1759, %v1783
        %v1794 = vadd.f32 %v1760, %v1783
        %v1795 = vadd.f32 %v1761, %v1783
        %v1796 = vadd.f32 %v1762, %v1783
        %v1797 = vadd.f32 %v1763, %v1783
        %v1798 = vadd.f32 %v1764, %v1783
        %v1799 = vadd.f32 %v1765, %v1783
        %v1800 = vadd.f32 %v1766, %v1783
        %v1801 = vadd.f32 %v1767, %v1783
        %v1802 = vadd.f32 %v1768, %v1783
        %v1803 = vadd.f32 %v1769, %v1783
        %v1804 = vadd.f32 %v1770, %v1783
        %v1805 = vadd.f32 %v1771, %v1783
        %v1806 = vadd.f32 %v1772, %v1783
        %v1807 = vadd.f32 %v1773, %v1783
        %v1808 = vadd.f32 %v1774, %v1783
        %v1809 = vadd.f32 %v1775, %v1783
        %v1810 = vadd.f32 %v1776, %v1783
        %v1811 = vadd.f32 %v1777, %v1783
        %v1812 = vadd.f32 %v1778, %v1783
        %v1813 = vadd.f32 %v1779, %v1783
        %v1814 = vadd.f32 %v1780, %v1783
        %v1815 = vadd.f32 %v1781, %v1783
        %v1816 = vmax.f32 %v1784, 0.0
        %v1817 = vmax.f32 %v1785, 0.0
        %v1818 = vmax.f32 %v1786, 0.0
        %v1819 = vmax.f32 %v1787, 0.0
        %v1820 = vmax.f32 %v1788, 0.0
        %v1821 = vmax.f32 %v1789, 0.0
        %v1822 = vmax.f32 %v1790, 0.0
        %v1823 = vmax.f32 %v1791, 0.0
        %v1824 = vmax.f32 %v1792, 0.0
        %v1825 = vmax.f32 %v1793, 0.0
        %v1826 = vmax.f32 %v1794, 0.0
        %v1827 = vmax.f32 %v1795, 0.0
        %v1828 = vmax.f32 %v1796, 0.0
        %v1829 = vmax.f32 %v1797, 0.0
        %v1830 = vmax.f32 %v1798, 0.0
        %v1831 = vmax.f32 %v1799, 0.0
        %v1832 = vmax.f32 %v1800, 0.0
        %v1833 = vmax.f32 %v1801, 0.0
        %v1834 = vmax.f32 %v1802, 0.0
        %v1835 = vmax.f32 %v1803, 0.0
        %v1836 = vmax.f32 %v1804, 0.0
        %v1837 = vmax.f32 %v1805, 0.0
        %v1838 = vmax.f32 %v1806, 0.0
        %v1839 = vmax.f32 %v1807, 0.0
        %v1840 = vmax.f32 %v1808, 0.0
        %v1841 = vmax.f32 %v1809, 0.0
        %v1842 = vmax.f32 %v1810, 0.0
        %v1843 = vmax.f32 %v1811, 0.0
        %v1844 = vmax.f32 %v1812, 0.0
        %v1845 = vmax.f32 %v1813, 0.0
        %v1846 = vmax.f32 %v1814, 0.0
        %v1847 = vmax.f32 %v1815, 0.0
        %1848 = vst [vmem:[%s136] sm:$0xff] %v1816
        %1849 = vst [vmem:[%s136 + $0x8] sm:$0xff] %v1817
        %1850 = vst [vmem:[%s136 + $0x10] sm:$0xff] %v1818
        %1851 = vst [vmem:[%s136 + $0x18] sm:$0xff] %v1819
        %1852 = vst [vmem:[%s136 + $0x20] sm:$0xff] %v1820
        %1853 = vst [vmem:[%s136 + $0x28] sm:$0xff] %v1821
        %1854 = vst [vmem:[%s136 + $0x30] sm:$0xff] %v1822
        %1855 = vst [vmem:[%s136 + $0x38] sm:$0xff] %v1823
        %1856 = vst [vmem:[%s136 + $0x40] sm:$0xff] %v1824
        %1857 = vst [vmem:[%s136 + $0x48] sm:$0xff] %v1825
        %1858 = vst [vmem:[%s136 + $0x50] sm:$0xff] %v1826
        %1859 = vst [vmem:[%s136 + $0x58] sm:$0xff] %v1827
        %1860 = vst [vmem:[%s136 + $0x60] sm:$0xff] %v1828
        %1861 = vst [vmem:[%s136 + $0x68] sm:$0xff] %v1829
        %1862 = vst [vmem:[%s136 + $0x70] sm:$0xff] %v1830
        %1863 = vst [vmem:[%s136 + $0x78] sm:$0xff] %v1831
        %1864 = vst [vmem:[%s136 + $0x80] sm:$0xff] %v1832
        %1865 = vst [vmem:[%s136 + $0x88] sm:$0xff] %v1833
        %1866 = vst [vmem:[%s136 + $0x90] sm:$0xff] %v1834
        %1867 = vst [vmem:[%s136 + $0x98] sm:$0xff] %v1835
        %1868 = vst [vmem:[%s136 + $0xa0] sm:$0xff] %v1836
        %1869 = vst [vmem:[%s136 + $0xa8] sm:$0xff] %v1837
        %1870 = vst [vmem:[%s136 + $0xb0] sm:$0xff] %v1838
        %1871 = vst [vmem:[%s136 + $0xb8] sm:$0xff] %v1839
        %1872 = vst [vmem:[%s136 + $0xc0] sm:$0xff] %v1840
        %1873 = vst [vmem:[%s136 + $0xc8] sm:$0xff] %v1841
        %1874 = vst [vmem:[%s136 + $0xd0] sm:$0xff] %v1842
        %1875 = vst [vmem:[%s136 + $0xd8] sm:$0xff] %v1843
        %1876 = vst [vmem:[%s136 + $0xe0] sm:$0xff] %v1844
        %1877 = vst [vmem:[%s136 + $0xe8] sm:$0xff] %v1845
        %1878 = vst [vmem:[%s136 + $0xf0] sm:$0xff] %v1846
        %1879 = vst [vmem:[%s136 + $0xf8] sm:$0xff] %v1847
        %s1880 = sand.u32 %s81, 1
        %s1881 = scalar_lea.sflag [#allocation5], %s1880
        %s1882 = sand.u32 %s81, 1
        %s1883 = smul.addr %s1882, 256
        %s1884 = scalar_lea.vmem [#allocation4], %s1883
        // Predicated region
        $region81: #{tpu_custom_call.1} parent=27 // pred_check
          %p1885 = pneg %p91
        $region82: #{tpu_custom_call.1} parent=27 // pred_check_branch
          %1887 = sbr.rel (%p1885) target = $region84
        $region83: #{tpu_custom_call.1} parent=27 // pred_region
          %s1888 = smul.u32 16, %s22
          %1890 = vsyncadd %s1881, 0
          %s1891 = smul.addr %s1888, 2
          %s1892 = smul.addr %s21, 32
          %s1893 = sadd.s32 %s1891, %s1892
          %s1894 = smul.addr %s1893, 8
          %s1895 = scalar_lea.hbm %s3, %s1894
          %s1896 = sshll.u32 %s1884, 4
          %s1897 = int_to_ptr.vmem [resolvable:$true] %s1896
          %s1898 = sshll.u32 %s1895, 4
          %s1899 = int_to_ptr.hbm [resolvable:$true] %s1898
          %1904 = dma.vmem_to_hbm [thread:$0]  %s1897, 4096, %s1899, %s1881, 128, 128, 8
        $region84: #{tpu_custom_call.1} parent=27 // pred_fallthru
          _
      $region28: #{tpu_custom_call.1} parent=5 // pred_fallthru
        _
      %p1905 = scmp.le.s32.totalorder 2, %s12
      // Predicated region
      $region85: #{tpu_custom_call.1} parent=5 // pred_check
        %p1906 = pneg %p1905
      $region86: #{tpu_custom_call.1} parent=5 // pred_check_branch
        %1908 = sbr.rel (%p1906) target = $region88
      $region87: #{tpu_custom_call.1} parent=5 // pred_region
        %s1909 = ssub.s32 %s12, 2
        // Predicated region
        $region89: #{tpu_custom_call.1} parent=87 // pred_check
          %p1910 = pneg %p97
        $region90: #{tpu_custom_call.1} parent=87 // pred_check_branch
          %1912 = sbr.rel (%p1910) target = $region92
        $region91: #{tpu_custom_call.1} parent=87 // pred_region
          %s1913 = sand.u32 %s82, 1
          %s1914 = scalar_lea.sflag [#allocation5], %s1913
          %s1915 = sand.u32 %s82, 1
          %s1916 = smul.addr %s1915, 256
          %s1917 = scalar_lea.vmem [#allocation4], %s1916
          %1919 = dma.done %s1914, 4096
        $region92: #{tpu_custom_call.1} parent=87 // pred_fallthru
          _
      $region88: #{tpu_custom_call.1} parent=5 // pred_fallthru
        _
    $region6: #{tpu_custom_call.1} parent=1 // loop_footer
      %s16 = sadd.s32 1, %s12
    $region7: #{tpu_custom_call.1} parent=1 // loop_footer_branch
      %11 = sbr.rel target = $region3
    $region8: #{tpu_custom_call.1} parent=1 // loop_exit
      _
    %1920 = vsyncpa [#allocation5], 1
    %s1921 = scalar_lea.sflag [#allocation5], 1
    %1922 = vsyncpa %s1921, 1
  %1923 = vsyncmov [#allocation3]
  %s1924 = vpop.sfrf %1923
  %p1925 = scmp.eq.s32.totalorder %s1924, 0
  %p1926 = pneg %p1925
  %1928 = shalt.err (%p1926)
  %s1929 = scalar_lea.sflag [#allocation3], 1
  %1930 = vsyncmov %s1929
  %s1931 = vpop.sfrf %1930
  %p1932 = scmp.eq.s32.totalorder %s1931, 0
  %p1933 = pneg %p1932
  %1935 = shalt.err (%p1933)

</llo_original>
